<compile_context>
chip_gen: v5e
topology: v5e:2x2
jax: 0.10.0
libtpu: 0.0.40
codegen_flags: <defaults>
</compile_context>

<pallas_src>
import jax
import jax.numpy as jnp
from jax.experimental import pallas as pl
from jax.experimental.pallas import tpu as pltpu

# ----------------------------- model config (small, synthetic) ---------------
BATCH = 2
SEQ = 8                 # stands in for max_length=77
HIDDEN = 128            # lane-dense last dim (stands in for 768)
NUM_HEADS = 4
HEAD_DIM = HIDDEN // NUM_HEADS
MLP_DIM = 4 * HIDDEN
NUM_LAYERS = 2
VOCAB = 100
LN_EPS = 1e-5
NEG_INF = -1e9


# ----------------------------- helpers ---------------------------------------
def _layernorm(x, gamma, beta):
    """LayerNorm over the last dim, all statistics in f32."""
    mu = jnp.mean(x, axis=-1, keepdims=True)
    var = jnp.mean((x - mu) ** 2, axis=-1, keepdims=True)
    return (x - mu) * jax.lax.rsqrt(var + LN_EPS) * gamma + beta


def _causal_mask(S):
    """Additive causal bias (0 / -1e9), computed once (hoisted) in f32."""
    row = jax.lax.broadcasted_iota(jnp.int32, (S, S), 0)
    col = jax.lax.broadcasted_iota(jnp.int32, (S, S), 1)
    return jnp.where(col <= row, 0.0, NEG_INF).astype(jnp.float32)


# ----------------------------- fused Pallas kernel ----------------------------
def clip_text_kernel(x_ref, mask_ref, fln_ref,
                     wqkv_ref, bqkv_ref, wo_ref, w1_ref, b1_ref, w2_ref,
                     vecs_ref, o_ref):
    """One transformer layer per grid step; residual stream lives in o_ref."""
    layer = pl.program_id(0)
    last = pl.num_programs(0) - 1
    bf = jnp.bfloat16
    f32 = jnp.float32

    # Layer 0: seed the VMEM-resident residual stream with the embeddings.
    @pl.when(layer == 0)
    def _init():
        o_ref[...] = x_ref[...]

    # Residual stream, flattened to (B*S, D) for dense, lane-aligned matmuls.
    x = o_ref[...].reshape(BATCH * SEQ, HIDDEN)          # f32

    # Coalesced per-layer vectors: rows = ln1_g, ln1_b, ln2_g, ln2_b, bo, b2.
    vecs = vecs_ref[0]                                   # (8, D) f32
    ln1_g, ln1_b = vecs[0:1], vecs[1:2]
    ln2_g, ln2_b = vecs[2:3], vecs[3:4]
    bo, b2 = vecs[4:5], vecs[5:6]

    # ------------- pre-LN causal multi-head self-attention -------------------
    xn = _layernorm(x, ln1_g, ln1_b)                     # (BS, D) f32
    qkv = jnp.dot(xn.astype(bf), wqkv_ref[0],
                  preferred_element_type=f32) + bqkv_ref[0]   # (BS, 3D) f32

    # f32 scale multiply (kept out of the bf16 weights for numerical parity).
    q = qkv[:, 0 * HIDDEN:1 * HIDDEN] * (HEAD_DIM ** -0.5)
    k = qkv[:, 1 * HIDDEN:2 * HIDDEN]
    v = qkv[:, 2 * HIDDEN:3 * HIDDEN]

    mask = mask_ref[...]                                 # (S, S) f32
    ctx_rows = []
    for b in range(BATCH):                               # static unroll, B small
        sl = slice(b * SEQ, (b + 1) * SEQ)
        qh = q[sl].reshape(SEQ, NUM_HEADS, HEAD_DIM).transpose(1, 0, 2)
        kh = k[sl].reshape(SEQ, NUM_HEADS, HEAD_DIM).transpose(1, 0, 2)
        vh = v[sl].reshape(SEQ, NUM_HEADS, HEAD_DIM).transpose(1, 0, 2)
        s = jnp.einsum("hqf,hkf->hqk", qh.astype(bf), kh.astype(bf),
                       preferred_element_type=f32)        # (H, S, S)
        s = s + mask[None, :, :]
        s = s - jnp.max(s, axis=-1, keepdims=True)
        p = jnp.exp(s)
        p = p / jnp.sum(p, axis=-1, keepdims=True)        # exact divide
        ctx = jnp.einsum("hqk,hkf->hqf", p.astype(bf), vh.astype(bf),
                         preferred_element_type=f32)      # (H, S, HD)
        ctx_rows.append(ctx.transpose(1, 0, 2).reshape(SEQ, HIDDEN))
    ctx = jnp.concatenate(ctx_rows, axis=0)               # (BS, D)

    # Dense output projection (full K=D contraction) + residual.
    x = x + jnp.dot(ctx.astype(bf), wo_ref[0],
                    preferred_element_type=f32) + bo

    # ------------- pre-LN MLP (quick_gelu) -----------------------------------
    xn2 = _layernorm(x, ln2_g, ln2_b)
    h = jnp.dot(xn2.astype(bf), w1_ref[0],
                preferred_element_type=f32) + b1_ref[0]
    h = h * jax.nn.sigmoid(1.702 * h)                     # quick_gelu in f32
    x = x + jnp.dot(h.astype(bf), w2_ref[0],
                    preferred_element_type=f32) + b2

    # Either/or store: intermediate residual, or final LayerNorm on last layer.
    @pl.when(layer != last)
    def _store():
        o_ref[...] = x.reshape(BATCH, SEQ, HIDDEN)

    @pl.when(layer == last)
    def _final():
        fln = fln_ref[...]                                # (2, D): gamma, beta
        o_ref[...] = _layernorm(x, fln[0:1], fln[1:2]).reshape(BATCH, SEQ, HIDDEN)


# ----------------------------- parameter init / packing ----------------------
def init_params(key):
    def nrm(k, shape, scale=0.02):
        return (scale * jax.random.normal(k, shape)).astype(jnp.float32)

    keys = jax.random.split(key, 3 + NUM_LAYERS)
    params = {
        "token_emb": nrm(keys[0], (VOCAB, HIDDEN)),
        "pos_emb": nrm(keys[1], (SEQ, HIDDEN)),
        "final_ln_g": jnp.ones((1, HIDDEN), jnp.float32),
        "final_ln_b": jnp.zeros((1, HIDDEN), jnp.float32),
        "layers": [],
    }
    for li in range(NUM_LAYERS):
        lk = jax.random.split(keys[3 + li], 6)
        layer = {
            "ln1_g": jnp.ones((1, HIDDEN), jnp.float32),
            "ln1_b": jnp.zeros((1, HIDDEN), jnp.float32),
            "wq": nrm(lk[0], (HIDDEN, HIDDEN)), "bq": jnp.zeros((1, HIDDEN), jnp.float32),
            "wk": nrm(lk[1], (HIDDEN, HIDDEN)), "bk": jnp.zeros((1, HIDDEN), jnp.float32),
            "wv": nrm(lk[2], (HIDDEN, HIDDEN)), "bv": jnp.zeros((1, HIDDEN), jnp.float32),
            "wo": nrm(lk[3], (HIDDEN, HIDDEN)), "bo": jnp.zeros((1, HIDDEN), jnp.float32),
            "ln2_g": jnp.ones((1, HIDDEN), jnp.float32),
            "ln2_b": jnp.zeros((1, HIDDEN), jnp.float32),
            "w1": nrm(lk[4], (HIDDEN, MLP_DIM)), "b1": jnp.zeros((1, MLP_DIM), jnp.float32),
            "w2": nrm(lk[5], (MLP_DIM, HIDDEN)), "b2": jnp.zeros((1, HIDDEN), jnp.float32),
        }
        params["layers"].append(layer)
    return params


def pack_params(params):
    """Stack per-layer weights along a leading layer axis.

    - wq|wk|wv fused column-wise into one (L, D, 3D) bf16 tensor (biases
      (L, 1, 3D) f32) so QKV is a single lane-dense matmul.
    - wo kept in its original (D, D) layout (heads are already contiguous in
      the lanes of the concatenated context).
    - All small per-layer vectors coalesced into one (L, 8, D) tensor
      (rows: ln1_g, ln1_b, ln2_g, ln2_b, bo, b2, pad, pad) -> one DMA per step.
    """
    bf = jnp.bfloat16
    f32 = jnp.float32
    Ls = params["layers"]

    wqkv = jnp.stack(
        [jnp.concatenate([L["wq"], L["wk"], L["wv"]], axis=1) for L in Ls],
        axis=0).astype(bf)                                         # (L, D, 3D)
    bqkv = jnp.stack(
        [jnp.concatenate([L["bq"], L["bk"], L["bv"]], axis=1) for L in Ls],
        axis=0).astype(f32)                                        # (L, 1, 3D)
    pad = jnp.zeros((2, HIDDEN), f32)
    vecs = jnp.stack(
        [jnp.concatenate([L["ln1_g"], L["ln1_b"], L["ln2_g"], L["ln2_b"],
                          L["bo"], L["b2"], pad], axis=0) for L in Ls],
        axis=0).astype(f32)                                        # (L, 8, D)

    def stack(name, dtype):
        return jnp.stack([L[name] for L in Ls], axis=0).astype(dtype)

    return {
        "wqkv": wqkv, "bqkv": bqkv,
        "wo": stack("wo", bf),
        "w1": stack("w1", bf), "b1": stack("b1", f32),
        "w2": stack("w2", bf),
        "vecs": vecs,
    }


# ----------------------------- forward (glue + fused kernel) ------------------
def frozen_clip_embedder_forward(tokens, params):
    """tokens: int32 [B, S] -> last_hidden_state float32 [B, S, D]."""
    # TODO(synk): CLIPTokenizer (string -> token ids) has no Pallas equivalent;
    # token ids are taken directly. Embedding gather + pos-emb are JAX glue.
    x = (params["token_emb"][tokens] + params["pos_emb"][None, :, :]).astype(jnp.float32)
    B, S, D = x.shape
    mask = _causal_mask(S)
    fln = jnp.concatenate([params["final_ln_g"], params["final_ln_b"]], axis=0)
    packed = pack_params(params)

    layer_keys = ("wqkv", "bqkv", "wo", "w1", "b1", "w2", "vecs")
    layer_args = [packed[k] for k in layer_keys]

    def layer_spec(arr):       # stacked [L, ...] weight, streamed along layer axis
        nz = arr.ndim - 1
        return pl.BlockSpec((1,) + arr.shape[1:],
                            lambda l, nz=nz: (l,) + (0,) * nz)

    def const_spec(arr):       # layer-invariant: fetched once, stays resident
        nd = arr.ndim
        return pl.BlockSpec(arr.shape, lambda l, nd=nd: (0,) * nd)

    # Whole residual stream in one VMEM-resident block across the layer axis.
    act_spec = pl.BlockSpec((B, S, D), lambda l: (0, 0, 0))

    in_specs = ([act_spec, const_spec(mask), const_spec(fln)]
                + [layer_spec(a) for a in layer_args])

    return pl.pallas_call(
        clip_text_kernel,
        out_shape=jax.ShapeDtypeStruct((B, S, D), jnp.float32),
        grid=(NUM_LAYERS,),
        in_specs=in_specs,
        out_specs=act_spec,    # same block every step -> accumulator pattern
        compiler_params=pltpu.CompilerParams(
            dimension_semantics=("arbitrary",)),
    )(x, mask, fln, *layer_args)


# ----------------------------- pure-JAX reference -----------------------------
def _reference_forward(tokens, params):
    """Mirrors the kernel's bf16-operand / f32-accumulate matmuls."""
    bf = jnp.bfloat16

    def ln(x, g, b):
        mu = jnp.mean(x, axis=-1, keepdims=True)
        var = jnp.mean((x - mu) ** 2, axis=-1, keepdims=True)
        return (x - mu) * jax.lax.rsqrt(var + LN_EPS) * g + b

    def mm(a, w):
        return jnp.einsum("...d,de->...e", a.astype(bf), w.astype(bf),
                          preferred_element_type=jnp.float32)

    x = (params["token_emb"][tokens] + params["pos_emb"][None, :, :]).astype(jnp.float32)
    B, S, D = x.shape
    bias = _causal_mask(S)
    scale = HEAD_DIM ** -0.5
    for L in params["layers"]:
        xn = ln(x, L["ln1_g"], L["ln1_b"])
        q = (mm(xn, L["wq"]) + L["bq"]) * scale
        k = mm(xn, L["wk"]) + L["bk"]
        v = mm(xn, L["wv"]) + L["bv"]
        q = q.reshape(B, S, NUM_HEADS, HEAD_DIM).transpose(0, 2, 1, 3)
        k = k.reshape(B, S, NUM_HEADS, HEAD_DIM).transpose(0, 2, 1, 3)
        v = v.reshape(B, S, NUM_HEADS, HEAD_DIM).transpose(0, 2, 1, 3)
        s = jnp.einsum("bhqd,bhkd->bhqk", q.astype(bf), k.astype(bf),
                       preferred_element_type=jnp.float32) + bias
        s = s - jnp.max(s, axis=-1, keepdims=True)
        p = jnp.exp(s)
        p = p / jnp.sum(p, axis=-1, keepdims=True)
        ctx = jnp.einsum("bhqk,bhkd->bhqd", p.astype(bf), v.astype(bf),
                         preferred_element_type=jnp.float32)
        ctx = ctx.transpose(0, 2, 1, 3).reshape(B, S, D)
        x = x + mm(ctx, L["wo"]) + L["bo"]
        xn = ln(x, L["ln2_g"], L["ln2_b"])
        h = mm(xn, L["w1"]) + L["b1"]
        h = h * jax.nn.sigmoid(1.702 * h)
        x = x + mm(h, L["w2"]) + L["b2"]
    return ln(x, params["final_ln_g"], params["final_ln_b"])


# ----------------------------- main -------------------------------------------
if __name__ == "__main__":
    key = jax.random.PRNGKey(0)
    k_tok, k_params = jax.random.split(key)
    params = init_params(k_params)

    # Synthetic "tokenized text" (stand-in for CLIPTokenizer output).
    tokens = jax.random.randint(k_tok, (BATCH, SEQ), 0, VOCAB, dtype=jnp.int32)

    z = frozen_clip_embedder_forward(tokens, params)
    z = jax.block_until_ready(z)
    assert z.shape == (BATCH, SEQ, HIDDEN), z.shape

    # Kernel and reference use identical bf16 casts, dense matmul column
    # decompositions and an exact softmax divide, so they agree tightly.
    z_ref = _reference_forward(tokens, params)
    err = float(jnp.max(jnp.abs(z - z_ref)))
    assert jnp.allclose(z, z_ref, atol=1e-2, rtol=1e-2), err

    print("KERNEL_OK")
</pallas_src>

<mosaic_0001>
module attributes {stable_mosaic.version = 11 : i64} {
  func.func @clip_text_kernel(%arg0: i32, %arg1: memref<2x8x128xf32, #tpu.memory_space<vmem>>, %arg2: memref<8x8xf32, #tpu.memory_space<vmem>>, %arg3: memref<2x128xf32, #tpu.memory_space<vmem>>, %arg4: memref<1x128x384xbf16, #tpu.memory_space<vmem>>, %arg5: memref<1x1x384xf32, #tpu.memory_space<vmem>>, %arg6: memref<1x128x128xbf16, #tpu.memory_space<vmem>>, %arg7: memref<1x128x512xbf16, #tpu.memory_space<vmem>>, %arg8: memref<1x1x512xf32, #tpu.memory_space<vmem>>, %arg9: memref<1x512x128xbf16, #tpu.memory_space<vmem>>, %arg10: memref<1x8x128xf32, #tpu.memory_space<vmem>>, %arg11: memref<2x8x128xf32, #tpu.memory_space<vmem>>) attributes {dimension_semantics = [#tpu.dimension_semantics<arbitrary>], iteration_bounds = array<i64: 2>, scalar_prefetch = 0 : i64, scratch_operands = 0 : i64, tpu.core_type = #tpu.core_type<tc>, window_params = [{pipeline_mode = #tpu.pipeline_mode<synchronous>, transform_indices = @transform_0, window_bounds = array<i64: 2, 8, 128>}, {pipeline_mode = #tpu.pipeline_mode<synchronous>, transform_indices = @transform_1, window_bounds = array<i64: 8, 8>}, {pipeline_mode = #tpu.pipeline_mode<synchronous>, transform_indices = @transform_2, window_bounds = array<i64: 2, 128>}, {transform_indices = @transform_3, window_bounds = array<i64: 1, 128, 384>}, {transform_indices = @transform_4, window_bounds = array<i64: 1, 1, 384>}, {transform_indices = @transform_5, window_bounds = array<i64: 1, 128, 128>}, {transform_indices = @transform_6, window_bounds = array<i64: 1, 128, 512>}, {transform_indices = @transform_7, window_bounds = array<i64: 1, 1, 512>}, {transform_indices = @transform_8, window_bounds = array<i64: 1, 512, 128>}, {transform_indices = @transform_9, window_bounds = array<i64: 1, 8, 128>}, {pipeline_mode = #tpu.pipeline_mode<synchronous>, transform_indices = @transform_10, window_bounds = array<i64: 2, 8, 128>}]} {
    %c0_i32 = arith.constant 0 : i32
    %0 = arith.cmpi eq, %arg0, %c0_i32 : i32
    %1 = arith.extui %0 : i1 to i32
    %c0_i32_0 = arith.constant 0 : i32
    %2 = arith.cmpi ne, %1, %c0_i32_0 : i32
    scf.if %2 {
      %c0_53 = arith.constant 0 : index
      %c0_54 = arith.constant 0 : index
      %c0_55 = arith.constant 0 : index
      %166 = vector.load %arg1[%c0_53, %c0_54, %c0_55] : memref<2x8x128xf32, #tpu.memory_space<vmem>>, vector<2x8x128xf32>
      %c0_56 = arith.constant 0 : index
      %c0_57 = arith.constant 0 : index
      %c0_58 = arith.constant 0 : index
      %167 = vector.load %arg11[%c0_56, %c0_57, %c0_58] : memref<2x8x128xf32, #tpu.memory_space<vmem>>, vector<2x8x128xf32>
      tpu.vector_store %arg11[%c0_56, %c0_57, %c0_58], %166 {strides = array<i32>} : memref<2x8x128xf32, #tpu.memory_space<vmem>>, vector<2x8x128xf32>,
    } else {
    }
    %c0 = arith.constant 0 : index
    %c0_1 = arith.constant 0 : index
    %c0_2 = arith.constant 0 : index
    %3 = vector.load %arg11[%c0, %c0_1, %c0_2] : memref<2x8x128xf32, #tpu.memory_space<vmem>>, vector<2x8x128xf32>
    %4 = vector.shape_cast %3 : vector<2x8x128xf32> to vector<16x128xf32>
    %c0_3 = arith.constant 0 : index
    %c0_4 = arith.constant 0 : index
    %c0_5 = arith.constant 0 : index
    %5 = vector.load %arg10[%c0_3, %c0_4, %c0_5] : memref<1x8x128xf32, #tpu.memory_space<vmem>>, vector<1x8x128xf32>
    %6 = vector.shape_cast %5 : vector<1x8x128xf32> to vector<8x128xf32>
    %7 = vector.extract_strided_slice %6 {offsets = [0, 0], sizes = [1, 128], strides = [1, 1]} : vector<8x128xf32> to vector<1x128xf32>
    %8 = vector.extract_strided_slice %6 {offsets = [1, 0], sizes = [1, 128], strides = [1, 1]} : vector<8x128xf32> to vector<1x128xf32>
    %9 = vector.extract_strided_slice %6 {offsets = [2, 0], sizes = [1, 128], strides = [1, 1]} : vector<8x128xf32> to vector<1x128xf32>
    %10 = vector.extract_strided_slice %6 {offsets = [3, 0], sizes = [1, 128], strides = [1, 1]} : vector<8x128xf32> to vector<1x128xf32>
    %11 = vector.extract_strided_slice %6 {offsets = [4, 0], sizes = [1, 128], strides = [1, 1]} : vector<8x128xf32> to vector<1x128xf32>
    %12 = vector.extract_strided_slice %6 {offsets = [5, 0], sizes = [1, 128], strides = [1, 1]} : vector<8x128xf32> to vector<1x128xf32>
    %cst = arith.constant dense<0.000000e+00> : vector<16xf32>
    %13 = vector.multi_reduction <add>, %4, %cst [1] : vector<16x128xf32> to vector<16xf32>
    %14 = vector.shape_cast %13 : vector<16xf32> to vector<16x1xf32>
    %cst_6 = arith.constant 1.280000e+02 : f32
    %15 = vector.broadcast %cst_6 : f32 to vector<16x1xf32>
    %16 = arith.divf %14, %15 : vector<16x1xf32>
    %17 = vector.broadcast %16 : vector<16x1xf32> to vector<16x128xf32>
    %18 = arith.subf %4, %17 : vector<16x128xf32>
    %19 = arith.mulf %18, %18 : vector<16x128xf32>
    %cst_7 = arith.constant dense<0.000000e+00> : vector<16xf32>
    %20 = vector.multi_reduction <add>, %19, %cst_7 [1] : vector<16x128xf32> to vector<16xf32>
    %21 = vector.shape_cast %20 : vector<16xf32> to vector<16x1xf32>
    %cst_8 = arith.constant 1.280000e+02 : f32
    %22 = vector.broadcast %cst_8 : f32 to vector<16x1xf32>
    %23 = arith.divf %21, %22 : vector<16x1xf32>
    %24 = vector.broadcast %16 : vector<16x1xf32> to vector<16x128xf32>
    %25 = arith.subf %4, %24 : vector<16x128xf32>
    %cst_9 = arith.constant 9.99999974E-6 : f32
    %26 = vector.broadcast %cst_9 : f32 to vector<16x1xf32>
    %27 = arith.addf %23, %26 : vector<16x1xf32>
    %28 = math.rsqrt %27 : vector<16x1xf32>
    %29 = vector.broadcast %28 : vector<16x1xf32> to vector<16x128xf32>
    %30 = arith.mulf %25, %29 : vector<16x128xf32>
    %31 = vector.broadcast %7 : vector<1x128xf32> to vector<16x128xf32>
    %32 = arith.mulf %30, %31 : vector<16x128xf32>
    %33 = vector.broadcast %8 : vector<1x128xf32> to vector<16x128xf32>
    %34 = arith.addf %32, %33 : vector<16x128xf32>
    %35 = arith.truncf %34 : vector<16x128xf32> to vector<16x128xbf16>
    %c0_10 = arith.constant 0 : index
    %c0_11 = arith.constant 0 : index
    %c0_12 = arith.constant 0 : index
    %36 = vector.load %arg4[%c0_10, %c0_11, %c0_12] : memref<1x128x384xbf16, #tpu.memory_space<vmem>>, vector<1x128x384xbf16>
    %37 = vector.shape_cast %36 : vector<1x128x384xbf16> to vector<128x384xbf16>
    %cst_13 = arith.constant dense<0.000000e+00> : vector<16x384xf32>
    %38 = tpu.matmul %35, %37, %cst_13 {dimension_numbers = #tpu.dot_dimension_numbers<[1], [0], [0], [1], [0, 0, 1, 1], [], []>} : vector<16x128xbf16>, vector<128x384xbf16>, vector<16x384xf32> -> vector<16x384xf32>
    %c0_14 = arith.constant 0 : index
    %c0_15 = arith.constant 0 : index
    %c0_16 = arith.constant 0 : index
    %39 = vector.load %arg5[%c0_14, %c0_15, %c0_16] : memref<1x1x384xf32, #tpu.memory_space<vmem>>, vector<1x1x384xf32>
    %40 = vector.shape_cast %39 : vector<1x1x384xf32> to vector<1x384xf32>
    %41 = vector.broadcast %40 : vector<1x384xf32> to vector<16x384xf32>
    %42 = arith.addf %38, %41 : vector<16x384xf32>
    %43 = vector.extract_strided_slice %42 {offsets = [0, 0], sizes = [16, 128], strides = [1, 1]} : vector<16x384xf32> to vector<16x128xf32>
    %cst_17 = arith.constant 0.176776692 : f32
    %44 = vector.broadcast %cst_17 : f32 to vector<16x128xf32>
    %45 = arith.mulf %43, %44 : vector<16x128xf32>
    %46 = vector.extract_strided_slice %42 {offsets = [0, 128], sizes = [16, 128], strides = [1, 1]} : vector<16x384xf32> to vector<16x128xf32>
    %47 = vector.extract_strided_slice %42 {offsets = [0, 256], sizes = [16, 128], strides = [1, 1]} : vector<16x384xf32> to vector<16x128xf32>
    %c0_18 = arith.constant 0 : index
    %c0_19 = arith.constant 0 : index
    %48 = vector.load %arg2[%c0_18, %c0_19] : memref<8x8xf32, #tpu.memory_space<vmem>>, vector<8x8xf32>
    %49 = vector.extract_strided_slice %45 {offsets = [0, 0], sizes = [8, 128], strides = [1, 1]} : vector<16x128xf32> to vector<8x128xf32>
    %50 = vector.shape_cast %49 : vector<8x128xf32> to vector<8x4x32xf32>
    %51 = tpu.transpose %50, [1, 0, 2] : vector<8x4x32xf32> -> vector<4x8x32xf32>
    %52 = vector.extract_strided_slice %46 {offsets = [0, 0], sizes = [8, 128], strides = [1, 1]} : vector<16x128xf32> to vector<8x128xf32>
    %53 = vector.shape_cast %52 : vector<8x128xf32> to vector<8x4x32xf32>
    %54 = tpu.transpose %53, [1, 0, 2] : vector<8x4x32xf32> -> vector<4x8x32xf32>
    %55 = vector.extract_strided_slice %47 {offsets = [0, 0], sizes = [8, 128], strides = [1, 1]} : vector<16x128xf32> to vector<8x128xf32>
    %56 = vector.shape_cast %55 : vector<8x128xf32> to vector<8x4x32xf32>
    %57 = tpu.transpose %56, [1, 0, 2] : vector<8x4x32xf32> -> vector<4x8x32xf32>
    %58 = arith.truncf %51 : vector<4x8x32xf32> to vector<4x8x32xbf16>
    %59 = arith.truncf %54 : vector<4x8x32xf32> to vector<4x8x32xbf16>
    "tpu.trace_start"() <{level = 10 : i32, message = "hqf,hkf->hqk"}> : () -> ()
    %cst_20 = arith.constant dense<0.000000e+00> : vector<4x8x8xf32>
    %60 = tpu.matmul %58, %59, %cst_20 {dimension_numbers = #tpu.dot_dimension_numbers<[2], [2], [1], [1], [0, 0, 0, 1, 1, 1], [0], [0]>} : vector<4x8x32xbf16>, vector<4x8x32xbf16>, vector<4x8x8xf32> -> vector<4x8x8xf32>
    "tpu.trace_stop"() : () -> ()
    %61 = vector.shape_cast %48 : vector<8x8xf32> to vector<1x8x8xf32>
    %62 = vector.broadcast %61 : vector<1x8x8xf32> to vector<4x8x8xf32>
    %63 = arith.addf %60, %62 : vector<4x8x8xf32>
    %cst_21 = arith.constant dense<0xFF800000> : vector<4x8xf32>
    %64 = vector.multi_reduction <maximumf>, %63, %cst_21 [2] : vector<4x8x8xf32> to vector<4x8xf32>
    %65 = vector.shape_cast %64 : vector<4x8xf32> to vector<4x8x1xf32>
    %66 = vector.broadcast %65 : vector<4x8x1xf32> to vector<4x8x8xf32>
    %67 = arith.subf %63, %66 : vector<4x8x8xf32>
    %68 = math.exp %67 : vector<4x8x8xf32>
    %cst_22 = arith.constant dense<0.000000e+00> : vector<4x8xf32>
    %69 = vector.multi_reduction <add>, %68, %cst_22 [2] : vector<4x8x8xf32> to vector<4x8xf32>
    %70 = vector.shape_cast %69 : vector<4x8xf32> to vector<4x8x1xf32>
    %71 = vector.broadcast %70 : vector<4x8x1xf32> to vector<4x8x8xf32>
    %72 = arith.divf %68, %71 : vector<4x8x8xf32>
    %73 = arith.truncf %72 : vector<4x8x8xf32> to vector<4x8x8xbf16>
    %74 = arith.truncf %57 : vector<4x8x32xf32> to vector<4x8x32xbf16>
    "tpu.trace_start"() <{level = 10 : i32, message = "hqk,hkf->hqf"}> : () -> ()
    %cst_23 = arith.constant dense<0.000000e+00> : vector<4x8x32xf32>
    %75 = tpu.matmul %73, %74, %cst_23 {dimension_numbers = #tpu.dot_dimension_numbers<[2], [1], [1], [2], [0, 0, 0, 1, 1, 2], [0], [0]>} : vector<4x8x8xbf16>, vector<4x8x32xbf16>, vector<4x8x32xf32> -> vector<4x8x32xf32>
    "tpu.trace_stop"() : () -> ()
    %76 = tpu.transpose %75, [1, 0, 2] : vector<4x8x32xf32> -> vector<8x4x32xf32>
    %77 = vector.shape_cast %76 : vector<8x4x32xf32> to vector<8x128xf32>
    %78 = vector.extract_strided_slice %45 {offsets = [8, 0], sizes = [8, 128], strides = [1, 1]} : vector<16x128xf32> to vector<8x128xf32>
    %79 = vector.shape_cast %78 : vector<8x128xf32> to vector<8x4x32xf32>
    %80 = tpu.transpose %79, [1, 0, 2] : vector<8x4x32xf32> -> vector<4x8x32xf32>
    %81 = vector.extract_strided_slice %46 {offsets = [8, 0], sizes = [8, 128], strides = [1, 1]} : vector<16x128xf32> to vector<8x128xf32>
    %82 = vector.shape_cast %81 : vector<8x128xf32> to vector<8x4x32xf32>
    %83 = tpu.transpose %82, [1, 0, 2] : vector<8x4x32xf32> -> vector<4x8x32xf32>
    %84 = vector.extract_strided_slice %47 {offsets = [8, 0], sizes = [8, 128], strides = [1, 1]} : vector<16x128xf32> to vector<8x128xf32>
    %85 = vector.shape_cast %84 : vector<8x128xf32> to vector<8x4x32xf32>
    %86 = tpu.transpose %85, [1, 0, 2] : vector<8x4x32xf32> -> vector<4x8x32xf32>
    %87 = arith.truncf %80 : vector<4x8x32xf32> to vector<4x8x32xbf16>
    %88 = arith.truncf %83 : vector<4x8x32xf32> to vector<4x8x32xbf16>
    "tpu.trace_start"() <{level = 10 : i32, message = "hqf,hkf->hqk"}> : () -> ()
    %cst_24 = arith.constant dense<0.000000e+00> : vector<4x8x8xf32>
    %89 = tpu.matmul %87, %88, %cst_24 {dimension_numbers = #tpu.dot_dimension_numbers<[2], [2], [1], [1], [0, 0, 0, 1, 1, 1], [0], [0]>} : vector<4x8x32xbf16>, vector<4x8x32xbf16>, vector<4x8x8xf32> -> vector<4x8x8xf32>
    "tpu.trace_stop"() : () -> ()
    %90 = vector.shape_cast %48 : vector<8x8xf32> to vector<1x8x8xf32>
    %91 = vector.broadcast %90 : vector<1x8x8xf32> to vector<4x8x8xf32>
    %92 = arith.addf %89, %91 : vector<4x8x8xf32>
    %cst_25 = arith.constant dense<0xFF800000> : vector<4x8xf32>
    %93 = vector.multi_reduction <maximumf>, %92, %cst_25 [2] : vector<4x8x8xf32> to vector<4x8xf32>
    %94 = vector.shape_cast %93 : vector<4x8xf32> to vector<4x8x1xf32>
    %95 = vector.broadcast %94 : vector<4x8x1xf32> to vector<4x8x8xf32>
    %96 = arith.subf %92, %95 : vector<4x8x8xf32>
    %97 = math.exp %96 : vector<4x8x8xf32>
    %cst_26 = arith.constant dense<0.000000e+00> : vector<4x8xf32>
    %98 = vector.multi_reduction <add>, %97, %cst_26 [2] : vector<4x8x8xf32> to vector<4x8xf32>
    %99 = vector.shape_cast %98 : vector<4x8xf32> to vector<4x8x1xf32>
    %100 = vector.broadcast %99 : vector<4x8x1xf32> to vector<4x8x8xf32>
    %101 = arith.divf %97, %100 : vector<4x8x8xf32>
    %102 = arith.truncf %101 : vector<4x8x8xf32> to vector<4x8x8xbf16>
    %103 = arith.truncf %86 : vector<4x8x32xf32> to vector<4x8x32xbf16>
    "tpu.trace_start"() <{level = 10 : i32, message = "hqk,hkf->hqf"}> : () -> ()
    %cst_27 = arith.constant dense<0.000000e+00> : vector<4x8x32xf32>
    %104 = tpu.matmul %102, %103, %cst_27 {dimension_numbers = #tpu.dot_dimension_numbers<[2], [1], [1], [2], [0, 0, 0, 1, 1, 2], [0], [0]>} : vector<4x8x8xbf16>, vector<4x8x32xbf16>, vector<4x8x32xf32> -> vector<4x8x32xf32>
    "tpu.trace_stop"() : () -> ()
    %105 = tpu.transpose %104, [1, 0, 2] : vector<4x8x32xf32> -> vector<8x4x32xf32>
    %106 = vector.shape_cast %105 : vector<8x4x32xf32> to vector<8x128xf32>
    %107 = tpu.concatenate %77, %106 in 0 : vector<8x128xf32>, vector<8x128xf32> -> vector<16x128xf32>
    %108 = arith.truncf %107 : vector<16x128xf32> to vector<16x128xbf16>
    %c0_28 = arith.constant 0 : index
    %c0_29 = arith.constant 0 : index
    %c0_30 = arith.constant 0 : index
    %109 = vector.load %arg6[%c0_28, %c0_29, %c0_30] : memref<1x128x128xbf16, #tpu.memory_space<vmem>>, vector<1x128x128xbf16>
    %110 = vector.shape_cast %109 : vector<1x128x128xbf16> to vector<128x128xbf16>
    %cst_31 = arith.constant dense<0.000000e+00> : vector<16x128xf32>
    %111 = tpu.matmul %108, %110, %cst_31 {dimension_numbers = #tpu.dot_dimension_numbers<[1], [0], [0], [1], [0, 0, 1, 1], [], []>} : vector<16x128xbf16>, vector<128x128xbf16>, vector<16x128xf32> -> vector<16x128xf32>
    %112 = arith.addf %4, %111 : vector<16x128xf32>
    %113 = vector.broadcast %11 : vector<1x128xf32> to vector<16x128xf32>
    %114 = arith.addf %112, %113 : vector<16x128xf32>
    %cst_32 = arith.constant dense<0.000000e+00> : vector<16xf32>
    %115 = vector.multi_reduction <add>, %114, %cst_32 [1] : vector<16x128xf32> to vector<16xf32>
    %116 = vector.shape_cast %115 : vector<16xf32> to vector<16x1xf32>
    %cst_33 = arith.constant 1.280000e+02 : f32
    %117 = vector.broadcast %cst_33 : f32 to vector<16x1xf32>
    %118 = arith.divf %116, %117 : vector<16x1xf32>
    %119 = vector.broadcast %118 : vector<16x1xf32> to vector<16x128xf32>
    %120 = arith.subf %114, %119 : vector<16x128xf32>
    %121 = arith.mulf %120, %120 : vector<16x128xf32>
    %cst_34 = arith.constant dense<0.000000e+00> : vector<16xf32>
    %122 = vector.multi_reduction <add>, %121, %cst_34 [1] : vector<16x128xf32> to vector<16xf32>
    %123 = vector.shape_cast %122 : vector<16xf32> to vector<16x1xf32>
    %cst_35 = arith.constant 1.280000e+02 : f32
    %124 = vector.broadcast %cst_35 : f32 to vector<16x1xf32>
    %125 = arith.divf %123, %124 : vector<16x1xf32>
    %126 = vector.broadcast %118 : vector<16x1xf32> to vector<16x128xf32>
    %127 = arith.subf %114, %126 : vector<16x128xf32>
    %cst_36 = arith.constant 9.99999974E-6 : f32
    %128 = vector.broadcast %cst_36 : f32 to vector<16x1xf32>
    %129 = arith.addf %125, %128 : vector<16x1xf32>
    %130 = math.rsqrt %129 : vector<16x1xf32>
    %131 = vector.broadcast %130 : vector<16x1xf32> to vector<16x128xf32>
    %132 = arith.mulf %127, %131 : vector<16x128xf32>
    %133 = vector.broadcast %9 : vector<1x128xf32> to vector<16x128xf32>
    %134 = arith.mulf %132, %133 : vector<16x128xf32>
    %135 = vector.broadcast %10 : vector<1x128xf32> to vector<16x128xf32>
    %136 = arith.addf %134, %135 : vector<16x128xf32>
    %137 = arith.truncf %136 : vector<16x128xf32> to vector<16x128xbf16>
    %c0_37 = arith.constant 0 : index
    %c0_38 = arith.constant 0 : index
    %c0_39 = arith.constant 0 : index
    %138 = vector.load %arg7[%c0_37, %c0_38, %c0_39] : memref<1x128x512xbf16, #tpu.memory_space<vmem>>, vector<1x128x512xbf16>
    %139 = vector.shape_cast %138 : vector<1x128x512xbf16> to vector<128x512xbf16>
    %cst_40 = arith.constant dense<0.000000e+00> : vector<16x512xf32>
    %140 = tpu.matmul %137, %139, %cst_40 {dimension_numbers = #tpu.dot_dimension_numbers<[1], [0], [0], [1], [0, 0, 1, 1], [], []>} : vector<16x128xbf16>, vector<128x512xbf16>, vector<16x512xf32> -> vector<16x512xf32>
    %c0_41 = arith.constant 0 : index
    %c0_42 = arith.constant 0 : index
    %c0_43 = arith.constant 0 : index
    %141 = vector.load %arg8[%c0_41, %c0_42, %c0_43] : memref<1x1x512xf32, #tpu.memory_space<vmem>>, vector<1x1x512xf32>
    %142 = vector.shape_cast %141 : vector<1x1x512xf32> to vector<1x512xf32>
    %143 = vector.broadcast %142 : vector<1x512xf32> to vector<16x512xf32>
    %144 = arith.addf %140, %143 : vector<16x512xf32>
    %cst_44 = arith.constant 1.702000e+00 : f32
    %145 = vector.broadcast %cst_44 : f32 to vector<16x512xf32>
    %146 = arith.mulf %145, %144 : vector<16x512xf32>
    %147 = arith.negf %146 : vector<16x512xf32>
    %148 = math.exp %147 : vector<16x512xf32>
    %cst_45 = arith.constant 1.000000e+00 : f32
    %149 = vector.broadcast %cst_45 : f32 to vector<16x512xf32>
    %150 = arith.addf %149, %148 : vector<16x512xf32>
    %151 = arith.divf %149, %150 : vector<16x512xf32>
    %152 = arith.mulf %144, %151 : vector<16x512xf32>
    %153 = arith.truncf %152 : vector<16x512xf32> to vector<16x512xbf16>
    %c0_46 = arith.constant 0 : index
    %c0_47 = arith.constant 0 : index
    %c0_48 = arith.constant 0 : index
    %154 = vector.load %arg9[%c0_46, %c0_47, %c0_48] : memref<1x512x128xbf16, #tpu.memory_space<vmem>>, vector<1x512x128xbf16>
    %155 = vector.shape_cast %154 : vector<1x512x128xbf16> to vector<512x128xbf16>
    %cst_49 = arith.constant dense<0.000000e+00> : vector<16x128xf32>
    %156 = tpu.matmul %153, %155, %cst_49 {dimension_numbers = #tpu.dot_dimension_numbers<[1], [0], [0], [1], [0, 0, 1, 1], [], []>} : vector<16x512xbf16>, vector<512x128xbf16>, vector<16x128xf32> -> vector<16x128xf32>
    %157 = arith.addf %114, %156 : vector<16x128xf32>
    %158 = vector.broadcast %12 : vector<1x128xf32> to vector<16x128xf32>
    %159 = arith.addf %157, %158 : vector<16x128xf32>
    %c1_i32 = arith.constant 1 : i32
    %160 = arith.cmpi ne, %arg0, %c1_i32 : i32
    %161 = arith.extui %160 : i1 to i32
    %c0_i32_50 = arith.constant 0 : i32
    %162 = arith.cmpi ne, %161, %c0_i32_50 : i32
    scf.if %162 {
      %166 = vector.shape_cast %159 : vector<16x128xf32> to vector<2x8x128xf32>
      %c0_53 = arith.constant 0 : index
      %c0_54 = arith.constant 0 : index
      %c0_55 = arith.constant 0 : index
      %167 = vector.load %arg11[%c0_53, %c0_54, %c0_55] : memref<2x8x128xf32, #tpu.memory_space<vmem>>, vector<2x8x128xf32>
      tpu.vector_store %arg11[%c0_53, %c0_54, %c0_55], %166 {strides = array<i32>} : memref<2x8x128xf32, #tpu.memory_space<vmem>>, vector<2x8x128xf32>,
    } else {
    }
    %c1_i32_51 = arith.constant 1 : i32
    %163 = arith.cmpi eq, %arg0, %c1_i32_51 : i32
    %164 = arith.extui %163 : i1 to i32
    %c0_i32_52 = arith.constant 0 : i32
    %165 = arith.cmpi ne, %164, %c0_i32_52 : i32
    scf.if %165 {
      %c0_53 = arith.constant 0 : index
      %c0_54 = arith.constant 0 : index
      %166 = vector.load %arg3[%c0_53, %c0_54] : memref<2x128xf32, #tpu.memory_space<vmem>>, vector<2x128xf32>
      %167 = vector.extract_strided_slice %166 {offsets = [0, 0], sizes = [1, 128], strides = [1, 1]} : vector<2x128xf32> to vector<1x128xf32>
      %168 = vector.extract_strided_slice %166 {offsets = [1, 0], sizes = [1, 128], strides = [1, 1]} : vector<2x128xf32> to vector<1x128xf32>
      %cst_55 = arith.constant dense<0.000000e+00> : vector<16xf32>
      %169 = vector.multi_reduction <add>, %159, %cst_55 [1] : vector<16x128xf32> to vector<16xf32>
      %170 = vector.shape_cast %169 : vector<16xf32> to vector<16x1xf32>
      %cst_56 = arith.constant 1.280000e+02 : f32
      %171 = vector.broadcast %cst_56 : f32 to vector<16x1xf32>
      %172 = arith.divf %170, %171 : vector<16x1xf32>
      %173 = vector.broadcast %172 : vector<16x1xf32> to vector<16x128xf32>
      %174 = arith.subf %159, %173 : vector<16x128xf32>
      %175 = arith.mulf %174, %174 : vector<16x128xf32>
      %cst_57 = arith.constant dense<0.000000e+00> : vector<16xf32>
      %176 = vector.multi_reduction <add>, %175, %cst_57 [1] : vector<16x128xf32> to vector<16xf32>
      %177 = vector.shape_cast %176 : vector<16xf32> to vector<16x1xf32>
      %cst_58 = arith.constant 1.280000e+02 : f32
      %178 = vector.broadcast %cst_58 : f32 to vector<16x1xf32>
      %179 = arith.divf %177, %178 : vector<16x1xf32>
      %180 = vector.broadcast %172 : vector<16x1xf32> to vector<16x128xf32>
      %181 = arith.subf %159, %180 : vector<16x128xf32>
      %cst_59 = arith.constant 9.99999974E-6 : f32
      %182 = vector.broadcast %cst_59 : f32 to vector<16x1xf32>
      %183 = arith.addf %179, %182 : vector<16x1xf32>
      %184 = math.rsqrt %183 : vector<16x1xf32>
      %185 = vector.broadcast %184 : vector<16x1xf32> to vector<16x128xf32>
      %186 = arith.mulf %181, %185 : vector<16x128xf32>
      %187 = vector.broadcast %167 : vector<1x128xf32> to vector<16x128xf32>
      %188 = arith.mulf %186, %187 : vector<16x128xf32>
      %189 = vector.broadcast %168 : vector<1x128xf32> to vector<16x128xf32>
      %190 = arith.addf %188, %189 : vector<16x128xf32>
      %191 = vector.shape_cast %190 : vector<16x128xf32> to vector<2x8x128xf32>
      %c0_60 = arith.constant 0 : index
      %c0_61 = arith.constant 0 : index
      %c0_62 = arith.constant 0 : index
      %192 = vector.load %arg11[%c0_60, %c0_61, %c0_62] : memref<2x8x128xf32, #tpu.memory_space<vmem>>, vector<2x8x128xf32>
      tpu.vector_store %arg11[%c0_60, %c0_61, %c0_62], %191 {strides = array<i32>} : memref<2x8x128xf32, #tpu.memory_space<vmem>>, vector<2x8x128xf32>,
    } else {
    }
    return
  }
  func.func @transform_0(%arg0: i32) -> (i32, i32, i32) {
    %c0_i32 = arith.constant 0 : i32
    %c0_i32_0 = arith.constant 0 : i32
    %c0_i32_1 = arith.constant 0 : i32
    %c0_i32_2 = arith.constant 0 : i32
    return %c0_i32, %c0_i32_0, %c0_i32_1 : i32, i32, i32
  }
  func.func @transform_1(%arg0: i32) -> (i32, i32) {
    %c0_i32 = arith.constant 0 : i32
    %c0_i32_0 = arith.constant 0 : i32
    %c0_i32_1 = arith.constant 0 : i32
    return %c0_i32, %c0_i32_0 : i32, i32
  }
  func.func @transform_2(%arg0: i32) -> (i32, i32) {
    %c0_i32 = arith.constant 0 : i32
    %c0_i32_0 = arith.constant 0 : i32
    %c0_i32_1 = arith.constant 0 : i32
    return %c0_i32, %c0_i32_0 : i32, i32
  }
  func.func @transform_3(%arg0: i32) -> (i32, i32, i32) {
    %c0_i32 = arith.constant 0 : i32
    %c0_i32_0 = arith.constant 0 : i32
    %c0_i32_1 = arith.constant 0 : i32
    return %arg0, %c0_i32, %c0_i32_0 : i32, i32, i32
  }
  func.func @transform_4(%arg0: i32) -> (i32, i32, i32) {
    %c0_i32 = arith.constant 0 : i32
    %c0_i32_0 = arith.constant 0 : i32
    %c0_i32_1 = arith.constant 0 : i32
    return %arg0, %c0_i32, %c0_i32_0 : i32, i32, i32
  }
  func.func @transform_5(%arg0: i32) -> (i32, i32, i32) {
    %c0_i32 = arith.constant 0 : i32
    %c0_i32_0 = arith.constant 0 : i32
    %c0_i32_1 = arith.constant 0 : i32
    return %arg0, %c0_i32, %c0_i32_0 : i32, i32, i32
  }
  func.func @transform_6(%arg0: i32) -> (i32, i32, i32) {
    %c0_i32 = arith.constant 0 : i32
    %c0_i32_0 = arith.constant 0 : i32
    %c0_i32_1 = arith.constant 0 : i32
    return %arg0, %c0_i32, %c0_i32_0 : i32, i32, i32
  }
  func.func @transform_7(%arg0: i32) -> (i32, i32, i32) {
    %c0_i32 = arith.constant 0 : i32
    %c0_i32_0 = arith.constant 0 : i32
    %c0_i32_1 = arith.constant 0 : i32
    return %arg0, %c0_i32, %c0_i32_0 : i32, i32, i32
  }
  func.func @transform_8(%arg0: i32) -> (i32, i32, i32) {
    %c0_i32 = arith.constant 0 : i32
    %c0_i32_0 = arith.constant 0 : i32
    %c0_i32_1 = arith.constant 0 : i32
    return %arg0, %c0_i32, %c0_i32_0 : i32, i32, i32
  }
  func.func @transform_9(%arg0: i32) -> (i32, i32, i32) {
    %c0_i32 = arith.constant 0 : i32
    %c0_i32_0 = arith.constant 0 : i32
    %c0_i32_1 = arith.constant 0 : i32
    return %arg0, %c0_i32, %c0_i32_0 : i32, i32, i32
  }
  func.func @transform_10(%arg0: i32) -> (i32, i32, i32) {
    %c0_i32 = arith.constant 0 : i32
    %c0_i32_0 = arith.constant 0 : i32
    %c0_i32_1 = arith.constant 0 : i32
    %c0_i32_2 = arith.constant 0 : i32
    return %c0_i32, %c0_i32_0, %c0_i32_1 : i32, i32, i32
  }
}

</mosaic_0001>

<llo_original>
// kernel: tpu_custom_call.1
$region0: #{tpu_custom_call.1}
  #allocation0 [shape = 'u32[]', space=smem, size = 0x4, offset = 0x4, fixed_abs, tag = 'smem constant byte address 0x4 - core index']
  #allocation1 [shape = 'u32[72,128]{1,0:T(1,128)}', space=vmem, size = 0x9000, scoped, tag = 'internal scratch']
  %s0 = inlined_call_operand.hbm [shape: f32[2,8,128], index: 0, kind: input, shape index: {}]
  %s1 = inlined_call_operand.hbm [shape: f32[8,8], index: 1, kind: input, shape index: {}]
  %s2 = inlined_call_operand.hbm [shape: f32[2,128], index: 2, kind: input, shape index: {}]
  %s3 = inlined_call_operand.hbm [shape: bf16[2,128,384], index: 3, kind: input, shape index: {}]
  %s4 = inlined_call_operand.hbm [shape: f32[2,1,384], index: 4, kind: input, shape index: {}]
  %s5 = inlined_call_operand.hbm [shape: bf16[2,128,128], index: 5, kind: input, shape index: {}]
  %s6 = inlined_call_operand.hbm [shape: bf16[2,128,512], index: 6, kind: input, shape index: {}]
  %s7 = inlined_call_operand.hbm [shape: f32[2,1,512], index: 7, kind: input, shape index: {}]
  %s8 = inlined_call_operand.hbm [shape: bf16[2,512,128], index: 8, kind: input, shape index: {}]
  %s9 = inlined_call_operand.hbm [shape: f32[2,8,128], index: 9, kind: input, shape index: {}]
  %s10 = inlined_call_operand.hbm [shape: f32[2,8,128], index: 10, kind: output, shape index: {}]
  %s11 = sld [smem:[#allocation0]]
  $region125: #{tpu_custom_call.1} parent=0
    _
  %s13 = ssub.s32 1, %s11
  %s14 = scalar_select 0, %s13, %s11
  $region1: #{tpu_custom_call.1} parent=0
    #allocation2 [shape = 'u8[8192]{0}', space=vmem, size = 0x2000, scoped, tag = 'input window, operand 0, single buffered']
    #allocation3 [shape = 's32[2]{0}', space=sflag, size = 0x8, scoped, tag = 'scoped memory for tpu_custom_call.1']
    #allocation4 [shape = 's32[2]{0}', space=sflag, size = 0x8, scoped, tag = 'scoped memory for tpu_custom_call.1']
    #allocation5 [shape = 'u8[4096]{0}', space=vmem, size = 0x1000, scoped, tag = 'input window, operand 1, single buffered']
    #allocation6 [shape = 's32[1]{0}', space=sflag, size = 0x4, scoped, tag = 'scoped memory for tpu_custom_call.1']
    #allocation7 [shape = 'u8[1024]{0}', space=vmem, size = 0x400, scoped, tag = 'input window, operand 2, single buffered']
    #allocation8 [shape = 'u8[196608]{0}', space=vmem, size = 0x30000, scoped, tag = 'input window, operand 3']
    #allocation9 [shape = 's32[2]{0}', space=sflag, size = 0x8, scoped, tag = 'scoped memory for tpu_custom_call.1']
    #allocation10 [shape = 'u8[3072]{0}', space=vmem, size = 0xc00, scoped, tag = 'input window, operand 4']
    #allocation11 [shape = 'u8[65536]{0}', space=vmem, size = 0x10000, scoped, tag = 'input window, operand 5']
    #allocation12 [shape = 's32[2]{0}', space=sflag, size = 0x8, scoped, tag = 'scoped memory for tpu_custom_call.1']
    #allocation13 [shape = 'u8[262144]{0}', space=vmem, size = 0x40000, scoped, tag = 'input window, operand 6']
    #allocation14 [shape = 'u8[4096]{0}', space=vmem, size = 0x1000, scoped, tag = 'input window, operand 7']
    #allocation15 [shape = 's32[2]{0}', space=sflag, size = 0x8, scoped, tag = 'scoped memory for tpu_custom_call.1']
    #allocation16 [shape = 'u8[262144]{0}', space=vmem, size = 0x40000, scoped, tag = 'input window, operand 8']
    #allocation17 [shape = 'u8[8192]{0}', space=vmem, size = 0x2000, scoped, tag = 'input window, operand 9']
    #allocation18 [shape = 's32[2]{0}', space=sflag, size = 0x8, scoped, tag = 'scoped memory for tpu_custom_call.1']
    #allocation19 [shape = 'u8[8192]{0}', space=vmem, size = 0x2000, scoped, tag = 'output window, operand 0, single buffered']
    %15 = vsyncpa [#allocation3], 0
    %16 = vsyncpa [#allocation6], 0
    %17 = vsyncpa [#allocation9], 0
    %s18 = scalar_lea.sflag [#allocation9], 1
    %19 = vsyncpa %s18, 0
    %20 = vsyncpa [#allocation12], 0
    %s21 = scalar_lea.sflag [#allocation12], 1
    %22 = vsyncpa %s21, 0
    %23 = vsyncpa [#allocation15], 0
    %s24 = scalar_lea.sflag [#allocation15], 1
    %25 = vsyncpa %s24, 0
    %26 = vsyncpa [#allocation18], 0
    %s27 = scalar_lea.sflag [#allocation18], 1
    %28 = vsyncpa %s27, 0
    %29 = vsyncpa [#allocation4], 0
    loop: start=0, step=1, limit=4
    $region2: #{tpu_custom_call.1} parent=1 // loop_pre_header
      _
    $region3: #{tpu_custom_call.1} parent=1 // loop_header
      %s31 = sphi 0, %s35
      %p32 = scmp.ge.s32.totalorder %s31, 4
      %s39 = sphi 0, %s39
      %s41 = sphi 0, %s39
      %s42 = sphi 0, %s41
      %s56 = sphi 0, %s42
      %s60 = sphi 0, %s60
      %s62 = sphi 0, %s60
      %s63 = sphi 0, %s62
      %s77 = sphi 0, %s63
      %s81 = sphi 0, %s81
      %s83 = sphi 0, %s81
      %s84 = sphi 0, %s83
      %s98 = sphi 0, %s84
      %s104 = sphi 0, %s106
      %s107 = sphi 0, %s104
      %s108 = sphi 0, %s107
      %s124 = sphi 0, %s108
      %s130 = sphi 0, %s132
      %s133 = sphi 0, %s130
      %s134 = sphi 0, %s133
      %s150 = sphi 0, %s134
      %s156 = sphi 0, %s158
      %s159 = sphi 0, %s156
      %s160 = sphi 0, %s159
      %s176 = sphi 0, %s160
      %s182 = sphi 0, %s184
      %s185 = sphi 0, %s182
      %s186 = sphi 0, %s185
      %s202 = sphi 0, %s186
      %s208 = sphi 0, %s210
      %s211 = sphi 0, %s208
      %s212 = sphi 0, %s211
      %s228 = sphi 0, %s212
      %s234 = sphi 0, %s236
      %s237 = sphi 0, %s234
      %s238 = sphi 0, %s237
      %s254 = sphi 0, %s238
      %s260 = sphi 0, %s262
      %s263 = sphi 0, %s260
      %s264 = sphi 0, %s263
      %s280 = sphi 0, %s264
      %s284 = sphi 0, %s284
      %s286 = sphi 0, %s284
      %s287 = sphi 0, %s286
      %s301 = sphi 0, %s287
    $region4: #{tpu_custom_call.1} parent=1 // loop_header_branch
      %34 = sbr.rel (%p32) target = $region8
    $region5: #{tpu_custom_call.1} parent=1 // loop_body
      %s36 = ssub.s32 %s31, 1
      %s37 = ssub.s32 %s31, 2
      %s38 = sadd.s32 %s31, 1
      %s40 = sadd.s32 %s39, 1
      %p43 = scmp.eq.s32.totalorder %s31, 1
      %p44 = scmp.ne.s32.totalorder %s39, %s41
      %p45 = scmp.eq.s32.totalorder %s31, 0
      %p46 = por %p44, %p45
      %p47 = scmp.ne.s32.totalorder %s39, %s41
      %p48 = scmp.eq.s32.totalorder %s36, 1
      %p49 = por %p47, %p48
      %p50 = scmp.ne.s32.totalorder %s41, %s42
      %p51 = scmp.eq.s32.totalorder %s36, 0
      %p52 = por %p50, %p51
      %p53 = scmp.ne.s32.totalorder %s41, %s42
      %p54 = scmp.eq.s32.totalorder %s37, 1
      %p55 = por %p53, %p54
      %p57 = scmp.ne.s32.totalorder %s42, %s56
      %p58 = scmp.eq.s32.totalorder %s37, 0
      %p59 = por %p57, %p58
      %s61 = sadd.s32 %s60, 1
      %p64 = scmp.eq.s32.totalorder %s31, 1
      %p65 = scmp.ne.s32.totalorder %s60, %s62
      %p66 = scmp.eq.s32.totalorder %s31, 0
      %p67 = por %p65, %p66
      %p68 = scmp.ne.s32.totalorder %s60, %s62
      %p69 = scmp.eq.s32.totalorder %s36, 1
      %p70 = por %p68, %p69
      %p71 = scmp.ne.s32.totalorder %s62, %s63
      %p72 = scmp.eq.s32.totalorder %s36, 0
      %p73 = por %p71, %p72
      %p74 = scmp.ne.s32.totalorder %s62, %s63
      %p75 = scmp.eq.s32.totalorder %s37, 1
      %p76 = por %p74, %p75
      %p78 = scmp.ne.s32.totalorder %s63, %s77
      %p79 = scmp.eq.s32.totalorder %s37, 0
      %p80 = por %p78, %p79
      %s82 = sadd.s32 %s81, 1
      %p85 = scmp.eq.s32.totalorder %s31, 1
      %p86 = scmp.ne.s32.totalorder %s81, %s83
      %p87 = scmp.eq.s32.totalorder %s31, 0
      %p88 = por %p86, %p87
      %p89 = scmp.ne.s32.totalorder %s81, %s83
      %p90 = scmp.eq.s32.totalorder %s36, 1
      %p91 = por %p89, %p90
      %p92 = scmp.ne.s32.totalorder %s83, %s84
      %p93 = scmp.eq.s32.totalorder %s36, 0
      %p94 = por %p92, %p93
      %p95 = scmp.ne.s32.totalorder %s83, %s84
      %p96 = scmp.eq.s32.totalorder %s37, 1
      %p97 = por %p95, %p96
      %p99 = scmp.ne.s32.totalorder %s84, %s98
      %p100 = scmp.eq.s32.totalorder %s37, 0
      %p101 = por %p99, %p100
      %s102 = ssub.s32 %s31, %s38
      %p103 = scmp.eq.s32.totalorder %s102, 0
      %s105 = sadd.s32 %s104, 1
      %s106 = scalar_select %p103, %s104, %s105
      %p109 = pneg %p103
      %p110 = scmp.eq.s32.totalorder %s31, 1
      %p111 = por %p109, %p110
      %p112 = scmp.ne.s32.totalorder %s104, %s107
      %p113 = scmp.eq.s32.totalorder %s31, 0
      %p114 = por %p112, %p113
      %p115 = scmp.ne.s32.totalorder %s104, %s107
      %p116 = scmp.eq.s32.totalorder %s36, 1
      %p117 = por %p115, %p116
      %p118 = scmp.ne.s32.totalorder %s107, %s108
      %p119 = scmp.eq.s32.totalorder %s36, 0
      %p120 = por %p118, %p119
      %p121 = scmp.ne.s32.totalorder %s107, %s108
      %p122 = scmp.eq.s32.totalorder %s37, 1
      %p123 = por %p121, %p122
      %p125 = scmp.ne.s32.totalorder %s108, %s124
      %p126 = scmp.eq.s32.totalorder %s37, 0
      %p127 = por %p125, %p126
      %s128 = ssub.s32 %s31, %s38
      %p129 = scmp.eq.s32.totalorder %s128, 0
      %s131 = sadd.s32 %s130, 1
      %s132 = scalar_select %p129, %s130, %s131
      %p135 = pneg %p129
      %p136 = scmp.eq.s32.totalorder %s31, 1
      %p137 = por %p135, %p136
      %p138 = scmp.ne.s32.totalorder %s130, %s133
      %p139 = scmp.eq.s32.totalorder %s31, 0
      %p140 = por %p138, %p139
      %p141 = scmp.ne.s32.totalorder %s130, %s133
      %p142 = scmp.eq.s32.totalorder %s36, 1
      %p143 = por %p141, %p142
      %p144 = scmp.ne.s32.totalorder %s133, %s134
      %p145 = scmp.eq.s32.totalorder %s36, 0
      %p146 = por %p144, %p145
      %p147 = scmp.ne.s32.totalorder %s133, %s134
      %p148 = scmp.eq.s32.totalorder %s37, 1
      %p149 = por %p147, %p148
      %p151 = scmp.ne.s32.totalorder %s134, %s150
      %p152 = scmp.eq.s32.totalorder %s37, 0
      %p153 = por %p151, %p152
      %s154 = ssub.s32 %s31, %s38
      %p155 = scmp.eq.s32.totalorder %s154, 0
      %s157 = sadd.s32 %s156, 1
      %s158 = scalar_select %p155, %s156, %s157
      %p161 = pneg %p155
      %p162 = scmp.eq.s32.totalorder %s31, 1
      %p163 = por %p161, %p162
      %p164 = scmp.ne.s32.totalorder %s156, %s159
      %p165 = scmp.eq.s32.totalorder %s31, 0
      %p166 = por %p164, %p165
      %p167 = scmp.ne.s32.totalorder %s156, %s159
      %p168 = scmp.eq.s32.totalorder %s36, 1
      %p169 = por %p167, %p168
      %p170 = scmp.ne.s32.totalorder %s159, %s160
      %p171 = scmp.eq.s32.totalorder %s36, 0
      %p172 = por %p170, %p171
      %p173 = scmp.ne.s32.totalorder %s159, %s160
      %p174 = scmp.eq.s32.totalorder %s37, 1
      %p175 = por %p173, %p174
      %p177 = scmp.ne.s32.totalorder %s160, %s176
      %p178 = scmp.eq.s32.totalorder %s37, 0
      %p179 = por %p177, %p178
      %s180 = ssub.s32 %s31, %s38
      %p181 = scmp.eq.s32.totalorder %s180, 0
      %s183 = sadd.s32 %s182, 1
      %s184 = scalar_select %p181, %s182, %s183
      %p187 = pneg %p181
      %p188 = scmp.eq.s32.totalorder %s31, 1
      %p189 = por %p187, %p188
      %p190 = scmp.ne.s32.totalorder %s182, %s185
      %p191 = scmp.eq.s32.totalorder %s31, 0
      %p192 = por %p190, %p191
      %p193 = scmp.ne.s32.totalorder %s182, %s185
      %p194 = scmp.eq.s32.totalorder %s36, 1
      %p195 = por %p193, %p194
      %p196 = scmp.ne.s32.totalorder %s185, %s186
      %p197 = scmp.eq.s32.totalorder %s36, 0
      %p198 = por %p196, %p197
      %p199 = scmp.ne.s32.totalorder %s185, %s186
      %p200 = scmp.eq.s32.totalorder %s37, 1
      %p201 = por %p199, %p200
      %p203 = scmp.ne.s32.totalorder %s186, %s202
      %p204 = scmp.eq.s32.totalorder %s37, 0
      %p205 = por %p203, %p204
      %s206 = ssub.s32 %s31, %s38
      %p207 = scmp.eq.s32.totalorder %s206, 0
      %s209 = sadd.s32 %s208, 1
      %s210 = scalar_select %p207, %s208, %s209
      %p213 = pneg %p207
      %p214 = scmp.eq.s32.totalorder %s31, 1
      %p215 = por %p213, %p214
      %p216 = scmp.ne.s32.totalorder %s208, %s211
      %p217 = scmp.eq.s32.totalorder %s31, 0
      %p218 = por %p216, %p217
      %p219 = scmp.ne.s32.totalorder %s208, %s211
      %p220 = scmp.eq.s32.totalorder %s36, 1
      %p221 = por %p219, %p220
      %p222 = scmp.ne.s32.totalorder %s211, %s212
      %p223 = scmp.eq.s32.totalorder %s36, 0
      %p224 = por %p222, %p223
      %p225 = scmp.ne.s32.totalorder %s211, %s212
      %p226 = scmp.eq.s32.totalorder %s37, 1
      %p227 = por %p225, %p226
      %p229 = scmp.ne.s32.totalorder %s212, %s228
      %p230 = scmp.eq.s32.totalorder %s37, 0
      %p231 = por %p229, %p230
      %s232 = ssub.s32 %s31, %s38
      %p233 = scmp.eq.s32.totalorder %s232, 0
      %s235 = sadd.s32 %s234, 1
      %s236 = scalar_select %p233, %s234, %s235
      %p239 = pneg %p233
      %p240 = scmp.eq.s32.totalorder %s31, 1
      %p241 = por %p239, %p240
      %p242 = scmp.ne.s32.totalorder %s234, %s237
      %p243 = scmp.eq.s32.totalorder %s31, 0
      %p244 = por %p242, %p243
      %p245 = scmp.ne.s32.totalorder %s234, %s237
      %p246 = scmp.eq.s32.totalorder %s36, 1
      %p247 = por %p245, %p246
      %p248 = scmp.ne.s32.totalorder %s237, %s238
      %p249 = scmp.eq.s32.totalorder %s36, 0
      %p250 = por %p248, %p249
      %p251 = scmp.ne.s32.totalorder %s237, %s238
      %p252 = scmp.eq.s32.totalorder %s37, 1
      %p253 = por %p251, %p252
      %p255 = scmp.ne.s32.totalorder %s238, %s254
      %p256 = scmp.eq.s32.totalorder %s37, 0
      %p257 = por %p255, %p256
      %s258 = ssub.s32 %s31, %s38
      %p259 = scmp.eq.s32.totalorder %s258, 0
      %s261 = sadd.s32 %s260, 1
      %s262 = scalar_select %p259, %s260, %s261
      %p265 = pneg %p259
      %p266 = scmp.eq.s32.totalorder %s31, 1
      %p267 = por %p265, %p266
      %p268 = scmp.ne.s32.totalorder %s260, %s263
      %p269 = scmp.eq.s32.totalorder %s31, 0
      %p270 = por %p268, %p269
      %p271 = scmp.ne.s32.totalorder %s260, %s263
      %p272 = scmp.eq.s32.totalorder %s36, 1
      %p273 = por %p271, %p272
      %p274 = scmp.ne.s32.totalorder %s263, %s264
      %p275 = scmp.eq.s32.totalorder %s36, 0
      %p276 = por %p274, %p275
      %p277 = scmp.ne.s32.totalorder %s263, %s264
      %p278 = scmp.eq.s32.totalorder %s37, 1
      %p279 = por %p277, %p278
      %p281 = scmp.ne.s32.totalorder %s264, %s280
      %p282 = scmp.eq.s32.totalorder %s37, 0
      %p283 = por %p281, %p282
      %s285 = sadd.s32 %s284, 1
      %p288 = scmp.eq.s32.totalorder %s31, 1
      %p289 = scmp.ne.s32.totalorder %s284, %s286
      %p290 = scmp.eq.s32.totalorder %s31, 0
      %p291 = por %p289, %p290
      %p292 = scmp.ne.s32.totalorder %s284, %s286
      %p293 = scmp.eq.s32.totalorder %s36, 1
      %p294 = por %p292, %p293
      %p295 = scmp.ne.s32.totalorder %s286, %s287
      %p296 = scmp.eq.s32.totalorder %s36, 0
      %p297 = por %p295, %p296
      %p298 = scmp.ne.s32.totalorder %s286, %s287
      %p299 = scmp.eq.s32.totalorder %s37, 1
      %p300 = por %p298, %p299
      %p302 = scmp.ne.s32.totalorder %s287, %s301
      %p303 = scmp.eq.s32.totalorder %s37, 0
      %p304 = por %p302, %p303
      %p305 = scmp.le.s32.totalorder 1, %s31
      %p306 = scmp.lt.s32.totalorder %s31, 3
      %p307 = pnand %p305, %p306
      %p308 = pneg %p307
      // Predicated region
      $region9: #{tpu_custom_call.1} parent=5 // pred_check
        _
      $region10: #{tpu_custom_call.1} parent=5 // pred_check_branch
        %310 = sbr.rel (%p307) target = $region12
      $region11: #{tpu_custom_call.1} parent=5 // pred_region
        %s311 = ssub.s32 %s31, 1
        // Predicated region
        $region13: #{tpu_custom_call.1} parent=11 // pred_check
          %p312 = pneg %p52
        $region14: #{tpu_custom_call.1} parent=11 // pred_check_branch
          %314 = sbr.rel (%p312) target = $region16
        $region15: #{tpu_custom_call.1} parent=11 // pred_region
          %316 = vsyncadd [#allocation3], 0
          %s317 = sshll.u32 %s0, 4
          %s318 = int_to_ptr.hbm [resolvable:$true] %s317
          %s319 = sshll.u32 [#allocation2], 4
          %s320 = int_to_ptr.vmem [resolvable:$true] %s319
          %325 = dma.hbm_to_vmem [thread:$0]  %s318, 256, %s320, [#allocation3], 128, 128, 8
        $region16: #{tpu_custom_call.1} parent=11 // pred_fallthru
          _
        // Predicated region
        $region17: #{tpu_custom_call.1} parent=11 // pred_check
          %p326 = pneg %p73
        $region18: #{tpu_custom_call.1} parent=11 // pred_check_branch
          %328 = sbr.rel (%p326) target = $region20
        $region19: #{tpu_custom_call.1} parent=11 // pred_region
          %330 = vsyncadd [#allocation6], 0
          %s332 = sshll.u32 %s1, 4
          %s333 = int_to_ptr.hbm [resolvable:$true] %s332
          %s334 = sshll.u32 [#allocation5], 4
          %s335 = int_to_ptr.vmem [resolvable:$true] %s334
          %337 = dma.hbm_to_vmem [thread:$0]  %s333, 128, %s335, [#allocation6]
        $region20: #{tpu_custom_call.1} parent=11 // pred_fallthru
          _
        // Predicated region
        $region21: #{tpu_custom_call.1} parent=11 // pred_check
          %p338 = pneg %p94
        $region22: #{tpu_custom_call.1} parent=11 // pred_check_branch
          %340 = sbr.rel (%p338) target = $region24
        $region23: #{tpu_custom_call.1} parent=11 // pred_region
          %342 = vsyncadd [#allocation6], 0
          %s344 = sshll.u32 %s2, 4
          %s345 = int_to_ptr.hbm [resolvable:$true] %s344
          %s346 = sshll.u32 [#allocation7], 4
          %s347 = int_to_ptr.vmem [resolvable:$true] %s346
          %349 = dma.hbm_to_vmem [thread:$0]  %s345, 32, %s347, [#allocation6]
        $region24: #{tpu_custom_call.1} parent=11 // pred_fallthru
          _
      $region12: #{tpu_custom_call.1} parent=5 // pred_fallthru
        _
      %p350 = scmp.lt.s32.totalorder %s31, 2
      // Predicated region
      $region25: #{tpu_custom_call.1} parent=5 // pred_check
        %p351 = pneg %p350
      $region26: #{tpu_custom_call.1} parent=5 // pred_check_branch
        %353 = sbr.rel (%p351) target = $region28
      $region27: #{tpu_custom_call.1} parent=5 // pred_region
        // Predicated region
        $region29: #{tpu_custom_call.1} parent=27 // pred_check
          %p354 = pneg %p114
        $region30: #{tpu_custom_call.1} parent=27 // pred_check_branch
          %356 = sbr.rel (%p354) target = $region32
        $region31: #{tpu_custom_call.1} parent=27 // pred_region
          %s357 = sand.u32 %s31, 1
          %s358 = scalar_lea.sflag [#allocation9], %s357
          %s359 = sand.u32 %s104, 1
          %s360 = smul.addr %s359, 192
          %s361 = scalar_lea.vmem [#allocation8], %s360
          %363 = vsyncadd %s358, 0
          %s364 = smul.addr %s31, 48
          %s365 = smul.addr %s364, 4
          %s366 = scalar_lea.hbm %s3, %s365
          %s367 = sshll.u32 %s366, 4
          %s368 = int_to_ptr.hbm [resolvable:$true] %s367
          %s369 = sshll.u32 %s361, 4
          %s370 = int_to_ptr.vmem [resolvable:$true] %s369
          %375 = dma.hbm_to_vmem [thread:$0]  %s368, 3072, %s370, %s358, 192, 192, 12
        $region32: #{tpu_custom_call.1} parent=27 // pred_fallthru
          _
        // Predicated region
        $region33: #{tpu_custom_call.1} parent=27 // pred_check
          %p376 = pneg %p140
        $region34: #{tpu_custom_call.1} parent=27 // pred_check_branch
          %378 = sbr.rel (%p376) target = $region36
        $region35: #{tpu_custom_call.1} parent=27 // pred_region
          %s379 = sand.u32 %s31, 1
          %s380 = scalar_lea.sflag [#allocation9], %s379
          %s381 = sand.u32 %s130, 1
          %s382 = smul.addr %s381, 3
          %s383 = scalar_lea.vmem [#allocation10], %s382
          %385 = vsyncadd %s380, 0
          %s386 = smul.addr %s31, 3
          %s387 = scalar_lea.hbm %s4, %s386
          %s389 = sshll.u32 %s387, 4
          %s390 = int_to_ptr.hbm [resolvable:$true] %s389
          %s391 = sshll.u32 %s383, 4
          %s392 = int_to_ptr.vmem [resolvable:$true] %s391
          %394 = dma.hbm_to_vmem [thread:$0]  %s390, 48, %s392, %s380
        $region36: #{tpu_custom_call.1} parent=27 // pred_fallthru
          _
        // Predicated region
        $region37: #{tpu_custom_call.1} parent=27 // pred_check
          %p395 = pneg %p166
        $region38: #{tpu_custom_call.1} parent=27 // pred_check_branch
          %397 = sbr.rel (%p395) target = $region40
        $region39: #{tpu_custom_call.1} parent=27 // pred_region
          %s398 = sand.u32 %s31, 1
          %s399 = scalar_lea.sflag [#allocation12], %s398
          %s400 = sand.u32 %s156, 1
          %s401 = smul.addr %s400, 64
          %s402 = scalar_lea.vmem [#allocation11], %s401
          %404 = vsyncadd %s399, 0
          %s405 = smul.addr %s31, 16
          %s406 = smul.addr %s405, 4
          %s407 = scalar_lea.hbm %s5, %s406
          %s408 = sshll.u32 %s407, 4
          %s409 = int_to_ptr.hbm [resolvable:$true] %s408
          %s410 = sshll.u32 %s402, 4
          %s411 = int_to_ptr.vmem [resolvable:$true] %s410
          %416 = dma.hbm_to_vmem [thread:$0]  %s409, 1024, %s411, %s399, 64, 64, 4
        $region40: #{tpu_custom_call.1} parent=27 // pred_fallthru
          _
        // Predicated region
        $region41: #{tpu_custom_call.1} parent=27 // pred_check
          %p417 = pneg %p192
        $region42: #{tpu_custom_call.1} parent=27 // pred_check_branch
          %419 = sbr.rel (%p417) target = $region44
        $region43: #{tpu_custom_call.1} parent=27 // pred_region
          %s420 = sand.u32 %s31, 1
          %s421 = scalar_lea.sflag [#allocation12], %s420
          %s422 = sand.u32 %s182, 1
          %s423 = smul.addr %s422, 256
          %s424 = scalar_lea.vmem [#allocation13], %s423
          %426 = vsyncadd %s421, 0
          %s427 = smul.addr %s31, 64
          %s428 = smul.addr %s427, 4
          %s429 = scalar_lea.hbm %s6, %s428
          %s430 = sshll.u32 %s429, 4
          %s431 = int_to_ptr.hbm [resolvable:$true] %s430
          %s432 = sshll.u32 %s424, 4
          %s433 = int_to_ptr.vmem [resolvable:$true] %s432
          %438 = dma.hbm_to_vmem [thread:$0]  %s431, 4096, %s433, %s421, 256, 256, 16
        $region44: #{tpu_custom_call.1} parent=27 // pred_fallthru
          _
        // Predicated region
        $region45: #{tpu_custom_call.1} parent=27 // pred_check
          %p439 = pneg %p218
        $region46: #{tpu_custom_call.1} parent=27 // pred_check_branch
          %441 = sbr.rel (%p439) target = $region48
        $region47: #{tpu_custom_call.1} parent=27 // pred_region
          %s442 = sand.u32 %s31, 1
          %s443 = scalar_lea.sflag [#allocation15], %s442
          %s444 = sand.u32 %s208, 1
          %s445 = smul.addr %s444, 4
          %s446 = scalar_lea.vmem [#allocation14], %s445
          %448 = vsyncadd %s443, 0
          %s449 = smul.addr %s31, 4
          %s450 = scalar_lea.hbm %s7, %s449
          %s452 = sshll.u32 %s450, 4
          %s453 = int_to_ptr.hbm [resolvable:$true] %s452
          %s454 = sshll.u32 %s446, 4
          %s455 = int_to_ptr.vmem [resolvable:$true] %s454
          %457 = dma.hbm_to_vmem [thread:$0]  %s453, 64, %s455, %s443
        $region48: #{tpu_custom_call.1} parent=27 // pred_fallthru
          _
        // Predicated region
        $region49: #{tpu_custom_call.1} parent=27 // pred_check
          %p458 = pneg %p244
        $region50: #{tpu_custom_call.1} parent=27 // pred_check_branch
          %460 = sbr.rel (%p458) target = $region52
        $region51: #{tpu_custom_call.1} parent=27 // pred_region
          %s461 = sand.u32 %s31, 1
          %s462 = scalar_lea.sflag [#allocation15], %s461
          %s463 = sand.u32 %s234, 1
          %s464 = smul.addr %s463, 256
          %s465 = scalar_lea.vmem [#allocation16], %s464
          %467 = vsyncadd %s462, 0
          %s468 = smul.addr %s31, 64
          %s469 = smul.addr %s468, 4
          %s470 = scalar_lea.hbm %s8, %s469
          %s471 = sshll.u32 %s470, 4
          %s472 = int_to_ptr.hbm [resolvable:$true] %s471
          %s473 = sshll.u32 %s465, 4
          %s474 = int_to_ptr.vmem [resolvable:$true] %s473
          %479 = dma.hbm_to_vmem [thread:$0]  %s472, 4096, %s474, %s462, 64, 64, 4
        $region52: #{tpu_custom_call.1} parent=27 // pred_fallthru
          _
        // Predicated region
        $region53: #{tpu_custom_call.1} parent=27 // pred_check
          %p480 = pneg %p270
        $region54: #{tpu_custom_call.1} parent=27 // pred_check_branch
          %482 = sbr.rel (%p480) target = $region56
        $region55: #{tpu_custom_call.1} parent=27 // pred_region
          %s483 = sand.u32 %s260, 1
          %s484 = scalar_lea.sflag [#allocation18], %s483
          %s485 = sand.u32 %s260, 1
          %s486 = smul.addr %s485, 8
          %s487 = scalar_lea.vmem [#allocation17], %s486
          %489 = vsyncadd %s484, 0
          %s490 = smul.addr %s31, 8
          %s491 = scalar_lea.hbm %s9, %s490
          %s493 = sshll.u32 %s491, 4
          %s494 = int_to_ptr.hbm [resolvable:$true] %s493
          %s495 = sshll.u32 %s487, 4
          %s496 = int_to_ptr.vmem [resolvable:$true] %s495
          %498 = dma.hbm_to_vmem [thread:$0]  %s494, 128, %s496, %s484
        $region56: #{tpu_custom_call.1} parent=27 // pred_fallthru
          _
      $region28: #{tpu_custom_call.1} parent=5 // pred_fallthru
        _
      %p499 = scmp.le.s32.totalorder 1, %s31
      %p500 = scmp.lt.s32.totalorder %s31, 3
      %p501 = pnand %p499, %p500
      %p502 = pneg %p501
      // Predicated region
      $region57: #{tpu_custom_call.1} parent=5 // pred_check
        _
      $region58: #{tpu_custom_call.1} parent=5 // pred_check_branch
        %504 = sbr.rel (%p501) target = $region60
      $region59: #{tpu_custom_call.1} parent=5 // pred_region
        %s505 = ssub.s32 %s31, 1
        // Predicated region
        $region61: #{tpu_custom_call.1} parent=59 // pred_check
          %p506 = pneg %p52
        $region62: #{tpu_custom_call.1} parent=59 // pred_check_branch
          %508 = sbr.rel (%p506) target = $region64
        $region63: #{tpu_custom_call.1} parent=59 // pred_region
          %510 = dma.done [#allocation3], 256
        $region64: #{tpu_custom_call.1} parent=59 // pred_fallthru
          _
        // Predicated region
        $region65: #{tpu_custom_call.1} parent=59 // pred_check
          %p511 = pneg %p73
        $region66: #{tpu_custom_call.1} parent=59 // pred_check_branch
          %513 = sbr.rel (%p511) target = $region68
        $region67: #{tpu_custom_call.1} parent=59 // pred_region
          %515 = dma.done [#allocation6], 128
        $region68: #{tpu_custom_call.1} parent=59 // pred_fallthru
          _
        // Predicated region
        $region69: #{tpu_custom_call.1} parent=59 // pred_check
          %p516 = pneg %p94
        $region70: #{tpu_custom_call.1} parent=59 // pred_check_branch
          %518 = sbr.rel (%p516) target = $region72
        $region71: #{tpu_custom_call.1} parent=59 // pred_region
          %520 = dma.done [#allocation6], 32
        $region72: #{tpu_custom_call.1} parent=59 // pred_fallthru
          _
        %s521 = sand.u32 %s36, 1
        %s522 = scalar_lea.sflag [#allocation9], %s521
        %s523 = sand.u32 %s107, 1
        %s524 = smul.addr %s523, 192
        %s525 = scalar_lea.vmem [#allocation8], %s524
        // Predicated region
        $region73: #{tpu_custom_call.1} parent=59 // pred_check
          %p526 = pneg %p120
        $region74: #{tpu_custom_call.1} parent=59 // pred_check_branch
          %528 = sbr.rel (%p526) target = $region76
        $region75: #{tpu_custom_call.1} parent=59 // pred_region
          %530 = dma.done %s522, 3072
        $region76: #{tpu_custom_call.1} parent=59 // pred_fallthru
          _
        %s531 = sand.u32 %s36, 1
        %s532 = scalar_lea.sflag [#allocation9], %s531
        %s533 = sand.u32 %s133, 1
        %s534 = smul.addr %s533, 3
        %s535 = scalar_lea.vmem [#allocation10], %s534
        // Predicated region
        $region77: #{tpu_custom_call.1} parent=59 // pred_check
          %p536 = pneg %p146
        $region78: #{tpu_custom_call.1} parent=59 // pred_check_branch
          %538 = sbr.rel (%p536) target = $region80
        $region79: #{tpu_custom_call.1} parent=59 // pred_region
          %540 = dma.done %s532, 48
        $region80: #{tpu_custom_call.1} parent=59 // pred_fallthru
          _
        %s541 = sand.u32 %s36, 1
        %s542 = scalar_lea.sflag [#allocation12], %s541
        %s543 = sand.u32 %s159, 1
        %s544 = smul.addr %s543, 64
        %s545 = scalar_lea.vmem [#allocation11], %s544
        // Predicated region
        $region81: #{tpu_custom_call.1} parent=59 // pred_check
          %p546 = pneg %p172
        $region82: #{tpu_custom_call.1} parent=59 // pred_check_branch
          %548 = sbr.rel (%p546) target = $region84
        $region83: #{tpu_custom_call.1} parent=59 // pred_region
          %550 = dma.done %s542, 1024
        $region84: #{tpu_custom_call.1} parent=59 // pred_fallthru
          _
        %s551 = sand.u32 %s36, 1
        %s552 = scalar_lea.sflag [#allocation12], %s551
        %s553 = sand.u32 %s185, 1
        %s554 = smul.addr %s553, 256
        %s555 = scalar_lea.vmem [#allocation13], %s554
        // Predicated region
        $region85: #{tpu_custom_call.1} parent=59 // pred_check
          %p556 = pneg %p198
        $region86: #{tpu_custom_call.1} parent=59 // pred_check_branch
          %558 = sbr.rel (%p556) target = $region88
        $region87: #{tpu_custom_call.1} parent=59 // pred_region
          %560 = dma.done %s552, 4096
        $region88: #{tpu_custom_call.1} parent=59 // pred_fallthru
          _
        %s561 = sand.u32 %s36, 1
        %s562 = scalar_lea.sflag [#allocation15], %s561
        %s563 = sand.u32 %s211, 1
        %s564 = smul.addr %s563, 4
        %s565 = scalar_lea.vmem [#allocation14], %s564
        // Predicated region
        $region89: #{tpu_custom_call.1} parent=59 // pred_check
          %p566 = pneg %p224
        $region90: #{tpu_custom_call.1} parent=59 // pred_check_branch
          %568 = sbr.rel (%p566) target = $region92
        $region91: #{tpu_custom_call.1} parent=59 // pred_region
          %570 = dma.done %s562, 64
        $region92: #{tpu_custom_call.1} parent=59 // pred_fallthru
          _
        %s571 = sand.u32 %s36, 1
        %s572 = scalar_lea.sflag [#allocation15], %s571
        %s573 = sand.u32 %s237, 1
        %s574 = smul.addr %s573, 256
        %s575 = scalar_lea.vmem [#allocation16], %s574
        // Predicated region
        $region93: #{tpu_custom_call.1} parent=59 // pred_check
          %p576 = pneg %p250
        $region94: #{tpu_custom_call.1} parent=59 // pred_check_branch
          %578 = sbr.rel (%p576) target = $region96
        $region95: #{tpu_custom_call.1} parent=59 // pred_region
          %580 = dma.done %s572, 4096
        $region96: #{tpu_custom_call.1} parent=59 // pred_fallthru
          _
        %s581 = sand.u32 %s263, 1
        %s582 = scalar_lea.sflag [#allocation18], %s581
        %s583 = sand.u32 %s263, 1
        %s584 = smul.addr %s583, 8
        %s585 = scalar_lea.vmem [#allocation17], %s584
        // Predicated region
        $region97: #{tpu_custom_call.1} parent=59 // pred_check
          %p586 = pneg %p276
        $region98: #{tpu_custom_call.1} parent=59 // pred_check_branch
          %588 = sbr.rel (%p586) target = $region100
        $region99: #{tpu_custom_call.1} parent=59 // pred_region
          %590 = dma.done %s582, 128
        $region100: #{tpu_custom_call.1} parent=59 // pred_fallthru
          _
        %p591 = pneg %p52
        %p592 = pneg %p49
        %p593 = pneg %p73
        %p594 = pneg %p70
        %p595 = pneg %p94
        %p596 = pneg %p91
        %s597 = sand.u32 %s36, 1
        %s598 = scalar_lea.sflag [#allocation9], %s597
        %s599 = sand.u32 %s107, 1
        %s600 = smul.addr %s599, 192
        %s601 = scalar_lea.vmem [#allocation8], %s600
        %p602 = pneg %p120
        %p603 = pneg %p117
        %s604 = sand.u32 %s36, 1
        %s605 = scalar_lea.sflag [#allocation9], %s604
        %s606 = sand.u32 %s133, 1
        %s607 = smul.addr %s606, 3
        %s608 = scalar_lea.vmem [#allocation10], %s607
        %p609 = pneg %p146
        %p610 = pneg %p143
        %s611 = sand.u32 %s36, 1
        %s612 = scalar_lea.sflag [#allocation12], %s611
        %s613 = sand.u32 %s159, 1
        %s614 = smul.addr %s613, 64
        %s615 = scalar_lea.vmem [#allocation11], %s614
        %p616 = pneg %p172
        %p617 = pneg %p169
        %s618 = sand.u32 %s36, 1
        %s619 = scalar_lea.sflag [#allocation12], %s618
        %s620 = sand.u32 %s185, 1
        %s621 = smul.addr %s620, 256
        %s622 = scalar_lea.vmem [#allocation13], %s621
        %p623 = pneg %p198
        %p624 = pneg %p195
        %s625 = sand.u32 %s36, 1
        %s626 = scalar_lea.sflag [#allocation15], %s625
        %s627 = sand.u32 %s211, 1
        %s628 = smul.addr %s627, 4
        %s629 = scalar_lea.vmem [#allocation14], %s628
        %p630 = pneg %p224
        %p631 = pneg %p221
        %s632 = sand.u32 %s36, 1
        %s633 = scalar_lea.sflag [#allocation15], %s632
        %s634 = sand.u32 %s237, 1
        %s635 = smul.addr %s634, 256
        %s636 = scalar_lea.vmem [#allocation16], %s635
        %p637 = pneg %p250
        %p638 = pneg %p247
        %s639 = sand.u32 %s263, 1
        %s640 = scalar_lea.sflag [#allocation18], %s639
        %s641 = sand.u32 %s263, 1
        %s642 = smul.addr %s641, 8
        %s643 = scalar_lea.vmem [#allocation17], %s642
        %p644 = pneg %p276
        %p645 = pneg %p273
        %p646 = pneg %p297
        %p647 = pneg %p294
        %p649 = scmp.eq.s32.totalorder %s36, 0
        // Predicated region
        $region101: #{tpu_custom_call.1} parent=59 // pred_check
          %p650 = pneg %p649
        $region102: #{tpu_custom_call.1} parent=59 // pred_check_branch
          %652 = sbr.rel (%p650) target = $region104
        $region103: #{tpu_custom_call.1} parent=59 // pred_region
          %v653 = vld [vmem:[#allocation2] sm:$0xff]
          %v654 = vld [vmem:[#allocation2 + $0x8] sm:$0xff]
          %655 = vst [vmem:[#allocation19] sm:$0xff] %v653
          %656 = vst [vmem:[#allocation19 + $0x8] sm:$0xff] %v654
        $region104: #{tpu_custom_call.1} parent=59 // pred_fallthru
          _
        %v657 = vld [vmem:[#allocation19] sm:$0xff]
        %v658 = vld [vmem:[#allocation19 + $0x8] sm:$0xff]
        %v659 = vld [vmem:[%s585] sm:$0xff]
        %660 = vadd.xlane.f32.xlu0 %v657
        %v661 = vpop.xlane.xlu0 %660
        %662 = vadd.xlane.f32.xlu0 %v658
        %v663 = vpop.xlane.xlu0 %662
        %v664 = vrcp.pop 128.0
        %v665 = vmul.f32 128.0, %v664
        %v666 = vsub.f32 1.0, %v665
        %v667 = vmul.f32 %v664, %v666
        %v668 = vadd.f32 %v664, %v667
        %vm669 = vweird.f32 %v664
        %v670 = vsel %vm669, %v664, %v668
        %v671 = vmul.f32 %v661, %v670
        %v672 = vmul.f32 %v663, %v670
        %v673 = vsub.f32 %v657, %v671
        %v674 = vsub.f32 %v658, %v672
        %v675 = vmul.f32 %v673, %v673
        %v676 = vmul.f32 %v674, %v674
        %677 = vadd.xlane.f32.xlu0 %v675
        %v678 = vpop.xlane.xlu0 %677
        %679 = vadd.xlane.f32.xlu0 %v676
        %v680 = vpop.xlane.xlu0 %679
        %v681 = vmul.f32 %v678, %v670
        %v682 = vmul.f32 %v680, %v670
        %v683 = vadd.f32 %v681, 1e-05
        %v684 = vadd.f32 %v682, 1e-05
        %v685 = vrsqrt.pop %v683
        %v686 = vmul.f32 %v685, %v683
        %v687 = vmul.f32 %v686, %v685
        %v688 = vmul.f32 0.5, %v687
        %v689 = vsub.f32 1.5, %v688
        %v690 = vmul.f32 %v685, %v689
        %vm691 = vweird.f32 %v683
        %vm692 = vweird.f32 %v685
        %vm693 = vmor %vm691, %vm692
        %v694 = vsel %vm693, %v685, %v690
        %v695 = vrsqrt.pop %v684
        %v696 = vmul.f32 %v695, %v684
        %v697 = vmul.f32 %v696, %v695
        %v698 = vmul.f32 0.5, %v697
        %v699 = vsub.f32 1.5, %v698
        %v700 = vmul.f32 %v695, %v699
        %vm701 = vweird.f32 %v684
        %vm702 = vweird.f32 %v695
        %vm703 = vmor %vm701, %vm702
        %v704 = vsel %vm703, %v695, %v700
        %v705 = vmul.f32 %v673, %v694
        %v706 = vmul.f32 %v674, %v704
        %v707 = vperm.slane %v659, 0
        %v708 = vmul.f32 %v705, %v707
        %v709 = vmul.f32 %v706, %v707
        %v710 = vperm.slane %v659, 1
        %v711 = vadd.f32 %v708, %v710
        %v712 = vadd.f32 %v709, %v710
        %v713 = vpack.c.bf16 %v712, %v711
        %v714 = vld [vmem:[%s525] sm:$0xff]
        %v715 = vld [vmem:[%s525 + $0x8] sm:$0xf]
        %v716 = vld [vmem:[%s525 + $0xc] sm:$0xff]
        %v717 = vld [vmem:[%s525 + $0x14] sm:$0xf]
        %v718 = vld [vmem:[%s525 + $0x18] sm:$0xff]
        %v719 = vld [vmem:[%s525 + $0x20] sm:$0xf]
        %v720 = vld [vmem:[%s525 + $0x24] sm:$0xff]
        %v721 = vld [vmem:[%s525 + $0x2c] sm:$0xf]
        %v722 = vld [vmem:[%s525 + $0x30] sm:$0xff]
        %v723 = vld [vmem:[%s525 + $0x38] sm:$0xf]
        %v724 = vld [vmem:[%s525 + $0x3c] sm:$0xff]
        %v725 = vld [vmem:[%s525 + $0x44] sm:$0xf]
        %v726 = vld [vmem:[%s525 + $0x48] sm:$0xff]
        %v727 = vld [vmem:[%s525 + $0x50] sm:$0xf]
        %v728 = vld [vmem:[%s525 + $0x54] sm:$0xff]
        %v729 = vld [vmem:[%s525 + $0x5c] sm:$0xf]
        %v730 = vld [vmem:[%s525 + $0x60] sm:$0xff]
        %v731 = vld [vmem:[%s525 + $0x68] sm:$0xf]
        %v732 = vld [vmem:[%s525 + $0x6c] sm:$0xff]
        %v733 = vld [vmem:[%s525 + $0x74] sm:$0xf]
        %v734 = vld [vmem:[%s525 + $0x78] sm:$0xff]
        %v735 = vld [vmem:[%s525 + $0x80] sm:$0xf]
        %v736 = vld [vmem:[%s525 + $0x84] sm:$0xff]
        %v737 = vld [vmem:[%s525 + $0x8c] sm:$0xf]
        %v738 = vld [vmem:[%s525 + $0x90] sm:$0xff]
        %v739 = vld [vmem:[%s525 + $0x98] sm:$0xf]
        %v740 = vld [vmem:[%s525 + $0x9c] sm:$0xff]
        %v741 = vld [vmem:[%s525 + $0xa4] sm:$0xf]
        %v742 = vld [vmem:[%s525 + $0xa8] sm:$0xff]
        %v743 = vld [vmem:[%s525 + $0xb0] sm:$0xf]
        %v744 = vld [vmem:[%s525 + $0xb4] sm:$0xff]
        %v745 = vld [vmem:[%s525 + $0xbc] sm:$0xf]
        %v746 = vld [vmem:[%s535] sm:$0x7]
        %v748 = vperm.slane %v746, 0
        %v749 = vperm.slane %v746, 1
        %v750 = vperm.slane %v746, 2
        %v786 = vunpack.c.l.b16 %v714
        %v787 = vunpack.c.h.b16 %v714
        %v788 = vunpack.c.l.b16 %v715
        %v789 = vunpack.c.l.b16 %v716
        %v790 = vunpack.c.h.b16 %v716
        %v791 = vunpack.c.l.b16 %v717
        %v792 = vunpack.c.l.b16 %v718
        %v793 = vunpack.c.h.b16 %v718
        %v794 = vunpack.c.l.b16 %v719
        %v795 = vunpack.c.l.b16 %v720
        %v796 = vunpack.c.h.b16 %v720
        %v797 = vunpack.c.l.b16 %v721
        %v798 = vunpack.c.l.b16 %v722
        %v799 = vunpack.c.h.b16 %v722
        %v800 = vunpack.c.l.b16 %v723
        %v801 = vunpack.c.l.b16 %v724
        %v802 = vunpack.c.h.b16 %v724
        %v803 = vunpack.c.l.b16 %v725
        %v804 = vunpack.c.l.b16 %v726
        %v805 = vunpack.c.h.b16 %v726
        %v806 = vunpack.c.l.b16 %v727
        %v807 = vunpack.c.l.b16 %v728
        %v808 = vunpack.c.h.b16 %v728
        %v809 = vunpack.c.l.b16 %v729
        %v810 = vunpack.c.l.b16 %v730
        %v811 = vunpack.c.h.b16 %v730
        %v812 = vunpack.c.l.b16 %v731
        %v813 = vunpack.c.l.b16 %v732
        %v814 = vunpack.c.h.b16 %v732
        %v815 = vunpack.c.l.b16 %v733
        %v816 = vunpack.c.l.b16 %v734
        %v817 = vunpack.c.h.b16 %v734
        %v818 = vunpack.c.l.b16 %v735
        %v819 = vunpack.c.l.b16 %v736
        %v820 = vunpack.c.h.b16 %v736
        %v821 = vunpack.c.l.b16 %v737
        %v822 = vunpack.c.l.b16 %v738
        %v823 = vunpack.c.h.b16 %v738
        %v824 = vunpack.c.l.b16 %v739
        %v825 = vunpack.c.l.b16 %v740
        %v826 = vunpack.c.h.b16 %v740
        %v827 = vunpack.c.l.b16 %v741
        %v828 = vunpack.c.l.b16 %v742
        %v829 = vunpack.c.h.b16 %v742
        %v830 = vunpack.c.l.b16 %v743
        %v831 = vunpack.c.l.b16 %v744
        %v832 = vunpack.c.h.b16 %v744
        %v833 = vunpack.c.l.b16 %v745
        %v834 = vpack.c.b16 %v789, %v786
        %v835 = vpack.c.b16 %v790, %v787
        %v836 = vpack.c.b16 %v791, %v788
        %v837 = vpack.c.b16 %v795, %v792
        %v838 = vpack.c.b16 %v796, %v793
        %v839 = vpack.c.b16 %v797, %v794
        %v840 = vpack.c.b16 %v801, %v798
        %v841 = vpack.c.b16 %v802, %v799
        %v842 = vpack.c.b16 %v803, %v800
        %v843 = vpack.c.b16 %v807, %v804
        %v844 = vpack.c.b16 %v808, %v805
        %v845 = vpack.c.b16 %v809, %v806
        %v846 = vpack.c.b16 %v813, %v810
        %v847 = vpack.c.b16 %v814, %v811
        %v848 = vpack.c.b16 %v815, %v812
        %v849 = vpack.c.b16 %v819, %v816
        %v850 = vpack.c.b16 %v820, %v817
        %v851 = vpack.c.b16 %v821, %v818
        %v852 = vpack.c.b16 %v825, %v822
        %v853 = vpack.c.b16 %v826, %v823
        %v854 = vpack.c.b16 %v827, %v824
        %v855 = vpack.c.b16 %v831, %v828
        %v856 = vpack.c.b16 %v832, %v829
        %v857 = vpack.c.b16 %v833, %v830
        %882 = vmatpush.bf16.msra.mxu0 %v855
        %883 = vmatpush.bf16.msra.mxu0 %v852
        %884 = vmatpush.bf16.msra.mxu0 %v849
        %885 = vmatpush.bf16.msra.mxu0 %v846
        %886 = vmatpush.bf16.msra.mxu0 %v843
        %887 = vmatpush.bf16.msra.mxu0 %v840
        %888 = vmatpush.bf16.msra.mxu0 %v837
        %889 = vmatpush.bf16.msra.mxu0 %v834
        %890 = vmatmul.bf16.gmra.mxu0 %v713
        %v891 = vpop.f32.mrf.mxu0
        %v892 = vadd.f32 %v748, %v891
        %v893 = vpop.f32.mrf.mxu0
        %v894 = vadd.f32 %v748, %v893
        %895 = vdwg.mxu0
        %896 = vmatpush.bf16.msra.mxu0 %v856
        %897 = vmatpush.bf16.msra.mxu0 %v853
        %898 = vmatpush.bf16.msra.mxu0 %v850
        %899 = vmatpush.bf16.msra.mxu0 %v847
        %900 = vmatpush.bf16.msra.mxu0 %v844
        %901 = vmatpush.bf16.msra.mxu0 %v841
        %902 = vmatpush.bf16.msra.mxu0 %v838
        %903 = vmatpush.bf16.msra.mxu0 %v835
        %904 = vmatmul.bf16.gmra.mxu0 %v713
        %v905 = vpop.f32.mrf.mxu0
        %v906 = vadd.f32 %v749, %v905
        %v907 = vpop.f32.mrf.mxu0
        %v908 = vadd.f32 %v749, %v907
        %909 = vdwg.mxu0
        %910 = vmatpush.bf16.msra.mxu0 %v857
        %911 = vmatpush.bf16.msra.mxu0 %v854
        %912 = vmatpush.bf16.msra.mxu0 %v851
        %913 = vmatpush.bf16.msra.mxu0 %v848
        %914 = vmatpush.bf16.msra.mxu0 %v845
        %915 = vmatpush.bf16.msra.mxu0 %v842
        %916 = vmatpush.bf16.msra.mxu0 %v839
        %917 = vmatpush.bf16.msra.mxu0 %v836
        %918 = vmatmul.bf16.gmra.mxu0 %v713
        %v919 = vpop.f32.mrf.mxu0
        %v920 = vadd.f32 %v750, %v919
        %v921 = vpop.f32.mrf.mxu0
        %v922 = vadd.f32 %v750, %v921
        %923 = vdwg.mxu0
        %v924 = vmul.f32 %v892, 0.17677669
        %v925 = vmul.f32 %v894, 0.17677669
        %v926 = vld [vmem:[#allocation5] sm:$0xff]
        %928 = vrot.lane.b32.xlu0 %v924, 96
        %v929 = vpop.permute.xlu0 %928
        %931 = vrot.lane.b32.xlu0 %v924, 64
        %v932 = vpop.permute.xlu0 %931
        %934 = vrot.lane.b32.xlu0 %v924, 32
        %v935 = vpop.permute.xlu0 %934
        %v937 = vrot.slane %v932, 4
        %vm938 = vcmask 1047556
        %v939 = vsel %vm938, %v937, %v924
        %v940 = vrot.slane %v924, 4
        %v941 = vsel %vm938, %v932, %v940
        %v943 = vunpack.c.l.s4 1983009808
        %v944 = vunpack.c.0.s8 %v943
        %v945 = vperm.slane %v939, %v944
        %v947 = vunpack.c.l.s4 1983009808
        %v948 = vunpack.c.0.s8 %v947
        %v949 = vperm.slane %v941, %v948
        %v950 = vrot.slane %v935, 4
        %v951 = vsel %vm938, %v950, %v929
        %v952 = vrot.slane %v929, 4
        %v953 = vsel %vm938, %v935, %v952
        %v955 = vunpack.c.l.s4 1983009808
        %v956 = vunpack.c.0.s8 %v955
        %v957 = vperm.slane %v951, %v956
        %v959 = vunpack.c.l.s4 1983009808
        %v960 = vunpack.c.0.s8 %v959
        %v961 = vperm.slane %v953, %v960
        %v962 = vrot.slane %v957, 4
        %v963 = vsel %vm938, %v962, %v945
        %v964 = vrot.slane %v945, 4
        %v965 = vsel %vm938, %v957, %v964
        %v967 = vunpack.c.l.s4 1934713408
        %v968 = vunpack.c.0.s8 %v967
        %v969 = vperm.slane %v963, %v968
        %v971 = vunpack.c.l.s4 1934713408
        %v972 = vunpack.c.0.s8 %v971
        %v973 = vperm.slane %v965, %v972
        %v974 = vrot.slane %v961, 4
        %v975 = vsel %vm938, %v974, %v949
        %v976 = vrot.slane %v949, 4
        %v977 = vsel %vm938, %v961, %v976
        %v979 = vunpack.c.l.s4 1934713408
        %v980 = vunpack.c.0.s8 %v979
        %v981 = vperm.slane %v975, %v980
        %v983 = vunpack.c.l.s4 1934713408
        %v984 = vunpack.c.0.s8 %v983
        %v985 = vperm.slane %v977, %v984
        %v986 = vrot.slane %v969, 4
        %v987 = vsel %vm938, 0.0, %v986
        %v988 = vrot.slane %v973, 4
        %v989 = vsel %vm938, 0.0, %v988
        %v990 = vrot.slane %v981, 4
        %v991 = vsel %vm938, 0.0, %v990
        %v992 = vrot.slane %v985, 4
        %v993 = vsel %vm938, 0.0, %v992
        %v994 = vsel %vm938, %v988, %v969
        %v996 = vunpack.c.l.s4 1983009808
        %v997 = vunpack.c.0.s8 %v996
        %v998 = vperm.slane %v994, %v997
        %v999 = vrot.slane %v989, 4
        %v1000 = vsel %vm938, %v999, %v987
        %v1002 = vunpack.c.l.s4 1983009808
        %v1003 = vunpack.c.0.s8 %v1002
        %v1004 = vperm.slane %v1000, %v1003
        %v1005 = vsel %vm938, %v992, %v981
        %v1007 = vunpack.c.l.s4 1983009808
        %v1008 = vunpack.c.0.s8 %v1007
        %v1009 = vperm.slane %v1005, %v1008
        %v1010 = vrot.slane %v993, 4
        %v1011 = vsel %vm938, %v1010, %v991
        %v1013 = vunpack.c.l.s4 1983009808
        %v1014 = vunpack.c.0.s8 %v1013
        %v1015 = vperm.slane %v1011, %v1014
        %v1016 = vrot.slane %v1004, 4
        %v1017 = vsel %vm938, %v1016, %v998
        %v1018 = vrot.slane %v998, 4
        %v1019 = vsel %vm938, %v1004, %v1018
        %v1021 = vunpack.c.l.s4 1934713408
        %v1022 = vunpack.c.0.s8 %v1021
        %v1023 = vperm.slane %v1017, %v1022
        %v1025 = vunpack.c.l.s4 1934713408
        %v1026 = vunpack.c.0.s8 %v1025
        %v1027 = vperm.slane %v1019, %v1026
        %v1028 = vrot.slane %v1015, 4
        %v1029 = vsel %vm938, %v1028, %v1009
        %v1030 = vrot.slane %v1009, 4
        %v1031 = vsel %vm938, %v1015, %v1030
        %v1033 = vunpack.c.l.s4 1934713408
        %v1034 = vunpack.c.0.s8 %v1033
        %v1035 = vperm.slane %v1029, %v1034
        %v1037 = vunpack.c.l.s4 1934713408
        %v1038 = vunpack.c.0.s8 %v1037
        %v1039 = vperm.slane %v1031, %v1038
        %v1040 = vrot.slane %v1035, 4
        %v1041 = vsel %vm938, %v1040, %v1023
        %v1042 = vrot.slane %v1023, 4
        %v1043 = vsel %vm938, %v1035, %v1042
        %v1044 = vrot.slane %v1039, 4
        %v1045 = vsel %vm938, %v1044, %v1027
        %v1046 = vrot.slane %v1027, 4
        %v1047 = vsel %vm938, %v1039, %v1046
        %1049 = vrot.lane.b32.xlu0 %v906, 96
        %v1050 = vpop.permute.xlu0 %1049
        %1052 = vrot.lane.b32.xlu0 %v906, 64
        %v1053 = vpop.permute.xlu0 %1052
        %1055 = vrot.lane.b32.xlu0 %v906, 32
        %v1056 = vpop.permute.xlu0 %1055
        %v1058 = vrot.slane %v1053, 4
        %v1059 = vsel %vm938, %v1058, %v906
        %v1060 = vrot.slane %v906, 4
        %v1061 = vsel %vm938, %v1053, %v1060
        %v1063 = vunpack.c.l.s4 1983009808
        %v1064 = vunpack.c.0.s8 %v1063
        %v1065 = vperm.slane %v1059, %v1064
        %v1067 = vunpack.c.l.s4 1983009808
        %v1068 = vunpack.c.0.s8 %v1067
        %v1069 = vperm.slane %v1061, %v1068
        %v1070 = vrot.slane %v1056, 4
        %v1071 = vsel %vm938, %v1070, %v1050
        %v1072 = vrot.slane %v1050, 4
        %v1073 = vsel %vm938, %v1056, %v1072
        %v1075 = vunpack.c.l.s4 1983009808
        %v1076 = vunpack.c.0.s8 %v1075
        %v1077 = vperm.slane %v1071, %v1076
        %v1079 = vunpack.c.l.s4 1983009808
        %v1080 = vunpack.c.0.s8 %v1079
        %v1081 = vperm.slane %v1073, %v1080
        %v1082 = vrot.slane %v1077, 4
        %v1083 = vsel %vm938, %v1082, %v1065
        %v1084 = vrot.slane %v1065, 4
        %v1085 = vsel %vm938, %v1077, %v1084
        %v1087 = vunpack.c.l.s4 1934713408
        %v1088 = vunpack.c.0.s8 %v1087
        %v1089 = vperm.slane %v1083, %v1088
        %v1091 = vunpack.c.l.s4 1934713408
        %v1092 = vunpack.c.0.s8 %v1091
        %v1093 = vperm.slane %v1085, %v1092
        %v1094 = vrot.slane %v1081, 4
        %v1095 = vsel %vm938, %v1094, %v1069
        %v1096 = vrot.slane %v1069, 4
        %v1097 = vsel %vm938, %v1081, %v1096
        %v1099 = vunpack.c.l.s4 1934713408
        %v1100 = vunpack.c.0.s8 %v1099
        %v1101 = vperm.slane %v1095, %v1100
        %v1103 = vunpack.c.l.s4 1934713408
        %v1104 = vunpack.c.0.s8 %v1103
        %v1105 = vperm.slane %v1097, %v1104
        %v1106 = vrot.slane %v1089, 4
        %v1107 = vsel %vm938, 0.0, %v1106
        %v1108 = vrot.slane %v1093, 4
        %v1109 = vsel %vm938, 0.0, %v1108
        %v1110 = vrot.slane %v1101, 4
        %v1111 = vsel %vm938, 0.0, %v1110
        %v1112 = vrot.slane %v1105, 4
        %v1113 = vsel %vm938, 0.0, %v1112
        %v1114 = vsel %vm938, %v1108, %v1089
        %v1116 = vunpack.c.l.s4 1983009808
        %v1117 = vunpack.c.0.s8 %v1116
        %v1118 = vperm.slane %v1114, %v1117
        %v1119 = vrot.slane %v1109, 4
        %v1120 = vsel %vm938, %v1119, %v1107
        %v1122 = vunpack.c.l.s4 1983009808
        %v1123 = vunpack.c.0.s8 %v1122
        %v1124 = vperm.slane %v1120, %v1123
        %v1125 = vsel %vm938, %v1112, %v1101
        %v1127 = vunpack.c.l.s4 1983009808
        %v1128 = vunpack.c.0.s8 %v1127
        %v1129 = vperm.slane %v1125, %v1128
        %v1130 = vrot.slane %v1113, 4
        %v1131 = vsel %vm938, %v1130, %v1111
        %v1133 = vunpack.c.l.s4 1983009808
        %v1134 = vunpack.c.0.s8 %v1133
        %v1135 = vperm.slane %v1131, %v1134
        %v1136 = vrot.slane %v1124, 4
        %v1137 = vsel %vm938, %v1136, %v1118
        %v1138 = vrot.slane %v1118, 4
        %v1139 = vsel %vm938, %v1124, %v1138
        %v1141 = vunpack.c.l.s4 1934713408
        %v1142 = vunpack.c.0.s8 %v1141
        %v1143 = vperm.slane %v1137, %v1142
        %v1145 = vunpack.c.l.s4 1934713408
        %v1146 = vunpack.c.0.s8 %v1145
        %v1147 = vperm.slane %v1139, %v1146
        %v1148 = vrot.slane %v1135, 4
        %v1149 = vsel %vm938, %v1148, %v1129
        %v1150 = vrot.slane %v1129, 4
        %v1151 = vsel %vm938, %v1135, %v1150
        %v1153 = vunpack.c.l.s4 1934713408
        %v1154 = vunpack.c.0.s8 %v1153
        %v1155 = vperm.slane %v1149, %v1154
        %v1157 = vunpack.c.l.s4 1934713408
        %v1158 = vunpack.c.0.s8 %v1157
        %v1159 = vperm.slane %v1151, %v1158
        %v1160 = vrot.slane %v1155, 4
        %v1161 = vsel %vm938, %v1160, %v1143
        %v1162 = vrot.slane %v1143, 4
        %v1163 = vsel %vm938, %v1155, %v1162
        %v1164 = vrot.slane %v1159, 4
        %v1165 = vsel %vm938, %v1164, %v1147
        %v1166 = vrot.slane %v1147, 4
        %v1167 = vsel %vm938, %v1159, %v1166
        %1169 = vrot.lane.b32.xlu0 %v920, 96
        %v1170 = vpop.permute.xlu0 %1169
        %1172 = vrot.lane.b32.xlu0 %v920, 64
        %v1173 = vpop.permute.xlu0 %1172
        %1175 = vrot.lane.b32.xlu0 %v920, 32
        %v1176 = vpop.permute.xlu0 %1175
        %v1178 = vrot.slane %v1173, 4
        %v1179 = vsel %vm938, %v1178, %v920
        %v1180 = vrot.slane %v920, 4
        %v1181 = vsel %vm938, %v1173, %v1180
        %v1183 = vunpack.c.l.s4 1983009808
        %v1184 = vunpack.c.0.s8 %v1183
        %v1185 = vperm.slane %v1179, %v1184
        %v1187 = vunpack.c.l.s4 1983009808
        %v1188 = vunpack.c.0.s8 %v1187
        %v1189 = vperm.slane %v1181, %v1188
        %v1190 = vrot.slane %v1176, 4
        %v1191 = vsel %vm938, %v1190, %v1170
        %v1192 = vrot.slane %v1170, 4
        %v1193 = vsel %vm938, %v1176, %v1192
        %v1195 = vunpack.c.l.s4 1983009808
        %v1196 = vunpack.c.0.s8 %v1195
        %v1197 = vperm.slane %v1191, %v1196
        %v1199 = vunpack.c.l.s4 1983009808
        %v1200 = vunpack.c.0.s8 %v1199
        %v1201 = vperm.slane %v1193, %v1200
        %v1202 = vrot.slane %v1197, 4
        %v1203 = vsel %vm938, %v1202, %v1185
        %v1204 = vrot.slane %v1185, 4
        %v1205 = vsel %vm938, %v1197, %v1204
        %v1207 = vunpack.c.l.s4 1934713408
        %v1208 = vunpack.c.0.s8 %v1207
        %v1209 = vperm.slane %v1203, %v1208
        %v1211 = vunpack.c.l.s4 1934713408
        %v1212 = vunpack.c.0.s8 %v1211
        %v1213 = vperm.slane %v1205, %v1212
        %v1214 = vrot.slane %v1201, 4
        %v1215 = vsel %vm938, %v1214, %v1189
        %v1216 = vrot.slane %v1189, 4
        %v1217 = vsel %vm938, %v1201, %v1216
        %v1219 = vunpack.c.l.s4 1934713408
        %v1220 = vunpack.c.0.s8 %v1219
        %v1221 = vperm.slane %v1215, %v1220
        %v1223 = vunpack.c.l.s4 1934713408
        %v1224 = vunpack.c.0.s8 %v1223
        %v1225 = vperm.slane %v1217, %v1224
        %v1226 = vrot.slane %v1209, 4
        %v1227 = vsel %vm938, 0.0, %v1226
        %v1228 = vrot.slane %v1213, 4
        %v1229 = vsel %vm938, 0.0, %v1228
        %v1230 = vrot.slane %v1221, 4
        %v1231 = vsel %vm938, 0.0, %v1230
        %v1232 = vrot.slane %v1225, 4
        %v1233 = vsel %vm938, 0.0, %v1232
        %v1234 = vsel %vm938, %v1228, %v1209
        %v1236 = vunpack.c.l.s4 1983009808
        %v1237 = vunpack.c.0.s8 %v1236
        %v1238 = vperm.slane %v1234, %v1237
        %v1239 = vrot.slane %v1229, 4
        %v1240 = vsel %vm938, %v1239, %v1227
        %v1242 = vunpack.c.l.s4 1983009808
        %v1243 = vunpack.c.0.s8 %v1242
        %v1244 = vperm.slane %v1240, %v1243
        %v1245 = vsel %vm938, %v1232, %v1221
        %v1247 = vunpack.c.l.s4 1983009808
        %v1248 = vunpack.c.0.s8 %v1247
        %v1249 = vperm.slane %v1245, %v1248
        %v1250 = vrot.slane %v1233, 4
        %v1251 = vsel %vm938, %v1250, %v1231
        %v1253 = vunpack.c.l.s4 1983009808
        %v1254 = vunpack.c.0.s8 %v1253
        %v1255 = vperm.slane %v1251, %v1254
        %v1256 = vrot.slane %v1244, 4
        %v1257 = vsel %vm938, %v1256, %v1238
        %v1258 = vrot.slane %v1238, 4
        %v1259 = vsel %vm938, %v1244, %v1258
        %v1261 = vunpack.c.l.s4 1934713408
        %v1262 = vunpack.c.0.s8 %v1261
        %v1263 = vperm.slane %v1257, %v1262
        %v1265 = vunpack.c.l.s4 1934713408
        %v1266 = vunpack.c.0.s8 %v1265
        %v1267 = vperm.slane %v1259, %v1266
        %v1268 = vrot.slane %v1255, 4
        %v1269 = vsel %vm938, %v1268, %v1249
        %v1270 = vrot.slane %v1249, 4
        %v1271 = vsel %vm938, %v1255, %v1270
        %v1273 = vunpack.c.l.s4 1934713408
        %v1274 = vunpack.c.0.s8 %v1273
        %v1275 = vperm.slane %v1269, %v1274
        %v1277 = vunpack.c.l.s4 1934713408
        %v1278 = vunpack.c.0.s8 %v1277
        %v1279 = vperm.slane %v1271, %v1278
        %v1280 = vrot.slane %v1275, 4
        %v1281 = vsel %vm938, %v1280, %v1263
        %v1282 = vrot.slane %v1263, 4
        %v1283 = vsel %vm938, %v1275, %v1282
        %v1284 = vrot.slane %v1279, 4
        %v1285 = vsel %vm938, %v1284, %v1267
        %v1286 = vrot.slane %v1267, 4
        %v1287 = vsel %vm938, %v1279, %v1286
        %v1288 = vpack.c.bf16 %v1041, %v1041
        %v1289 = vpack.c.bf16 %v1043, %v1043
        %v1290 = vpack.c.bf16 %v1045, %v1045
        %v1291 = vpack.c.bf16 %v1047, %v1047
        %v1292 = vpack.c.bf16 %v1161, %v1161
        %v1293 = vpack.c.bf16 %v1163, %v1163
        %v1294 = vpack.c.bf16 %v1165, %v1165
        %v1295 = vpack.c.bf16 %v1167, %v1167
        %vm1296 = vcmask 261120
        %v1298 = vsel %vm1296, %v1288, 0
        %v1301 = vsel %vm1296, %v1292, 0
        %1303 = vmatpush.bf16.xpose.msra.mxu0 0
        %1304 = vmatpush.bf16.xpose.msra.mxu0 0
        %1305 = vmatpush.bf16.xpose.msra.mxu0 0
        %1306 = vmatpush.bf16.xpose.msra.mxu0 0
        %1307 = vmatpush.bf16.xpose.msra.mxu0 0
        %1308 = vmatpush.bf16.xpose.msra.mxu0 0
        %1309 = vmatpush.bf16.xpose.msra.mxu0 0
        %1310 = vmatpush.bf16.xpose.msra.mxu0 %v1301
        %1311 = vmatmul.bf16.gmra.mxu0 %v1298
        %v1312 = vpop.f32.mrf.mxu0
        %v1313 = vadd.f32 %v926, %v1312
        %v1314 = vpop.f32.mrf.mxu0
        %1315 = vdwg.mxu0
        %v1317 = vsel %vm1296, %v1289, 0
        %v1320 = vsel %vm1296, %v1293, 0
        %1322 = vmatpush.bf16.xpose.msra.mxu0 0
        %1323 = vmatpush.bf16.xpose.msra.mxu0 0
        %1324 = vmatpush.bf16.xpose.msra.mxu0 0
        %1325 = vmatpush.bf16.xpose.msra.mxu0 0
        %1326 = vmatpush.bf16.xpose.msra.mxu0 0
        %1327 = vmatpush.bf16.xpose.msra.mxu0 0
        %1328 = vmatpush.bf16.xpose.msra.mxu0 0
        %1329 = vmatpush.bf16.xpose.msra.mxu0 %v1320
        %1330 = vmatmul.bf16.gmra.mxu0 %v1317
        %v1331 = vpop.f32.mrf.mxu0
        %v1332 = vadd.f32 %v926, %v1331
        %v1333 = vpop.f32.mrf.mxu0
        %1334 = vdwg.mxu0
        %v1336 = vsel %vm1296, %v1290, 0
        %v1339 = vsel %vm1296, %v1294, 0
        %1341 = vmatpush.bf16.xpose.msra.mxu0 0
        %1342 = vmatpush.bf16.xpose.msra.mxu0 0
        %1343 = vmatpush.bf16.xpose.msra.mxu0 0
        %1344 = vmatpush.bf16.xpose.msra.mxu0 0
        %1345 = vmatpush.bf16.xpose.msra.mxu0 0
        %1346 = vmatpush.bf16.xpose.msra.mxu0 0
        %1347 = vmatpush.bf16.xpose.msra.mxu0 0
        %1348 = vmatpush.bf16.xpose.msra.mxu0 %v1339
        %1349 = vmatmul.bf16.gmra.mxu0 %v1336
        %v1350 = vpop.f32.mrf.mxu0
        %v1351 = vadd.f32 %v926, %v1350
        %v1352 = vpop.f32.mrf.mxu0
        %1353 = vdwg.mxu0
        %v1355 = vsel %vm1296, %v1291, 0
        %v1358 = vsel %vm1296, %v1295, 0
        %1360 = vmatpush.bf16.xpose.msra.mxu0 0
        %1361 = vmatpush.bf16.xpose.msra.mxu0 0
        %1362 = vmatpush.bf16.xpose.msra.mxu0 0
        %1363 = vmatpush.bf16.xpose.msra.mxu0 0
        %1364 = vmatpush.bf16.xpose.msra.mxu0 0
        %1365 = vmatpush.bf16.xpose.msra.mxu0 0
        %1366 = vmatpush.bf16.xpose.msra.mxu0 0
        %1367 = vmatpush.bf16.xpose.msra.mxu0 %v1358
        %1368 = vmatmul.bf16.gmra.mxu0 %v1355
        %v1369 = vpop.f32.mrf.mxu0
        %v1370 = vadd.f32 %v926, %v1369
        %v1371 = vpop.f32.mrf.mxu0
        %1372 = vdwg.mxu0
        %vm1373 = vcmask 64512
        %v1374 = vsel %vm1373, %v1313, -inf
        %1375 = vmax.xlane.f32.xlu0 %v1374
        %v1376 = vpop.xlane.xlu0 %1375
        %v1377 = vsel %vm1373, %v1332, -inf
        %1378 = vmax.xlane.f32.xlu0 %v1377
        %v1379 = vpop.xlane.xlu0 %1378
        %v1380 = vsel %vm1373, %v1351, -inf
        %1381 = vmax.xlane.f32.xlu0 %v1380
        %v1382 = vpop.xlane.xlu0 %1381
        %v1383 = vsel %vm1373, %v1370, -inf
        %1384 = vmax.xlane.f32.xlu0 %v1383
        %v1385 = vpop.xlane.xlu0 %1384
        %v1386 = vsub.f32 %v1313, %v1376
        %v1387 = vsub.f32 %v1332, %v1379
        %v1388 = vsub.f32 %v1351, %v1382
        %v1389 = vsub.f32 %v1370, %v1385
        %v1390 = vmul.f32 %v1386, 1.442695
        %v1391 = vpow.pop %v1390
        %v1392 = vmul.f32 %v1387, 1.442695
        %v1393 = vpow.pop %v1392
        %v1394 = vmul.f32 %v1388, 1.442695
        %v1395 = vpow.pop %v1394
        %v1396 = vmul.f32 %v1389, 1.442695
        %v1397 = vpow.pop %v1396
        %v1398 = vsel %vm1373, %v1391, 0.0
        %1399 = vadd.xlane.f32.xlu0 %v1398
        %v1400 = vpop.xlane.xlu0 %1399
        %v1401 = vsel %vm1373, %v1393, 0.0
        %1402 = vadd.xlane.f32.xlu0 %v1401
        %v1403 = vpop.xlane.xlu0 %1402
        %v1404 = vsel %vm1373, %v1395, 0.0
        %1405 = vadd.xlane.f32.xlu0 %v1404
        %v1406 = vpop.xlane.xlu0 %1405
        %v1407 = vsel %vm1373, %v1397, 0.0
        %1408 = vadd.xlane.f32.xlu0 %v1407
        %v1409 = vpop.xlane.xlu0 %1408
        %v1410 = vrcp.pop %v1400
        %v1411 = vmul.f32 %v1400, %v1410
        %v1412 = vsub.f32 1.0, %v1411
        %v1413 = vmul.f32 %v1410, %v1412
        %v1414 = vadd.f32 %v1410, %v1413
        %vm1415 = vweird.f32 %v1400
        %vm1416 = vweird.f32 %v1410
        %vm1417 = vmor %vm1415, %vm1416
        %v1418 = vsel %vm1417, %v1410, %v1414
        %v1419 = vand.u32 2147483647, %v1400
        %vm1420 = vcmp.eq.f32.partialorder %v1419, 8.507059e+37
        %v1421 = vand.u32 %v1400, 2147483648
        %v1422 = vor.u32 1.1754944e-38, %v1421
        %v1423 = vsel %vm1420, %v1422, %v1418
        %v1424 = vmul.f32 %v1391, %v1423
        %v1425 = vrcp.pop %v1403
        %v1426 = vmul.f32 %v1403, %v1425
        %v1427 = vsub.f32 1.0, %v1426
        %v1428 = vmul.f32 %v1425, %v1427
        %v1429 = vadd.f32 %v1425, %v1428
        %vm1430 = vweird.f32 %v1403
        %vm1431 = vweird.f32 %v1425
        %vm1432 = vmor %vm1430, %vm1431
        %v1433 = vsel %vm1432, %v1425, %v1429
        %v1434 = vand.u32 2147483647, %v1403
        %vm1435 = vcmp.eq.f32.partialorder %v1434, 8.507059e+37
        %v1436 = vand.u32 %v1403, 2147483648
        %v1437 = vor.u32 1.1754944e-38, %v1436
        %v1438 = vsel %vm1435, %v1437, %v1433
        %v1439 = vmul.f32 %v1393, %v1438
        %v1440 = vrcp.pop %v1406
        %v1441 = vmul.f32 %v1406, %v1440
        %v1442 = vsub.f32 1.0, %v1441
        %v1443 = vmul.f32 %v1440, %v1442
        %v1444 = vadd.f32 %v1440, %v1443
        %vm1445 = vweird.f32 %v1406
        %vm1446 = vweird.f32 %v1440
        %vm1447 = vmor %vm1445, %vm1446
        %v1448 = vsel %vm1447, %v1440, %v1444
        %v1449 = vand.u32 2147483647, %v1406
        %vm1450 = vcmp.eq.f32.partialorder %v1449, 8.507059e+37
        %v1451 = vand.u32 %v1406, 2147483648
        %v1452 = vor.u32 1.1754944e-38, %v1451
        %v1453 = vsel %vm1450, %v1452, %v1448
        %v1454 = vmul.f32 %v1395, %v1453
        %v1455 = vrcp.pop %v1409
        %v1456 = vmul.f32 %v1409, %v1455
        %v1457 = vsub.f32 1.0, %v1456
        %v1458 = vmul.f32 %v1455, %v1457
        %v1459 = vadd.f32 %v1455, %v1458
        %vm1460 = vweird.f32 %v1409
        %vm1461 = vweird.f32 %v1455
        %vm1462 = vmor %vm1460, %vm1461
        %v1463 = vsel %vm1462, %v1455, %v1459
        %v1464 = vand.u32 2147483647, %v1409
        %vm1465 = vcmp.eq.f32.partialorder %v1464, 8.507059e+37
        %v1466 = vand.u32 %v1409, 2147483648
        %v1467 = vor.u32 1.1754944e-38, %v1466
        %v1468 = vsel %vm1465, %v1467, %v1463
        %v1469 = vmul.f32 %v1397, %v1468
        %v1470 = vpack.c.bf16 %v1424, %v1424
        %v1471 = vpack.c.bf16 %v1439, %v1439
        %v1472 = vpack.c.bf16 %v1454, %v1454
        %v1473 = vpack.c.bf16 %v1469, %v1469
        %v1474 = vpack.c.bf16 %v1281, %v1281
        %v1475 = vpack.c.bf16 %v1283, %v1283
        %v1476 = vpack.c.bf16 %v1285, %v1285
        %v1477 = vpack.c.bf16 %v1287, %v1287
        %v1479 = vsel %vm1373, %v1470, 0
        %vm1481 = vcmask 1043456
        %v1483 = vsel %vm1481, %v1474, 0
        %1485 = vmatpush.bf16.msra.mxu0 0
        %1486 = vmatpush.bf16.msra.mxu0 0
        %1487 = vmatpush.bf16.msra.mxu0 0
        %1488 = vmatpush.bf16.msra.mxu0 0
        %1489 = vmatpush.bf16.msra.mxu0 0
        %1490 = vmatpush.bf16.msra.mxu0 0
        %1491 = vmatpush.bf16.msra.mxu0 0
        %1492 = vmatpush.bf16.msra.mxu0 %v1483
        %1493 = vmatmul.bf16.gmra.mxu0 %v1479
        %v1494 = vpop.f32.mrf.mxu0
        %v1495 = vadd.f32 0.0, %v1494
        %v1496 = vpop.f32.mrf.mxu0
        %1497 = vdwg.mxu0
        %v1499 = vsel %vm1373, %v1471, 0
        %v1502 = vsel %vm1481, %v1475, 0
        %1504 = vmatpush.bf16.msra.mxu0 0
        %1505 = vmatpush.bf16.msra.mxu0 0
        %1506 = vmatpush.bf16.msra.mxu0 0
        %1507 = vmatpush.bf16.msra.mxu0 0
        %1508 = vmatpush.bf16.msra.mxu0 0
        %1509 = vmatpush.bf16.msra.mxu0 0
        %1510 = vmatpush.bf16.msra.mxu0 0
        %1511 = vmatpush.bf16.msra.mxu0 %v1502
        %1512 = vmatmul.bf16.gmra.mxu0 %v1499
        %v1513 = vpop.f32.mrf.mxu0
        %v1514 = vadd.f32 0.0, %v1513
        %v1515 = vpop.f32.mrf.mxu0
        %1516 = vdwg.mxu0
        %v1518 = vsel %vm1373, %v1472, 0
        %v1521 = vsel %vm1481, %v1476, 0
        %1523 = vmatpush.bf16.msra.mxu0 0
        %1524 = vmatpush.bf16.msra.mxu0 0
        %1525 = vmatpush.bf16.msra.mxu0 0
        %1526 = vmatpush.bf16.msra.mxu0 0
        %1527 = vmatpush.bf16.msra.mxu0 0
        %1528 = vmatpush.bf16.msra.mxu0 0
        %1529 = vmatpush.bf16.msra.mxu0 0
        %1530 = vmatpush.bf16.msra.mxu0 %v1521
        %1531 = vmatmul.bf16.gmra.mxu0 %v1518
        %v1532 = vpop.f32.mrf.mxu0
        %v1533 = vadd.f32 0.0, %v1532
        %v1534 = vpop.f32.mrf.mxu0
        %1535 = vdwg.mxu0
        %v1537 = vsel %vm1373, %v1473, 0
        %v1540 = vsel %vm1481, %v1477, 0
        %1542 = vmatpush.bf16.msra.mxu0 0
        %1543 = vmatpush.bf16.msra.mxu0 0
        %1544 = vmatpush.bf16.msra.mxu0 0
        %1545 = vmatpush.bf16.msra.mxu0 0
        %1546 = vmatpush.bf16.msra.mxu0 0
        %1547 = vmatpush.bf16.msra.mxu0 0
        %1548 = vmatpush.bf16.msra.mxu0 0
        %1549 = vmatpush.bf16.msra.mxu0 %v1540
        %1550 = vmatmul.bf16.gmra.mxu0 %v1537
        %v1551 = vpop.f32.mrf.mxu0
        %v1552 = vadd.f32 0.0, %v1551
        %v1553 = vpop.f32.mrf.mxu0
        %1554 = vdwg.mxu0
        %v1555 = vrot.slane %v1533, 4
        %v1556 = vsel %vm938, %v1555, %v1495
        %v1557 = vrot.slane %v1495, 4
        %v1558 = vsel %vm938, %v1533, %v1557
        %v1560 = vunpack.c.l.s4 1983009808
        %v1561 = vunpack.c.0.s8 %v1560
        %v1562 = vperm.slane %v1556, %v1561
        %v1564 = vunpack.c.l.s4 1983009808
        %v1565 = vunpack.c.0.s8 %v1564
        %v1566 = vperm.slane %v1558, %v1565
        %v1567 = vrot.slane %v1552, 4
        %v1568 = vsel %vm938, %v1567, %v1514
        %v1569 = vrot.slane %v1514, 4
        %v1570 = vsel %vm938, %v1552, %v1569
        %v1572 = vunpack.c.l.s4 1983009808
        %v1573 = vunpack.c.0.s8 %v1572
        %v1574 = vperm.slane %v1568, %v1573
        %v1576 = vunpack.c.l.s4 1983009808
        %v1577 = vunpack.c.0.s8 %v1576
        %v1578 = vperm.slane %v1570, %v1577
        %v1579 = vrot.slane %v1574, 4
        %v1580 = vsel %vm938, %v1579, %v1562
        %v1581 = vrot.slane %v1562, 4
        %v1582 = vsel %vm938, %v1574, %v1581
        %v1584 = vunpack.c.l.s4 1934713408
        %v1585 = vunpack.c.0.s8 %v1584
        %v1586 = vperm.slane %v1580, %v1585
        %v1588 = vunpack.c.l.s4 1934713408
        %v1589 = vunpack.c.0.s8 %v1588
        %v1590 = vperm.slane %v1582, %v1589
        %v1591 = vrot.slane %v1578, 4
        %v1592 = vsel %vm938, %v1591, %v1566
        %v1593 = vrot.slane %v1566, 4
        %v1594 = vsel %vm938, %v1578, %v1593
        %v1596 = vunpack.c.l.s4 1934713408
        %v1597 = vunpack.c.0.s8 %v1596
        %v1598 = vperm.slane %v1592, %v1597
        %v1600 = vunpack.c.l.s4 1934713408
        %v1601 = vunpack.c.0.s8 %v1600
        %v1602 = vperm.slane %v1594, %v1601
        %v1603 = vrot.slane %v1586, 4
        %v1604 = vsel %vm938, 0.0, %v1603
        %v1605 = vrot.slane %v1590, 4
        %v1606 = vsel %vm938, 0.0, %v1605
        %v1607 = vrot.slane %v1598, 4
        %v1608 = vsel %vm938, 0.0, %v1607
        %v1609 = vrot.slane %v1602, 4
        %v1610 = vsel %vm938, 0.0, %v1609
        %v1611 = vsel %vm938, %v1605, %v1586
        %v1613 = vunpack.c.l.s4 1983009808
        %v1614 = vunpack.c.0.s8 %v1613
        %v1615 = vperm.slane %v1611, %v1614
        %v1616 = vrot.slane %v1606, 4
        %v1617 = vsel %vm938, %v1616, %v1604
        %v1619 = vunpack.c.l.s4 1983009808
        %v1620 = vunpack.c.0.s8 %v1619
        %v1621 = vperm.slane %v1617, %v1620
        %v1622 = vsel %vm938, %v1609, %v1598
        %v1624 = vunpack.c.l.s4 1983009808
        %v1625 = vunpack.c.0.s8 %v1624
        %v1626 = vperm.slane %v1622, %v1625
        %v1627 = vrot.slane %v1610, 4
        %v1628 = vsel %vm938, %v1627, %v1608
        %v1630 = vunpack.c.l.s4 1983009808
        %v1631 = vunpack.c.0.s8 %v1630
        %v1632 = vperm.slane %v1628, %v1631
        %v1633 = vrot.slane %v1621, 4
        %v1634 = vsel %vm938, %v1633, %v1615
        %v1635 = vrot.slane %v1615, 4
        %v1636 = vsel %vm938, %v1621, %v1635
        %v1638 = vunpack.c.l.s4 1934713408
        %v1639 = vunpack.c.0.s8 %v1638
        %v1640 = vperm.slane %v1634, %v1639
        %v1642 = vunpack.c.l.s4 1934713408
        %v1643 = vunpack.c.0.s8 %v1642
        %v1644 = vperm.slane %v1636, %v1643
        %v1645 = vrot.slane %v1632, 4
        %v1646 = vsel %vm938, %v1645, %v1626
        %v1647 = vrot.slane %v1626, 4
        %v1648 = vsel %vm938, %v1632, %v1647
        %v1650 = vunpack.c.l.s4 1934713408
        %v1651 = vunpack.c.0.s8 %v1650
        %v1652 = vperm.slane %v1646, %v1651
        %v1654 = vunpack.c.l.s4 1934713408
        %v1655 = vunpack.c.0.s8 %v1654
        %v1656 = vperm.slane %v1648, %v1655
        %v1657 = vrot.slane %v1652, 4
        %v1658 = vsel %vm938, %v1657, %v1640
        %v1659 = vrot.slane %v1640, 4
        %v1660 = vsel %vm938, %v1652, %v1659
        %v1661 = vrot.slane %v1656, 4
        %v1662 = vsel %vm938, %v1661, %v1644
        %v1663 = vrot.slane %v1644, 4
        %v1664 = vsel %vm938, %v1656, %v1663
        %1666 = vrot.lane.b32.xlu0 %v1660, 32
        %v1667 = vpop.permute.xlu0 %1666
        %1670 = vrot.lane.b32.xlu0 %v1662, 64
        %v1671 = vpop.permute.xlu0 %1670
        %1674 = vrot.lane.b32.xlu0 %v1664, 96
        %v1675 = vpop.permute.xlu0 %1674
        %v1677 = vsel %vm1296, %v1658, %v1667
        %vm1678 = vcmask 523264
        %v1679 = vsel %vm1678, %v1677, %v1671
        %vm1680 = vcmask 785408
        %v1681 = vsel %vm1680, %v1679, %v1675
        %1683 = vrot.lane.b32.xlu0 %v925, 96
        %v1684 = vpop.permute.xlu0 %1683
        %1686 = vrot.lane.b32.xlu0 %v925, 64
        %v1687 = vpop.permute.xlu0 %1686
        %1689 = vrot.lane.b32.xlu0 %v925, 32
        %v1690 = vpop.permute.xlu0 %1689
        %v1692 = vrot.slane %v1687, 4
        %v1693 = vsel %vm938, %v1692, %v925
        %v1694 = vrot.slane %v925, 4
        %v1695 = vsel %vm938, %v1687, %v1694
        %v1697 = vunpack.c.l.s4 1983009808
        %v1698 = vunpack.c.0.s8 %v1697
        %v1699 = vperm.slane %v1693, %v1698
        %v1701 = vunpack.c.l.s4 1983009808
        %v1702 = vunpack.c.0.s8 %v1701
        %v1703 = vperm.slane %v1695, %v1702
        %v1704 = vrot.slane %v1690, 4
        %v1705 = vsel %vm938, %v1704, %v1684
        %v1706 = vrot.slane %v1684, 4
        %v1707 = vsel %vm938, %v1690, %v1706
        %v1709 = vunpack.c.l.s4 1983009808
        %v1710 = vunpack.c.0.s8 %v1709
        %v1711 = vperm.slane %v1705, %v1710
        %v1713 = vunpack.c.l.s4 1983009808
        %v1714 = vunpack.c.0.s8 %v1713
        %v1715 = vperm.slane %v1707, %v1714
        %v1716 = vrot.slane %v1711, 4
        %v1717 = vsel %vm938, %v1716, %v1699
        %v1718 = vrot.slane %v1699, 4
        %v1719 = vsel %vm938, %v1711, %v1718
        %v1721 = vunpack.c.l.s4 1934713408
        %v1722 = vunpack.c.0.s8 %v1721
        %v1723 = vperm.slane %v1717, %v1722
        %v1725 = vunpack.c.l.s4 1934713408
        %v1726 = vunpack.c.0.s8 %v1725
        %v1727 = vperm.slane %v1719, %v1726
        %v1728 = vrot.slane %v1715, 4
        %v1729 = vsel %vm938, %v1728, %v1703
        %v1730 = vrot.slane %v1703, 4
        %v1731 = vsel %vm938, %v1715, %v1730
        %v1733 = vunpack.c.l.s4 1934713408
        %v1734 = vunpack.c.0.s8 %v1733
        %v1735 = vperm.slane %v1729, %v1734
        %v1737 = vunpack.c.l.s4 1934713408
        %v1738 = vunpack.c.0.s8 %v1737
        %v1739 = vperm.slane %v1731, %v1738
        %v1740 = vrot.slane %v1723, 4
        %v1741 = vsel %vm938, 0.0, %v1740
        %v1742 = vrot.slane %v1727, 4
        %v1743 = vsel %vm938, 0.0, %v1742
        %v1744 = vrot.slane %v1735, 4
        %v1745 = vsel %vm938, 0.0, %v1744
        %v1746 = vrot.slane %v1739, 4
        %v1747 = vsel %vm938, 0.0, %v1746
        %v1748 = vsel %vm938, %v1742, %v1723
        %v1750 = vunpack.c.l.s4 1983009808
        %v1751 = vunpack.c.0.s8 %v1750
        %v1752 = vperm.slane %v1748, %v1751
        %v1753 = vrot.slane %v1743, 4
        %v1754 = vsel %vm938, %v1753, %v1741
        %v1756 = vunpack.c.l.s4 1983009808
        %v1757 = vunpack.c.0.s8 %v1756
        %v1758 = vperm.slane %v1754, %v1757
        %v1759 = vsel %vm938, %v1746, %v1735
        %v1761 = vunpack.c.l.s4 1983009808
        %v1762 = vunpack.c.0.s8 %v1761
        %v1763 = vperm.slane %v1759, %v1762
        %v1764 = vrot.slane %v1747, 4
        %v1765 = vsel %vm938, %v1764, %v1745
        %v1767 = vunpack.c.l.s4 1983009808
        %v1768 = vunpack.c.0.s8 %v1767
        %v1769 = vperm.slane %v1765, %v1768
        %v1770 = vrot.slane %v1758, 4
        %v1771 = vsel %vm938, %v1770, %v1752
        %v1772 = vrot.slane %v1752, 4
        %v1773 = vsel %vm938, %v1758, %v1772
        %v1775 = vunpack.c.l.s4 1934713408
        %v1776 = vunpack.c.0.s8 %v1775
        %v1777 = vperm.slane %v1771, %v1776
        %v1779 = vunpack.c.l.s4 1934713408
        %v1780 = vunpack.c.0.s8 %v1779
        %v1781 = vperm.slane %v1773, %v1780
        %v1782 = vrot.slane %v1769, 4
        %v1783 = vsel %vm938, %v1782, %v1763
        %v1784 = vrot.slane %v1763, 4
        %v1785 = vsel %vm938, %v1769, %v1784
        %v1787 = vunpack.c.l.s4 1934713408
        %v1788 = vunpack.c.0.s8 %v1787
        %v1789 = vperm.slane %v1783, %v1788
        %v1791 = vunpack.c.l.s4 1934713408
        %v1792 = vunpack.c.0.s8 %v1791
        %v1793 = vperm.slane %v1785, %v1792
        %v1794 = vrot.slane %v1789, 4
        %v1795 = vsel %vm938, %v1794, %v1777
        %v1796 = vrot.slane %v1777, 4
        %v1797 = vsel %vm938, %v1789, %v1796
        %v1798 = vrot.slane %v1793, 4
        %v1799 = vsel %vm938, %v1798, %v1781
        %v1800 = vrot.slane %v1781, 4
        %v1801 = vsel %vm938, %v1793, %v1800
        %1803 = vrot.lane.b32.xlu0 %v908, 96
        %v1804 = vpop.permute.xlu0 %1803
        %1806 = vrot.lane.b32.xlu0 %v908, 64
        %v1807 = vpop.permute.xlu0 %1806
        %1809 = vrot.lane.b32.xlu0 %v908, 32
        %v1810 = vpop.permute.xlu0 %1809
        %v1812 = vrot.slane %v1807, 4
        %v1813 = vsel %vm938, %v1812, %v908
        %v1814 = vrot.slane %v908, 4
        %v1815 = vsel %vm938, %v1807, %v1814
        %v1817 = vunpack.c.l.s4 1983009808
        %v1818 = vunpack.c.0.s8 %v1817
        %v1819 = vperm.slane %v1813, %v1818
        %v1821 = vunpack.c.l.s4 1983009808
        %v1822 = vunpack.c.0.s8 %v1821
        %v1823 = vperm.slane %v1815, %v1822
        %v1824 = vrot.slane %v1810, 4
        %v1825 = vsel %vm938, %v1824, %v1804
        %v1826 = vrot.slane %v1804, 4
        %v1827 = vsel %vm938, %v1810, %v1826
        %v1829 = vunpack.c.l.s4 1983009808
        %v1830 = vunpack.c.0.s8 %v1829
        %v1831 = vperm.slane %v1825, %v1830
        %v1833 = vunpack.c.l.s4 1983009808
        %v1834 = vunpack.c.0.s8 %v1833
        %v1835 = vperm.slane %v1827, %v1834
        %v1836 = vrot.slane %v1831, 4
        %v1837 = vsel %vm938, %v1836, %v1819
        %v1838 = vrot.slane %v1819, 4
        %v1839 = vsel %vm938, %v1831, %v1838
        %v1841 = vunpack.c.l.s4 1934713408
        %v1842 = vunpack.c.0.s8 %v1841
        %v1843 = vperm.slane %v1837, %v1842
        %v1845 = vunpack.c.l.s4 1934713408
        %v1846 = vunpack.c.0.s8 %v1845
        %v1847 = vperm.slane %v1839, %v1846
        %v1848 = vrot.slane %v1835, 4
        %v1849 = vsel %vm938, %v1848, %v1823
        %v1850 = vrot.slane %v1823, 4
        %v1851 = vsel %vm938, %v1835, %v1850
        %v1853 = vunpack.c.l.s4 1934713408
        %v1854 = vunpack.c.0.s8 %v1853
        %v1855 = vperm.slane %v1849, %v1854
        %v1857 = vunpack.c.l.s4 1934713408
        %v1858 = vunpack.c.0.s8 %v1857
        %v1859 = vperm.slane %v1851, %v1858
        %v1860 = vrot.slane %v1843, 4
        %v1861 = vsel %vm938, 0.0, %v1860
        %v1862 = vrot.slane %v1847, 4
        %v1863 = vsel %vm938, 0.0, %v1862
        %v1864 = vrot.slane %v1855, 4
        %v1865 = vsel %vm938, 0.0, %v1864
        %v1866 = vrot.slane %v1859, 4
        %v1867 = vsel %vm938, 0.0, %v1866
        %v1868 = vsel %vm938, %v1862, %v1843
        %v1870 = vunpack.c.l.s4 1983009808
        %v1871 = vunpack.c.0.s8 %v1870
        %v1872 = vperm.slane %v1868, %v1871
        %v1873 = vrot.slane %v1863, 4
        %v1874 = vsel %vm938, %v1873, %v1861
        %v1876 = vunpack.c.l.s4 1983009808
        %v1877 = vunpack.c.0.s8 %v1876
        %v1878 = vperm.slane %v1874, %v1877
        %v1879 = vsel %vm938, %v1866, %v1855
        %v1881 = vunpack.c.l.s4 1983009808
        %v1882 = vunpack.c.0.s8 %v1881
        %v1883 = vperm.slane %v1879, %v1882
        %v1884 = vrot.slane %v1867, 4
        %v1885 = vsel %vm938, %v1884, %v1865
        %v1887 = vunpack.c.l.s4 1983009808
        %v1888 = vunpack.c.0.s8 %v1887
        %v1889 = vperm.slane %v1885, %v1888
        %v1890 = vrot.slane %v1878, 4
        %v1891 = vsel %vm938, %v1890, %v1872
        %v1892 = vrot.slane %v1872, 4
        %v1893 = vsel %vm938, %v1878, %v1892
        %v1895 = vunpack.c.l.s4 1934713408
        %v1896 = vunpack.c.0.s8 %v1895
        %v1897 = vperm.slane %v1891, %v1896
        %v1899 = vunpack.c.l.s4 1934713408
        %v1900 = vunpack.c.0.s8 %v1899
        %v1901 = vperm.slane %v1893, %v1900
        %v1902 = vrot.slane %v1889, 4
        %v1903 = vsel %vm938, %v1902, %v1883
        %v1904 = vrot.slane %v1883, 4
        %v1905 = vsel %vm938, %v1889, %v1904
        %v1907 = vunpack.c.l.s4 1934713408
        %v1908 = vunpack.c.0.s8 %v1907
        %v1909 = vperm.slane %v1903, %v1908
        %v1911 = vunpack.c.l.s4 1934713408
        %v1912 = vunpack.c.0.s8 %v1911
        %v1913 = vperm.slane %v1905, %v1912
        %v1914 = vrot.slane %v1909, 4
        %v1915 = vsel %vm938, %v1914, %v1897
        %v1916 = vrot.slane %v1897, 4
        %v1917 = vsel %vm938, %v1909, %v1916
        %v1918 = vrot.slane %v1913, 4
        %v1919 = vsel %vm938, %v1918, %v1901
        %v1920 = vrot.slane %v1901, 4
        %v1921 = vsel %vm938, %v1913, %v1920
        %1923 = vrot.lane.b32.xlu0 %v922, 96
        %v1924 = vpop.permute.xlu0 %1923
        %1926 = vrot.lane.b32.xlu0 %v922, 64
        %v1927 = vpop.permute.xlu0 %1926
        %1929 = vrot.lane.b32.xlu0 %v922, 32
        %v1930 = vpop.permute.xlu0 %1929
        %v1932 = vrot.slane %v1927, 4
        %v1933 = vsel %vm938, %v1932, %v922
        %v1934 = vrot.slane %v922, 4
        %v1935 = vsel %vm938, %v1927, %v1934
        %v1937 = vunpack.c.l.s4 1983009808
        %v1938 = vunpack.c.0.s8 %v1937
        %v1939 = vperm.slane %v1933, %v1938
        %v1941 = vunpack.c.l.s4 1983009808
        %v1942 = vunpack.c.0.s8 %v1941
        %v1943 = vperm.slane %v1935, %v1942
        %v1944 = vrot.slane %v1930, 4
        %v1945 = vsel %vm938, %v1944, %v1924
        %v1946 = vrot.slane %v1924, 4
        %v1947 = vsel %vm938, %v1930, %v1946
        %v1949 = vunpack.c.l.s4 1983009808
        %v1950 = vunpack.c.0.s8 %v1949
        %v1951 = vperm.slane %v1945, %v1950
        %v1953 = vunpack.c.l.s4 1983009808
        %v1954 = vunpack.c.0.s8 %v1953
        %v1955 = vperm.slane %v1947, %v1954
        %v1956 = vrot.slane %v1951, 4
        %v1957 = vsel %vm938, %v1956, %v1939
        %v1958 = vrot.slane %v1939, 4
        %v1959 = vsel %vm938, %v1951, %v1958
        %v1961 = vunpack.c.l.s4 1934713408
        %v1962 = vunpack.c.0.s8 %v1961
        %v1963 = vperm.slane %v1957, %v1962
        %v1965 = vunpack.c.l.s4 1934713408
        %v1966 = vunpack.c.0.s8 %v1965
        %v1967 = vperm.slane %v1959, %v1966
        %v1968 = vrot.slane %v1955, 4
        %v1969 = vsel %vm938, %v1968, %v1943
        %v1970 = vrot.slane %v1943, 4
        %v1971 = vsel %vm938, %v1955, %v1970
        %v1973 = vunpack.c.l.s4 1934713408
        %v1974 = vunpack.c.0.s8 %v1973
        %v1975 = vperm.slane %v1969, %v1974
        %v1977 = vunpack.c.l.s4 1934713408
        %v1978 = vunpack.c.0.s8 %v1977
        %v1979 = vperm.slane %v1971, %v1978
        %v1980 = vrot.slane %v1963, 4
        %v1981 = vsel %vm938, 0.0, %v1980
        %v1982 = vrot.slane %v1967, 4
        %v1983 = vsel %vm938, 0.0, %v1982
        %v1984 = vrot.slane %v1975, 4
        %v1985 = vsel %vm938, 0.0, %v1984
        %v1986 = vrot.slane %v1979, 4
        %v1987 = vsel %vm938, 0.0, %v1986
        %v1988 = vsel %vm938, %v1982, %v1963
        %v1990 = vunpack.c.l.s4 1983009808
        %v1991 = vunpack.c.0.s8 %v1990
        %v1992 = vperm.slane %v1988, %v1991
        %v1993 = vrot.slane %v1983, 4
        %v1994 = vsel %vm938, %v1993, %v1981
        %v1996 = vunpack.c.l.s4 1983009808
        %v1997 = vunpack.c.0.s8 %v1996
        %v1998 = vperm.slane %v1994, %v1997
        %v1999 = vsel %vm938, %v1986, %v1975
        %v2001 = vunpack.c.l.s4 1983009808
        %v2002 = vunpack.c.0.s8 %v2001
        %v2003 = vperm.slane %v1999, %v2002
        %v2004 = vrot.slane %v1987, 4
        %v2005 = vsel %vm938, %v2004, %v1985
        %v2007 = vunpack.c.l.s4 1983009808
        %v2008 = vunpack.c.0.s8 %v2007
        %v2009 = vperm.slane %v2005, %v2008
        %v2010 = vrot.slane %v1998, 4
        %v2011 = vsel %vm938, %v2010, %v1992
        %v2012 = vrot.slane %v1992, 4
        %v2013 = vsel %vm938, %v1998, %v2012
        %v2015 = vunpack.c.l.s4 1934713408
        %v2016 = vunpack.c.0.s8 %v2015
        %v2017 = vperm.slane %v2011, %v2016
        %v2019 = vunpack.c.l.s4 1934713408
        %v2020 = vunpack.c.0.s8 %v2019
        %v2021 = vperm.slane %v2013, %v2020
        %v2022 = vrot.slane %v2009, 4
        %v2023 = vsel %vm938, %v2022, %v2003
        %v2024 = vrot.slane %v2003, 4
        %v2025 = vsel %vm938, %v2009, %v2024
        %v2027 = vunpack.c.l.s4 1934713408
        %v2028 = vunpack.c.0.s8 %v2027
        %v2029 = vperm.slane %v2023, %v2028
        %v2031 = vunpack.c.l.s4 1934713408
        %v2032 = vunpack.c.0.s8 %v2031
        %v2033 = vperm.slane %v2025, %v2032
        %v2034 = vrot.slane %v2029, 4
        %v2035 = vsel %vm938, %v2034, %v2017
        %v2036 = vrot.slane %v2017, 4
        %v2037 = vsel %vm938, %v2029, %v2036
        %v2038 = vrot.slane %v2033, 4
        %v2039 = vsel %vm938, %v2038, %v2021
        %v2040 = vrot.slane %v2021, 4
        %v2041 = vsel %vm938, %v2033, %v2040
        %v2042 = vpack.c.bf16 %v1795, %v1795
        %v2043 = vpack.c.bf16 %v1797, %v1797
        %v2044 = vpack.c.bf16 %v1799, %v1799
        %v2045 = vpack.c.bf16 %v1801, %v1801
        %v2046 = vpack.c.bf16 %v1915, %v1915
        %v2047 = vpack.c.bf16 %v1917, %v1917
        %v2048 = vpack.c.bf16 %v1919, %v1919
        %v2049 = vpack.c.bf16 %v1921, %v1921
        %v2051 = vsel %vm1296, %v2042, 0
        %v2054 = vsel %vm1296, %v2046, 0
        %2056 = vmatpush.bf16.xpose.msra.mxu0 0
        %2057 = vmatpush.bf16.xpose.msra.mxu0 0
        %2058 = vmatpush.bf16.xpose.msra.mxu0 0
        %2059 = vmatpush.bf16.xpose.msra.mxu0 0
        %2060 = vmatpush.bf16.xpose.msra.mxu0 0
        %2061 = vmatpush.bf16.xpose.msra.mxu0 0
        %2062 = vmatpush.bf16.xpose.msra.mxu0 0
        %2063 = vmatpush.bf16.xpose.msra.mxu0 %v2054
        %2064 = vmatmul.bf16.gmra.mxu0 %v2051
        %v2065 = vpop.f32.mrf.mxu0
        %v2066 = vadd.f32 %v926, %v2065
        %v2067 = vpop.f32.mrf.mxu0
        %2068 = vdwg.mxu0
        %v2070 = vsel %vm1296, %v2043, 0
        %v2073 = vsel %vm1296, %v2047, 0
        %2075 = vmatpush.bf16.xpose.msra.mxu0 0
        %2076 = vmatpush.bf16.xpose.msra.mxu0 0
        %2077 = vmatpush.bf16.xpose.msra.mxu0 0
        %2078 = vmatpush.bf16.xpose.msra.mxu0 0
        %2079 = vmatpush.bf16.xpose.msra.mxu0 0
        %2080 = vmatpush.bf16.xpose.msra.mxu0 0
        %2081 = vmatpush.bf16.xpose.msra.mxu0 0
        %2082 = vmatpush.bf16.xpose.msra.mxu0 %v2073
        %2083 = vmatmul.bf16.gmra.mxu0 %v2070
        %v2084 = vpop.f32.mrf.mxu0
        %v2085 = vadd.f32 %v926, %v2084
        %v2086 = vpop.f32.mrf.mxu0
        %2087 = vdwg.mxu0
        %v2089 = vsel %vm1296, %v2044, 0
        %v2092 = vsel %vm1296, %v2048, 0
        %2094 = vmatpush.bf16.xpose.msra.mxu0 0
        %2095 = vmatpush.bf16.xpose.msra.mxu0 0
        %2096 = vmatpush.bf16.xpose.msra.mxu0 0
        %2097 = vmatpush.bf16.xpose.msra.mxu0 0
        %2098 = vmatpush.bf16.xpose.msra.mxu0 0
        %2099 = vmatpush.bf16.xpose.msra.mxu0 0
        %2100 = vmatpush.bf16.xpose.msra.mxu0 0
        %2101 = vmatpush.bf16.xpose.msra.mxu0 %v2092
        %2102 = vmatmul.bf16.gmra.mxu0 %v2089
        %v2103 = vpop.f32.mrf.mxu0
        %v2104 = vadd.f32 %v926, %v2103
        %v2105 = vpop.f32.mrf.mxu0
        %2106 = vdwg.mxu0
        %v2108 = vsel %vm1296, %v2045, 0
        %v2111 = vsel %vm1296, %v2049, 0
        %2113 = vmatpush.bf16.xpose.msra.mxu0 0
        %2114 = vmatpush.bf16.xpose.msra.mxu0 0
        %2115 = vmatpush.bf16.xpose.msra.mxu0 0
        %2116 = vmatpush.bf16.xpose.msra.mxu0 0
        %2117 = vmatpush.bf16.xpose.msra.mxu0 0
        %2118 = vmatpush.bf16.xpose.msra.mxu0 0
        %2119 = vmatpush.bf16.xpose.msra.mxu0 0
        %2120 = vmatpush.bf16.xpose.msra.mxu0 %v2111
        %2121 = vmatmul.bf16.gmra.mxu0 %v2108
        %v2122 = vpop.f32.mrf.mxu0
        %v2123 = vadd.f32 %v926, %v2122
        %v2124 = vpop.f32.mrf.mxu0
        %2125 = vdwg.mxu0
        %v2126 = vsel %vm1373, %v2066, -inf
        %2127 = vmax.xlane.f32.xlu0 %v2126
        %v2128 = vpop.xlane.xlu0 %2127
        %v2129 = vsel %vm1373, %v2085, -inf
        %2130 = vmax.xlane.f32.xlu0 %v2129
        %v2131 = vpop.xlane.xlu0 %2130
        %v2132 = vsel %vm1373, %v2104, -inf
        %2133 = vmax.xlane.f32.xlu0 %v2132
        %v2134 = vpop.xlane.xlu0 %2133
        %v2135 = vsel %vm1373, %v2123, -inf
        %2136 = vmax.xlane.f32.xlu0 %v2135
        %v2137 = vpop.xlane.xlu0 %2136
        %v2138 = vsub.f32 %v2066, %v2128
        %v2139 = vsub.f32 %v2085, %v2131
        %v2140 = vsub.f32 %v2104, %v2134
        %v2141 = vsub.f32 %v2123, %v2137
        %v2142 = vmul.f32 %v2138, 1.442695
        %v2143 = vpow.pop %v2142
        %v2144 = vmul.f32 %v2139, 1.442695
        %v2145 = vpow.pop %v2144
        %v2146 = vmul.f32 %v2140, 1.442695
        %v2147 = vpow.pop %v2146
        %v2148 = vmul.f32 %v2141, 1.442695
        %v2149 = vpow.pop %v2148
        %v2150 = vsel %vm1373, %v2143, 0.0
        %2151 = vadd.xlane.f32.xlu0 %v2150
        %v2152 = vpop.xlane.xlu0 %2151
        %v2153 = vsel %vm1373, %v2145, 0.0
        %2154 = vadd.xlane.f32.xlu0 %v2153
        %v2155 = vpop.xlane.xlu0 %2154
        %v2156 = vsel %vm1373, %v2147, 0.0
        %2157 = vadd.xlane.f32.xlu0 %v2156
        %v2158 = vpop.xlane.xlu0 %2157
        %v2159 = vsel %vm1373, %v2149, 0.0
        %2160 = vadd.xlane.f32.xlu0 %v2159
        %v2161 = vpop.xlane.xlu0 %2160
        %v2162 = vrcp.pop %v2152
        %v2163 = vmul.f32 %v2152, %v2162
        %v2164 = vsub.f32 1.0, %v2163
        %v2165 = vmul.f32 %v2162, %v2164
        %v2166 = vadd.f32 %v2162, %v2165
        %vm2167 = vweird.f32 %v2152
        %vm2168 = vweird.f32 %v2162
        %vm2169 = vmor %vm2167, %vm2168
        %v2170 = vsel %vm2169, %v2162, %v2166
        %v2171 = vand.u32 2147483647, %v2152
        %vm2172 = vcmp.eq.f32.partialorder %v2171, 8.507059e+37
        %v2173 = vand.u32 %v2152, 2147483648
        %v2174 = vor.u32 1.1754944e-38, %v2173
        %v2175 = vsel %vm2172, %v2174, %v2170
        %v2176 = vmul.f32 %v2143, %v2175
        %v2177 = vrcp.pop %v2155
        %v2178 = vmul.f32 %v2155, %v2177
        %v2179 = vsub.f32 1.0, %v2178
        %v2180 = vmul.f32 %v2177, %v2179
        %v2181 = vadd.f32 %v2177, %v2180
        %vm2182 = vweird.f32 %v2155
        %vm2183 = vweird.f32 %v2177
        %vm2184 = vmor %vm2182, %vm2183
        %v2185 = vsel %vm2184, %v2177, %v2181
        %v2186 = vand.u32 2147483647, %v2155
        %vm2187 = vcmp.eq.f32.partialorder %v2186, 8.507059e+37
        %v2188 = vand.u32 %v2155, 2147483648
        %v2189 = vor.u32 1.1754944e-38, %v2188
        %v2190 = vsel %vm2187, %v2189, %v2185
        %v2191 = vmul.f32 %v2145, %v2190
        %v2192 = vrcp.pop %v2158
        %v2193 = vmul.f32 %v2158, %v2192
        %v2194 = vsub.f32 1.0, %v2193
        %v2195 = vmul.f32 %v2192, %v2194
        %v2196 = vadd.f32 %v2192, %v2195
        %vm2197 = vweird.f32 %v2158
        %vm2198 = vweird.f32 %v2192
        %vm2199 = vmor %vm2197, %vm2198
        %v2200 = vsel %vm2199, %v2192, %v2196
        %v2201 = vand.u32 2147483647, %v2158
        %vm2202 = vcmp.eq.f32.partialorder %v2201, 8.507059e+37
        %v2203 = vand.u32 %v2158, 2147483648
        %v2204 = vor.u32 1.1754944e-38, %v2203
        %v2205 = vsel %vm2202, %v2204, %v2200
        %v2206 = vmul.f32 %v2147, %v2205
        %v2207 = vrcp.pop %v2161
        %v2208 = vmul.f32 %v2161, %v2207
        %v2209 = vsub.f32 1.0, %v2208
        %v2210 = vmul.f32 %v2207, %v2209
        %v2211 = vadd.f32 %v2207, %v2210
        %vm2212 = vweird.f32 %v2161
        %vm2213 = vweird.f32 %v2207
        %vm2214 = vmor %vm2212, %vm2213
        %v2215 = vsel %vm2214, %v2207, %v2211
        %v2216 = vand.u32 2147483647, %v2161
        %vm2217 = vcmp.eq.f32.partialorder %v2216, 8.507059e+37
        %v2218 = vand.u32 %v2161, 2147483648
        %v2219 = vor.u32 1.1754944e-38, %v2218
        %v2220 = vsel %vm2217, %v2219, %v2215
        %v2221 = vmul.f32 %v2149, %v2220
        %v2222 = vpack.c.bf16 %v2176, %v2176
        %v2223 = vpack.c.bf16 %v2191, %v2191
        %v2224 = vpack.c.bf16 %v2206, %v2206
        %v2225 = vpack.c.bf16 %v2221, %v2221
        %v2226 = vpack.c.bf16 %v2035, %v2035
        %v2227 = vpack.c.bf16 %v2037, %v2037
        %v2228 = vpack.c.bf16 %v2039, %v2039
        %v2229 = vpack.c.bf16 %v2041, %v2041
        %v2231 = vsel %vm1373, %v2222, 0
        %v2234 = vsel %vm1481, %v2226, 0
        %2236 = vmatpush.bf16.msra.mxu0 0
        %2237 = vmatpush.bf16.msra.mxu0 0
        %2238 = vmatpush.bf16.msra.mxu0 0
        %2239 = vmatpush.bf16.msra.mxu0 0
        %2240 = vmatpush.bf16.msra.mxu0 0
        %2241 = vmatpush.bf16.msra.mxu0 0
        %2242 = vmatpush.bf16.msra.mxu0 0
        %2243 = vmatpush.bf16.msra.mxu0 %v2234
        %2244 = vmatmul.bf16.gmra.mxu0 %v2231
        %v2245 = vpop.f32.mrf.mxu0
        %v2246 = vadd.f32 0.0, %v2245
        %v2247 = vpop.f32.mrf.mxu0
        %2248 = vdwg.mxu0
        %v2250 = vsel %vm1373, %v2223, 0
        %v2253 = vsel %vm1481, %v2227, 0
        %2255 = vmatpush.bf16.msra.mxu0 0
        %2256 = vmatpush.bf16.msra.mxu0 0
        %2257 = vmatpush.bf16.msra.mxu0 0
        %2258 = vmatpush.bf16.msra.mxu0 0
        %2259 = vmatpush.bf16.msra.mxu0 0
        %2260 = vmatpush.bf16.msra.mxu0 0
        %2261 = vmatpush.bf16.msra.mxu0 0
        %2262 = vmatpush.bf16.msra.mxu0 %v2253
        %2263 = vmatmul.bf16.gmra.mxu0 %v2250
        %v2264 = vpop.f32.mrf.mxu0
        %v2265 = vadd.f32 0.0, %v2264
        %v2266 = vpop.f32.mrf.mxu0
        %2267 = vdwg.mxu0
        %v2269 = vsel %vm1373, %v2224, 0
        %v2272 = vsel %vm1481, %v2228, 0
        %2274 = vmatpush.bf16.msra.mxu0 0
        %2275 = vmatpush.bf16.msra.mxu0 0
        %2276 = vmatpush.bf16.msra.mxu0 0
        %2277 = vmatpush.bf16.msra.mxu0 0
        %2278 = vmatpush.bf16.msra.mxu0 0
        %2279 = vmatpush.bf16.msra.mxu0 0
        %2280 = vmatpush.bf16.msra.mxu0 0
        %2281 = vmatpush.bf16.msra.mxu0 %v2272
        %2282 = vmatmul.bf16.gmra.mxu0 %v2269
        %v2283 = vpop.f32.mrf.mxu0
        %v2284 = vadd.f32 0.0, %v2283
        %v2285 = vpop.f32.mrf.mxu0
        %2286 = vdwg.mxu0
        %v2288 = vsel %vm1373, %v2225, 0
        %v2291 = vsel %vm1481, %v2229, 0
        %2293 = vmatpush.bf16.msra.mxu0 0
        %2294 = vmatpush.bf16.msra.mxu0 0
        %2295 = vmatpush.bf16.msra.mxu0 0
        %2296 = vmatpush.bf16.msra.mxu0 0
        %2297 = vmatpush.bf16.msra.mxu0 0
        %2298 = vmatpush.bf16.msra.mxu0 0
        %2299 = vmatpush.bf16.msra.mxu0 0
        %2300 = vmatpush.bf16.msra.mxu0 %v2291
        %2301 = vmatmul.bf16.gmra.mxu0 %v2288
        %v2302 = vpop.f32.mrf.mxu0
        %v2303 = vadd.f32 0.0, %v2302
        %v2304 = vpop.f32.mrf.mxu0
        %2305 = vdwg.mxu0
        %v2306 = vrot.slane %v2284, 4
        %v2307 = vsel %vm938, %v2306, %v2246
        %v2308 = vrot.slane %v2246, 4
        %v2309 = vsel %vm938, %v2284, %v2308
        %v2311 = vunpack.c.l.s4 1983009808
        %v2312 = vunpack.c.0.s8 %v2311
        %v2313 = vperm.slane %v2307, %v2312
        %v2315 = vunpack.c.l.s4 1983009808
        %v2316 = vunpack.c.0.s8 %v2315
        %v2317 = vperm.slane %v2309, %v2316
        %v2318 = vrot.slane %v2303, 4
        %v2319 = vsel %vm938, %v2318, %v2265
        %v2320 = vrot.slane %v2265, 4
        %v2321 = vsel %vm938, %v2303, %v2320
        %v2323 = vunpack.c.l.s4 1983009808
        %v2324 = vunpack.c.0.s8 %v2323
        %v2325 = vperm.slane %v2319, %v2324
        %v2327 = vunpack.c.l.s4 1983009808
        %v2328 = vunpack.c.0.s8 %v2327
        %v2329 = vperm.slane %v2321, %v2328
        %v2330 = vrot.slane %v2325, 4
        %v2331 = vsel %vm938, %v2330, %v2313
        %v2332 = vrot.slane %v2313, 4
        %v2333 = vsel %vm938, %v2325, %v2332
        %v2335 = vunpack.c.l.s4 1934713408
        %v2336 = vunpack.c.0.s8 %v2335
        %v2337 = vperm.slane %v2331, %v2336
        %v2339 = vunpack.c.l.s4 1934713408
        %v2340 = vunpack.c.0.s8 %v2339
        %v2341 = vperm.slane %v2333, %v2340
        %v2342 = vrot.slane %v2329, 4
        %v2343 = vsel %vm938, %v2342, %v2317
        %v2344 = vrot.slane %v2317, 4
        %v2345 = vsel %vm938, %v2329, %v2344
        %v2347 = vunpack.c.l.s4 1934713408
        %v2348 = vunpack.c.0.s8 %v2347
        %v2349 = vperm.slane %v2343, %v2348
        %v2351 = vunpack.c.l.s4 1934713408
        %v2352 = vunpack.c.0.s8 %v2351
        %v2353 = vperm.slane %v2345, %v2352
        %v2354 = vrot.slane %v2337, 4
        %v2355 = vsel %vm938, 0.0, %v2354
        %v2356 = vrot.slane %v2341, 4
        %v2357 = vsel %vm938, 0.0, %v2356
        %v2358 = vrot.slane %v2349, 4
        %v2359 = vsel %vm938, 0.0, %v2358
        %v2360 = vrot.slane %v2353, 4
        %v2361 = vsel %vm938, 0.0, %v2360
        %v2362 = vsel %vm938, %v2356, %v2337
        %v2364 = vunpack.c.l.s4 1983009808
        %v2365 = vunpack.c.0.s8 %v2364
        %v2366 = vperm.slane %v2362, %v2365
        %v2367 = vrot.slane %v2357, 4
        %v2368 = vsel %vm938, %v2367, %v2355
        %v2370 = vunpack.c.l.s4 1983009808
        %v2371 = vunpack.c.0.s8 %v2370
        %v2372 = vperm.slane %v2368, %v2371
        %v2373 = vsel %vm938, %v2360, %v2349
        %v2375 = vunpack.c.l.s4 1983009808
        %v2376 = vunpack.c.0.s8 %v2375
        %v2377 = vperm.slane %v2373, %v2376
        %v2378 = vrot.slane %v2361, 4
        %v2379 = vsel %vm938, %v2378, %v2359
        %v2381 = vunpack.c.l.s4 1983009808
        %v2382 = vunpack.c.0.s8 %v2381
        %v2383 = vperm.slane %v2379, %v2382
        %v2384 = vrot.slane %v2372, 4
        %v2385 = vsel %vm938, %v2384, %v2366
        %v2386 = vrot.slane %v2366, 4
        %v2387 = vsel %vm938, %v2372, %v2386
        %v2389 = vunpack.c.l.s4 1934713408
        %v2390 = vunpack.c.0.s8 %v2389
        %v2391 = vperm.slane %v2385, %v2390
        %v2393 = vunpack.c.l.s4 1934713408
        %v2394 = vunpack.c.0.s8 %v2393
        %v2395 = vperm.slane %v2387, %v2394
        %v2396 = vrot.slane %v2383, 4
        %v2397 = vsel %vm938, %v2396, %v2377
        %v2398 = vrot.slane %v2377, 4
        %v2399 = vsel %vm938, %v2383, %v2398
        %v2401 = vunpack.c.l.s4 1934713408
        %v2402 = vunpack.c.0.s8 %v2401
        %v2403 = vperm.slane %v2397, %v2402
        %v2405 = vunpack.c.l.s4 1934713408
        %v2406 = vunpack.c.0.s8 %v2405
        %v2407 = vperm.slane %v2399, %v2406
        %v2408 = vrot.slane %v2403, 4
        %v2409 = vsel %vm938, %v2408, %v2391
        %v2410 = vrot.slane %v2391, 4
        %v2411 = vsel %vm938, %v2403, %v2410
        %v2412 = vrot.slane %v2407, 4
        %v2413 = vsel %vm938, %v2412, %v2395
        %v2414 = vrot.slane %v2395, 4
        %v2415 = vsel %vm938, %v2407, %v2414
        %2417 = vrot.lane.b32.xlu0 %v2411, 32
        %v2418 = vpop.permute.xlu0 %2417
        %2421 = vrot.lane.b32.xlu0 %v2413, 64
        %v2422 = vpop.permute.xlu0 %2421
        %2425 = vrot.lane.b32.xlu0 %v2415, 96
        %v2426 = vpop.permute.xlu0 %2425
        %v2428 = vsel %vm1296, %v2409, %v2418
        %v2429 = vsel %vm1678, %v2428, %v2422
        %v2430 = vsel %vm1680, %v2429, %v2426
        %v2431 = vpack.c.bf16 %v2430, %v1681
        %v2432 = vld [vmem:[%s545] sm:$0xf]
        %v2433 = vld [vmem:[%s545 + $0x4] sm:$0xf]
        %v2434 = vld [vmem:[%s545 + $0x8] sm:$0xf]
        %v2435 = vld [vmem:[%s545 + $0xc] sm:$0xf]
        %v2436 = vld [vmem:[%s545 + $0x10] sm:$0xf]
        %v2437 = vld [vmem:[%s545 + $0x14] sm:$0xf]
        %v2438 = vld [vmem:[%s545 + $0x18] sm:$0xf]
        %v2439 = vld [vmem:[%s545 + $0x1c] sm:$0xf]
        %v2440 = vld [vmem:[%s545 + $0x20] sm:$0xf]
        %v2441 = vld [vmem:[%s545 + $0x24] sm:$0xf]
        %v2442 = vld [vmem:[%s545 + $0x28] sm:$0xf]
        %v2443 = vld [vmem:[%s545 + $0x2c] sm:$0xf]
        %v2444 = vld [vmem:[%s545 + $0x30] sm:$0xf]
        %v2445 = vld [vmem:[%s545 + $0x34] sm:$0xf]
        %v2446 = vld [vmem:[%s545 + $0x38] sm:$0xf]
        %v2447 = vld [vmem:[%s545 + $0x3c] sm:$0xf]
        %v2464 = vunpack.c.l.b16 %v2432
        %v2465 = vunpack.c.l.b16 %v2433
        %v2466 = vunpack.c.l.b16 %v2434
        %v2467 = vunpack.c.l.b16 %v2435
        %v2468 = vunpack.c.l.b16 %v2436
        %v2469 = vunpack.c.l.b16 %v2437
        %v2470 = vunpack.c.l.b16 %v2438
        %v2471 = vunpack.c.l.b16 %v2439
        %v2472 = vunpack.c.l.b16 %v2440
        %v2473 = vunpack.c.l.b16 %v2441
        %v2474 = vunpack.c.l.b16 %v2442
        %v2475 = vunpack.c.l.b16 %v2443
        %v2476 = vunpack.c.l.b16 %v2444
        %v2477 = vunpack.c.l.b16 %v2445
        %v2478 = vunpack.c.l.b16 %v2446
        %v2479 = vunpack.c.l.b16 %v2447
        %v2480 = vpack.c.b16 %v2465, %v2464
        %v2481 = vpack.c.b16 %v2467, %v2466
        %v2482 = vpack.c.b16 %v2469, %v2468
        %v2483 = vpack.c.b16 %v2471, %v2470
        %v2484 = vpack.c.b16 %v2473, %v2472
        %v2485 = vpack.c.b16 %v2475, %v2474
        %v2486 = vpack.c.b16 %v2477, %v2476
        %v2487 = vpack.c.b16 %v2479, %v2478
        %2496 = vmatpush.bf16.msra.mxu0 %v2487
        %2497 = vmatpush.bf16.msra.mxu0 %v2486
        %2498 = vmatpush.bf16.msra.mxu0 %v2485
        %2499 = vmatpush.bf16.msra.mxu0 %v2484
        %2500 = vmatpush.bf16.msra.mxu0 %v2483
        %2501 = vmatpush.bf16.msra.mxu0 %v2482
        %2502 = vmatpush.bf16.msra.mxu0 %v2481
        %2503 = vmatpush.bf16.msra.mxu0 %v2480
        %2504 = vmatmul.bf16.gmra.mxu0 %v2431
        %v2505 = vpop.f32.mrf.mxu0
        %v2506 = vadd.f32 0.0, %v2505
        %v2507 = vpop.f32.mrf.mxu0
        %v2508 = vadd.f32 0.0, %v2507
        %2509 = vdwg.mxu0
        %v2510 = vadd.f32 %v657, %v2506
        %v2511 = vadd.f32 %v658, %v2508
        %v2512 = vperm.slane %v659, 4
        %v2513 = vadd.f32 %v2510, %v2512
        %v2514 = vadd.f32 %v2511, %v2512
        %2515 = vadd.xlane.f32.xlu0 %v2513
        %v2516 = vpop.xlane.xlu0 %2515
        %2517 = vadd.xlane.f32.xlu0 %v2514
        %v2518 = vpop.xlane.xlu0 %2517
        %v2519 = vmul.f32 %v2516, %v670
        %v2520 = vmul.f32 %v2518, %v670
        %v2521 = vsub.f32 %v2513, %v2519
        %v2522 = vsub.f32 %v2514, %v2520
        %v2523 = vmul.f32 %v2521, %v2521
        %v2524 = vmul.f32 %v2522, %v2522
        %2525 = vadd.xlane.f32.xlu0 %v2523
        %v2526 = vpop.xlane.xlu0 %2525
        %2527 = vadd.xlane.f32.xlu0 %v2524
        %v2528 = vpop.xlane.xlu0 %2527
        %v2529 = vmul.f32 %v2526, %v670
        %v2530 = vmul.f32 %v2528, %v670
        %v2531 = vadd.f32 %v2529, 1e-05
        %v2532 = vadd.f32 %v2530, 1e-05
        %v2533 = vrsqrt.pop %v2531
        %v2534 = vmul.f32 %v2533, %v2531
        %v2535 = vmul.f32 %v2534, %v2533
        %v2536 = vmul.f32 0.5, %v2535
        %v2537 = vsub.f32 1.5, %v2536
        %v2538 = vmul.f32 %v2533, %v2537
        %vm2539 = vweird.f32 %v2531
        %vm2540 = vweird.f32 %v2533
        %vm2541 = vmor %vm2539, %vm2540
        %v2542 = vsel %vm2541, %v2533, %v2538
        %v2543 = vrsqrt.pop %v2532
        %v2544 = vmul.f32 %v2543, %v2532
        %v2545 = vmul.f32 %v2544, %v2543
        %v2546 = vmul.f32 0.5, %v2545
        %v2547 = vsub.f32 1.5, %v2546
        %v2548 = vmul.f32 %v2543, %v2547
        %vm2549 = vweird.f32 %v2532
        %vm2550 = vweird.f32 %v2543
        %vm2551 = vmor %vm2549, %vm2550
        %v2552 = vsel %vm2551, %v2543, %v2548
        %v2553 = vmul.f32 %v2521, %v2542
        %v2554 = vmul.f32 %v2522, %v2552
        %v2555 = vperm.slane %v659, 2
        %v2556 = vmul.f32 %v2553, %v2555
        %v2557 = vmul.f32 %v2554, %v2555
        %v2558 = vperm.slane %v659, 3
        %v2559 = vadd.f32 %v2556, %v2558
        %v2560 = vadd.f32 %v2557, %v2558
        %v2561 = vpack.c.bf16 %v2560, %v2559
        %v2562 = vld [vmem:[%s555] sm:$0xff]
        %v2563 = vld [vmem:[%s555 + $0x8] sm:$0xff]
        %v2564 = vld [vmem:[%s555 + $0x10] sm:$0xff]
        %v2565 = vld [vmem:[%s555 + $0x18] sm:$0xff]
        %v2566 = vld [vmem:[%s555 + $0x20] sm:$0xff]
        %v2567 = vld [vmem:[%s555 + $0x28] sm:$0xff]
        %v2568 = vld [vmem:[%s555 + $0x30] sm:$0xff]
        %v2569 = vld [vmem:[%s555 + $0x38] sm:$0xff]
        %v2570 = vld [vmem:[%s555 + $0x40] sm:$0xff]
        %v2571 = vld [vmem:[%s555 + $0x48] sm:$0xff]
        %v2572 = vld [vmem:[%s555 + $0x50] sm:$0xff]
        %v2573 = vld [vmem:[%s555 + $0x58] sm:$0xff]
        %v2574 = vld [vmem:[%s555 + $0x60] sm:$0xff]
        %v2575 = vld [vmem:[%s555 + $0x68] sm:$0xff]
        %v2576 = vld [vmem:[%s555 + $0x70] sm:$0xff]
        %v2577 = vld [vmem:[%s555 + $0x78] sm:$0xff]
        %v2578 = vld [vmem:[%s555 + $0x80] sm:$0xff]
        %v2579 = vld [vmem:[%s555 + $0x88] sm:$0xff]
        %v2580 = vld [vmem:[%s555 + $0x90] sm:$0xff]
        %v2581 = vld [vmem:[%s555 + $0x98] sm:$0xff]
        %v2582 = vld [vmem:[%s555 + $0xa0] sm:$0xff]
        %v2583 = vld [vmem:[%s555 + $0xa8] sm:$0xff]
        %v2584 = vld [vmem:[%s555 + $0xb0] sm:$0xff]
        %v2585 = vld [vmem:[%s555 + $0xb8] sm:$0xff]
        %v2586 = vld [vmem:[%s555 + $0xc0] sm:$0xff]
        %v2587 = vld [vmem:[%s555 + $0xc8] sm:$0xff]
        %v2588 = vld [vmem:[%s555 + $0xd0] sm:$0xff]
        %v2589 = vld [vmem:[%s555 + $0xd8] sm:$0xff]
        %v2590 = vld [vmem:[%s555 + $0xe0] sm:$0xff]
        %v2591 = vld [vmem:[%s555 + $0xe8] sm:$0xff]
        %v2592 = vld [vmem:[%s555 + $0xf0] sm:$0xff]
        %v2593 = vld [vmem:[%s555 + $0xf8] sm:$0xff]
        %v2594 = vld [vmem:[%s565] sm:$0xf]
        %v2596 = vperm.slane %v2594, 0
        %v2597 = vperm.slane %v2594, 1
        %v2598 = vperm.slane %v2594, 2
        %v2599 = vperm.slane %v2594, 3
        %v2636 = vunpack.c.l.b16 %v2562
        %v2637 = vunpack.c.h.b16 %v2562
        %v2638 = vunpack.c.l.b16 %v2563
        %v2639 = vunpack.c.h.b16 %v2563
        %v2640 = vunpack.c.l.b16 %v2564
        %v2641 = vunpack.c.h.b16 %v2564
        %v2642 = vunpack.c.l.b16 %v2565
        %v2643 = vunpack.c.h.b16 %v2565
        %v2644 = vunpack.c.l.b16 %v2566
        %v2645 = vunpack.c.h.b16 %v2566
        %v2646 = vunpack.c.l.b16 %v2567
        %v2647 = vunpack.c.h.b16 %v2567
        %v2648 = vunpack.c.l.b16 %v2568
        %v2649 = vunpack.c.h.b16 %v2568
        %v2650 = vunpack.c.l.b16 %v2569
        %v2651 = vunpack.c.h.b16 %v2569
        %v2652 = vunpack.c.l.b16 %v2570
        %v2653 = vunpack.c.h.b16 %v2570
        %v2654 = vunpack.c.l.b16 %v2571
        %v2655 = vunpack.c.h.b16 %v2571
        %v2656 = vunpack.c.l.b16 %v2572
        %v2657 = vunpack.c.h.b16 %v2572
        %v2658 = vunpack.c.l.b16 %v2573
        %v2659 = vunpack.c.h.b16 %v2573
        %v2660 = vunpack.c.l.b16 %v2574
        %v2661 = vunpack.c.h.b16 %v2574
        %v2662 = vunpack.c.l.b16 %v2575
        %v2663 = vunpack.c.h.b16 %v2575
        %v2664 = vunpack.c.l.b16 %v2576
        %v2665 = vunpack.c.h.b16 %v2576
        %v2666 = vunpack.c.l.b16 %v2577
        %v2667 = vunpack.c.h.b16 %v2577
        %v2668 = vunpack.c.l.b16 %v2578
        %v2669 = vunpack.c.h.b16 %v2578
        %v2670 = vunpack.c.l.b16 %v2579
        %v2671 = vunpack.c.h.b16 %v2579
        %v2672 = vunpack.c.l.b16 %v2580
        %v2673 = vunpack.c.h.b16 %v2580
        %v2674 = vunpack.c.l.b16 %v2581
        %v2675 = vunpack.c.h.b16 %v2581
        %v2676 = vunpack.c.l.b16 %v2582
        %v2677 = vunpack.c.h.b16 %v2582
        %v2678 = vunpack.c.l.b16 %v2583
        %v2679 = vunpack.c.h.b16 %v2583
        %v2680 = vunpack.c.l.b16 %v2584
        %v2681 = vunpack.c.h.b16 %v2584
        %v2682 = vunpack.c.l.b16 %v2585
        %v2683 = vunpack.c.h.b16 %v2585
        %v2684 = vunpack.c.l.b16 %v2586
        %v2685 = vunpack.c.h.b16 %v2586
        %v2686 = vunpack.c.l.b16 %v2587
        %v2687 = vunpack.c.h.b16 %v2587
        %v2688 = vunpack.c.l.b16 %v2588
        %v2689 = vunpack.c.h.b16 %v2588
        %v2690 = vunpack.c.l.b16 %v2589
        %v2691 = vunpack.c.h.b16 %v2589
        %v2692 = vunpack.c.l.b16 %v2590
        %v2693 = vunpack.c.h.b16 %v2590
        %v2694 = vunpack.c.l.b16 %v2591
        %v2695 = vunpack.c.h.b16 %v2591
        %v2696 = vunpack.c.l.b16 %v2592
        %v2697 = vunpack.c.h.b16 %v2592
        %v2698 = vunpack.c.l.b16 %v2593
        %v2699 = vunpack.c.h.b16 %v2593
        %v2700 = vpack.c.b16 %v2640, %v2636
        %v2701 = vpack.c.b16 %v2641, %v2637
        %v2702 = vpack.c.b16 %v2642, %v2638
        %v2703 = vpack.c.b16 %v2643, %v2639
        %v2704 = vpack.c.b16 %v2648, %v2644
        %v2705 = vpack.c.b16 %v2649, %v2645
        %v2706 = vpack.c.b16 %v2650, %v2646
        %v2707 = vpack.c.b16 %v2651, %v2647
        %v2708 = vpack.c.b16 %v2656, %v2652
        %v2709 = vpack.c.b16 %v2657, %v2653
        %v2710 = vpack.c.b16 %v2658, %v2654
        %v2711 = vpack.c.b16 %v2659, %v2655
        %v2712 = vpack.c.b16 %v2664, %v2660
        %v2713 = vpack.c.b16 %v2665, %v2661
        %v2714 = vpack.c.b16 %v2666, %v2662
        %v2715 = vpack.c.b16 %v2667, %v2663
        %v2716 = vpack.c.b16 %v2672, %v2668
        %v2717 = vpack.c.b16 %v2673, %v2669
        %v2718 = vpack.c.b16 %v2674, %v2670
        %v2719 = vpack.c.b16 %v2675, %v2671
        %v2720 = vpack.c.b16 %v2680, %v2676
        %v2721 = vpack.c.b16 %v2681, %v2677
        %v2722 = vpack.c.b16 %v2682, %v2678
        %v2723 = vpack.c.b16 %v2683, %v2679
        %v2724 = vpack.c.b16 %v2688, %v2684
        %v2725 = vpack.c.b16 %v2689, %v2685
        %v2726 = vpack.c.b16 %v2690, %v2686
        %v2727 = vpack.c.b16 %v2691, %v2687
        %v2728 = vpack.c.b16 %v2696, %v2692
        %v2729 = vpack.c.b16 %v2697, %v2693
        %v2730 = vpack.c.b16 %v2698, %v2694
        %v2731 = vpack.c.b16 %v2699, %v2695
        %2764 = vmatpush.bf16.msra.mxu0 %v2728
        %2765 = vmatpush.bf16.msra.mxu0 %v2724
        %2766 = vmatpush.bf16.msra.mxu0 %v2720
        %2767 = vmatpush.bf16.msra.mxu0 %v2716
        %2768 = vmatpush.bf16.msra.mxu0 %v2712
        %2769 = vmatpush.bf16.msra.mxu0 %v2708
        %2770 = vmatpush.bf16.msra.mxu0 %v2704
        %2771 = vmatpush.bf16.msra.mxu0 %v2700
        %2772 = vmatmul.bf16.gmra.mxu0 %v2561
        %v2773 = vpop.f32.mrf.mxu0
        %v2774 = vadd.f32 %v2596, %v2773
        %v2775 = vpop.f32.mrf.mxu0
        %v2776 = vadd.f32 %v2596, %v2775
        %2777 = vdwg.mxu0
        %2778 = vmatpush.bf16.msra.mxu0 %v2729
        %2779 = vmatpush.bf16.msra.mxu0 %v2725
        %2780 = vmatpush.bf16.msra.mxu0 %v2721
        %2781 = vmatpush.bf16.msra.mxu0 %v2717
        %2782 = vmatpush.bf16.msra.mxu0 %v2713
        %2783 = vmatpush.bf16.msra.mxu0 %v2709
        %2784 = vmatpush.bf16.msra.mxu0 %v2705
        %2785 = vmatpush.bf16.msra.mxu0 %v2701
        %2786 = vmatmul.bf16.gmra.mxu0 %v2561
        %v2787 = vpop.f32.mrf.mxu0
        %v2788 = vadd.f32 %v2597, %v2787
        %v2789 = vpop.f32.mrf.mxu0
        %v2790 = vadd.f32 %v2597, %v2789
        %2791 = vdwg.mxu0
        %2792 = vmatpush.bf16.msra.mxu0 %v2730
        %2793 = vmatpush.bf16.msra.mxu0 %v2726
        %2794 = vmatpush.bf16.msra.mxu0 %v2722
        %2795 = vmatpush.bf16.msra.mxu0 %v2718
        %2796 = vmatpush.bf16.msra.mxu0 %v2714
        %2797 = vmatpush.bf16.msra.mxu0 %v2710
        %2798 = vmatpush.bf16.msra.mxu0 %v2706
        %2799 = vmatpush.bf16.msra.mxu0 %v2702
        %2800 = vmatmul.bf16.gmra.mxu0 %v2561
        %v2801 = vpop.f32.mrf.mxu0
        %v2802 = vadd.f32 %v2598, %v2801
        %v2803 = vpop.f32.mrf.mxu0
        %v2804 = vadd.f32 %v2598, %v2803
        %2805 = vdwg.mxu0
        %2806 = vmatpush.bf16.msra.mxu0 %v2731
        %2807 = vmatpush.bf16.msra.mxu0 %v2727
        %2808 = vmatpush.bf16.msra.mxu0 %v2723
        %2809 = vmatpush.bf16.msra.mxu0 %v2719
        %2810 = vmatpush.bf16.msra.mxu0 %v2715
        %2811 = vmatpush.bf16.msra.mxu0 %v2711
        %2812 = vmatpush.bf16.msra.mxu0 %v2707
        %2813 = vmatpush.bf16.msra.mxu0 %v2703
        %2814 = vmatmul.bf16.gmra.mxu0 %v2561
        %v2815 = vpop.f32.mrf.mxu0
        %v2816 = vadd.f32 %v2599, %v2815
        %v2817 = vpop.f32.mrf.mxu0
        %v2818 = vadd.f32 %v2599, %v2817
        %2819 = vdwg.mxu0
        %v2820 = vmul.f32 %v2774, 1.702
        %v2821 = vmul.f32 %v2788, 1.702
        %v2822 = vmul.f32 %v2802, 1.702
        %v2823 = vmul.f32 %v2816, 1.702
        %v2824 = vmul.f32 %v2776, 1.702
        %v2825 = vmul.f32 %v2790, 1.702
        %v2826 = vmul.f32 %v2804, 1.702
        %v2827 = vmul.f32 %v2818, 1.702
        %v2828 = vxor.u32 %v2820, 2147483648
        %v2829 = vxor.u32 %v2821, 2147483648
        %v2830 = vxor.u32 %v2822, 2147483648
        %v2831 = vxor.u32 %v2823, 2147483648
        %v2832 = vxor.u32 %v2824, 2147483648
        %v2833 = vxor.u32 %v2825, 2147483648
        %v2834 = vxor.u32 %v2826, 2147483648
        %v2835 = vxor.u32 %v2827, 2147483648
        %v2836 = vmul.f32 %v2828, 1.442695
        %v2837 = vpow.pop %v2836
        %v2838 = vmul.f32 %v2829, 1.442695
        %v2839 = vpow.pop %v2838
        %v2840 = vmul.f32 %v2830, 1.442695
        %v2841 = vpow.pop %v2840
        %v2842 = vmul.f32 %v2831, 1.442695
        %v2843 = vpow.pop %v2842
        %v2844 = vmul.f32 %v2832, 1.442695
        %v2845 = vpow.pop %v2844
        %v2846 = vmul.f32 %v2833, 1.442695
        %v2847 = vpow.pop %v2846
        %v2848 = vmul.f32 %v2834, 1.442695
        %v2849 = vpow.pop %v2848
        %v2850 = vmul.f32 %v2835, 1.442695
        %v2851 = vpow.pop %v2850
        %v2852 = vadd.f32 %v2837, 1.0
        %v2853 = vadd.f32 %v2839, 1.0
        %v2854 = vadd.f32 %v2841, 1.0
        %v2855 = vadd.f32 %v2843, 1.0
        %v2856 = vadd.f32 %v2845, 1.0
        %v2857 = vadd.f32 %v2847, 1.0
        %v2858 = vadd.f32 %v2849, 1.0
        %v2859 = vadd.f32 %v2851, 1.0
        %v2860 = vrcp.pop %v2852
        %v2861 = vmul.f32 %v2852, %v2860
        %v2862 = vsub.f32 1.0, %v2861
        %v2863 = vmul.f32 %v2860, %v2862
        %v2864 = vadd.f32 %v2860, %v2863
        %vm2865 = vweird.f32 %v2852
        %vm2866 = vweird.f32 %v2860
        %vm2867 = vmor %vm2865, %vm2866
        %v2868 = vsel %vm2867, %v2860, %v2864
        %v2869 = vand.u32 2147483647, %v2852
        %vm2870 = vcmp.eq.f32.partialorder %v2869, 8.507059e+37
        %v2871 = vand.u32 %v2852, 2147483648
        %v2872 = vor.u32 1.1754944e-38, %v2871
        %v2873 = vsel %vm2870, %v2872, %v2868
        %v2874 = vmul.f32 1.0, %v2873
        %v2875 = vrcp.pop %v2853
        %v2876 = vmul.f32 %v2853, %v2875
        %v2877 = vsub.f32 1.0, %v2876
        %v2878 = vmul.f32 %v2875, %v2877
        %v2879 = vadd.f32 %v2875, %v2878
        %vm2880 = vweird.f32 %v2853
        %vm2881 = vweird.f32 %v2875
        %vm2882 = vmor %vm2880, %vm2881
        %v2883 = vsel %vm2882, %v2875, %v2879
        %v2884 = vand.u32 2147483647, %v2853
        %vm2885 = vcmp.eq.f32.partialorder %v2884, 8.507059e+37
        %v2886 = vand.u32 %v2853, 2147483648
        %v2887 = vor.u32 1.1754944e-38, %v2886
        %v2888 = vsel %vm2885, %v2887, %v2883
        %v2889 = vmul.f32 1.0, %v2888
        %v2890 = vrcp.pop %v2854
        %v2891 = vmul.f32 %v2854, %v2890
        %v2892 = vsub.f32 1.0, %v2891
        %v2893 = vmul.f32 %v2890, %v2892
        %v2894 = vadd.f32 %v2890, %v2893
        %vm2895 = vweird.f32 %v2854
        %vm2896 = vweird.f32 %v2890
        %vm2897 = vmor %vm2895, %vm2896
        %v2898 = vsel %vm2897, %v2890, %v2894
        %v2899 = vand.u32 2147483647, %v2854
        %vm2900 = vcmp.eq.f32.partialorder %v2899, 8.507059e+37
        %v2901 = vand.u32 %v2854, 2147483648
        %v2902 = vor.u32 1.1754944e-38, %v2901
        %v2903 = vsel %vm2900, %v2902, %v2898
        %v2904 = vmul.f32 1.0, %v2903
        %v2905 = vrcp.pop %v2855
        %v2906 = vmul.f32 %v2855, %v2905
        %v2907 = vsub.f32 1.0, %v2906
        %v2908 = vmul.f32 %v2905, %v2907
        %v2909 = vadd.f32 %v2905, %v2908
        %vm2910 = vweird.f32 %v2855
        %vm2911 = vweird.f32 %v2905
        %vm2912 = vmor %vm2910, %vm2911
        %v2913 = vsel %vm2912, %v2905, %v2909
        %v2914 = vand.u32 2147483647, %v2855
        %vm2915 = vcmp.eq.f32.partialorder %v2914, 8.507059e+37
        %v2916 = vand.u32 %v2855, 2147483648
        %v2917 = vor.u32 1.1754944e-38, %v2916
        %v2918 = vsel %vm2915, %v2917, %v2913
        %v2919 = vmul.f32 1.0, %v2918
        %v2920 = vrcp.pop %v2856
        %v2921 = vmul.f32 %v2856, %v2920
        %v2922 = vsub.f32 1.0, %v2921
        %v2923 = vmul.f32 %v2920, %v2922
        %v2924 = vadd.f32 %v2920, %v2923
        %vm2925 = vweird.f32 %v2856
        %vm2926 = vweird.f32 %v2920
        %vm2927 = vmor %vm2925, %vm2926
        %v2928 = vsel %vm2927, %v2920, %v2924
        %v2929 = vand.u32 2147483647, %v2856
        %vm2930 = vcmp.eq.f32.partialorder %v2929, 8.507059e+37
        %v2931 = vand.u32 %v2856, 2147483648
        %v2932 = vor.u32 1.1754944e-38, %v2931
        %v2933 = vsel %vm2930, %v2932, %v2928
        %v2934 = vmul.f32 1.0, %v2933
        %v2935 = vrcp.pop %v2857
        %v2936 = vmul.f32 %v2857, %v2935
        %v2937 = vsub.f32 1.0, %v2936
        %v2938 = vmul.f32 %v2935, %v2937
        %v2939 = vadd.f32 %v2935, %v2938
        %vm2940 = vweird.f32 %v2857
        %vm2941 = vweird.f32 %v2935
        %vm2942 = vmor %vm2940, %vm2941
        %v2943 = vsel %vm2942, %v2935, %v2939
        %v2944 = vand.u32 2147483647, %v2857
        %vm2945 = vcmp.eq.f32.partialorder %v2944, 8.507059e+37
        %v2946 = vand.u32 %v2857, 2147483648
        %v2947 = vor.u32 1.1754944e-38, %v2946
        %v2948 = vsel %vm2945, %v2947, %v2943
        %v2949 = vmul.f32 1.0, %v2948
        %v2950 = vrcp.pop %v2858
        %v2951 = vmul.f32 %v2858, %v2950
        %v2952 = vsub.f32 1.0, %v2951
        %v2953 = vmul.f32 %v2950, %v2952
        %v2954 = vadd.f32 %v2950, %v2953
        %vm2955 = vweird.f32 %v2858
        %vm2956 = vweird.f32 %v2950
        %vm2957 = vmor %vm2955, %vm2956
        %v2958 = vsel %vm2957, %v2950, %v2954
        %v2959 = vand.u32 2147483647, %v2858
        %vm2960 = vcmp.eq.f32.partialorder %v2959, 8.507059e+37
        %v2961 = vand.u32 %v2858, 2147483648
        %v2962 = vor.u32 1.1754944e-38, %v2961
        %v2963 = vsel %vm2960, %v2962, %v2958
        %v2964 = vmul.f32 1.0, %v2963
        %v2965 = vrcp.pop %v2859
        %v2966 = vmul.f32 %v2859, %v2965
        %v2967 = vsub.f32 1.0, %v2966
        %v2968 = vmul.f32 %v2965, %v2967
        %v2969 = vadd.f32 %v2965, %v2968
        %vm2970 = vweird.f32 %v2859
        %vm2971 = vweird.f32 %v2965
        %vm2972 = vmor %vm2970, %vm2971
        %v2973 = vsel %vm2972, %v2965, %v2969
        %v2974 = vand.u32 2147483647, %v2859
        %vm2975 = vcmp.eq.f32.partialorder %v2974, 8.507059e+37
        %v2976 = vand.u32 %v2859, 2147483648
        %v2977 = vor.u32 1.1754944e-38, %v2976
        %v2978 = vsel %vm2975, %v2977, %v2973
        %v2979 = vmul.f32 1.0, %v2978
        %v2980 = vmul.f32 %v2774, %v2874
        %v2981 = vmul.f32 %v2788, %v2889
        %v2982 = vmul.f32 %v2802, %v2904
        %v2983 = vmul.f32 %v2816, %v2919
        %v2984 = vmul.f32 %v2776, %v2934
        %v2985 = vmul.f32 %v2790, %v2949
        %v2986 = vmul.f32 %v2804, %v2964
        %v2987 = vmul.f32 %v2818, %v2979
        %v2988 = vpack.c.bf16 %v2984, %v2980
        %v2989 = vpack.c.bf16 %v2985, %v2981
        %v2990 = vpack.c.bf16 %v2986, %v2982
        %v2991 = vpack.c.bf16 %v2987, %v2983
        %v2992 = vld [vmem:[%s575] sm:$0xf]
        %v2993 = vld [vmem:[%s575 + $0x4] sm:$0xf]
        %v2994 = vld [vmem:[%s575 + $0x8] sm:$0xf]
        %v2995 = vld [vmem:[%s575 + $0xc] sm:$0xf]
        %v2996 = vld [vmem:[%s575 + $0x10] sm:$0xf]
        %v2997 = vld [vmem:[%s575 + $0x14] sm:$0xf]
        %v2998 = vld [vmem:[%s575 + $0x18] sm:$0xf]
        %v2999 = vld [vmem:[%s575 + $0x1c] sm:$0xf]
        %v3000 = vld [vmem:[%s575 + $0x20] sm:$0xf]
        %v3001 = vld [vmem:[%s575 + $0x24] sm:$0xf]
        %v3002 = vld [vmem:[%s575 + $0x28] sm:$0xf]
        %v3003 = vld [vmem:[%s575 + $0x2c] sm:$0xf]
        %v3004 = vld [vmem:[%s575 + $0x30] sm:$0xf]
        %v3005 = vld [vmem:[%s575 + $0x34] sm:$0xf]
        %v3006 = vld [vmem:[%s575 + $0x38] sm:$0xf]
        %v3007 = vld [vmem:[%s575 + $0x3c] sm:$0xf]
        %v3008 = vld [vmem:[%s575 + $0x40] sm:$0xf]
        %v3009 = vld [vmem:[%s575 + $0x44] sm:$0xf]
        %v3010 = vld [vmem:[%s575 + $0x48] sm:$0xf]
        %v3011 = vld [vmem:[%s575 + $0x4c] sm:$0xf]
        %v3012 = vld [vmem:[%s575 + $0x50] sm:$0xf]
        %v3013 = vld [vmem:[%s575 + $0x54] sm:$0xf]
        %v3014 = vld [vmem:[%s575 + $0x58] sm:$0xf]
        %v3015 = vld [vmem:[%s575 + $0x5c] sm:$0xf]
        %v3016 = vld [vmem:[%s575 + $0x60] sm:$0xf]
        %v3017 = vld [vmem:[%s575 + $0x64] sm:$0xf]
        %v3018 = vld [vmem:[%s575 + $0x68] sm:$0xf]
        %v3019 = vld [vmem:[%s575 + $0x6c] sm:$0xf]
        %v3020 = vld [vmem:[%s575 + $0x70] sm:$0xf]
        %v3021 = vld [vmem:[%s575 + $0x74] sm:$0xf]
        %v3022 = vld [vmem:[%s575 + $0x78] sm:$0xf]
        %v3023 = vld [vmem:[%s575 + $0x7c] sm:$0xf]
        %v3024 = vld [vmem:[%s575 + $0x80] sm:$0xf]
        %v3025 = vld [vmem:[%s575 + $0x84] sm:$0xf]
        %v3026 = vld [vmem:[%s575 + $0x88] sm:$0xf]
        %v3027 = vld [vmem:[%s575 + $0x8c] sm:$0xf]
        %v3028 = vld [vmem:[%s575 + $0x90] sm:$0xf]
        %v3029 = vld [vmem:[%s575 + $0x94] sm:$0xf]
        %v3030 = vld [vmem:[%s575 + $0x98] sm:$0xf]
        %v3031 = vld [vmem:[%s575 + $0x9c] sm:$0xf]
        %v3032 = vld [vmem:[%s575 + $0xa0] sm:$0xf]
        %v3033 = vld [vmem:[%s575 + $0xa4] sm:$0xf]
        %v3034 = vld [vmem:[%s575 + $0xa8] sm:$0xf]
        %v3035 = vld [vmem:[%s575 + $0xac] sm:$0xf]
        %v3036 = vld [vmem:[%s575 + $0xb0] sm:$0xf]
        %v3037 = vld [vmem:[%s575 + $0xb4] sm:$0xf]
        %v3038 = vld [vmem:[%s575 + $0xb8] sm:$0xf]
        %v3039 = vld [vmem:[%s575 + $0xbc] sm:$0xf]
        %v3040 = vld [vmem:[%s575 + $0xc0] sm:$0xf]
        %v3041 = vld [vmem:[%s575 + $0xc4] sm:$0xf]
        %v3042 = vld [vmem:[%s575 + $0xc8] sm:$0xf]
        %v3043 = vld [vmem:[%s575 + $0xcc] sm:$0xf]
        %v3044 = vld [vmem:[%s575 + $0xd0] sm:$0xf]
        %v3045 = vld [vmem:[%s575 + $0xd4] sm:$0xf]
        %v3046 = vld [vmem:[%s575 + $0xd8] sm:$0xf]
        %v3047 = vld [vmem:[%s575 + $0xdc] sm:$0xf]
        %v3048 = vld [vmem:[%s575 + $0xe0] sm:$0xf]
        %v3049 = vld [vmem:[%s575 + $0xe4] sm:$0xf]
        %v3050 = vld [vmem:[%s575 + $0xe8] sm:$0xf]
        %v3051 = vld [vmem:[%s575 + $0xec] sm:$0xf]
        %v3052 = vld [vmem:[%s575 + $0xf0] sm:$0xf]
        %v3053 = vld [vmem:[%s575 + $0xf4] sm:$0xf]
        %v3054 = vld [vmem:[%s575 + $0xf8] sm:$0xf]
        %v3055 = vld [vmem:[%s575 + $0xfc] sm:$0xf]
        %v3120 = vunpack.c.l.b16 %v2992
        %v3121 = vunpack.c.l.b16 %v2993
        %v3122 = vunpack.c.l.b16 %v2994
        %v3123 = vunpack.c.l.b16 %v2995
        %v3124 = vunpack.c.l.b16 %v2996
        %v3125 = vunpack.c.l.b16 %v2997
        %v3126 = vunpack.c.l.b16 %v2998
        %v3127 = vunpack.c.l.b16 %v2999
        %v3128 = vunpack.c.l.b16 %v3000
        %v3129 = vunpack.c.l.b16 %v3001
        %v3130 = vunpack.c.l.b16 %v3002
        %v3131 = vunpack.c.l.b16 %v3003
        %v3132 = vunpack.c.l.b16 %v3004
        %v3133 = vunpack.c.l.b16 %v3005
        %v3134 = vunpack.c.l.b16 %v3006
        %v3135 = vunpack.c.l.b16 %v3007
        %v3136 = vunpack.c.l.b16 %v3008
        %v3137 = vunpack.c.l.b16 %v3009
        %v3138 = vunpack.c.l.b16 %v3010
        %v3139 = vunpack.c.l.b16 %v3011
        %v3140 = vunpack.c.l.b16 %v3012
        %v3141 = vunpack.c.l.b16 %v3013
        %v3142 = vunpack.c.l.b16 %v3014
        %v3143 = vunpack.c.l.b16 %v3015
        %v3144 = vunpack.c.l.b16 %v3016
        %v3145 = vunpack.c.l.b16 %v3017
        %v3146 = vunpack.c.l.b16 %v3018
        %v3147 = vunpack.c.l.b16 %v3019
        %v3148 = vunpack.c.l.b16 %v3020
        %v3149 = vunpack.c.l.b16 %v3021
        %v3150 = vunpack.c.l.b16 %v3022
        %v3151 = vunpack.c.l.b16 %v3023
        %v3152 = vunpack.c.l.b16 %v3024
        %v3153 = vunpack.c.l.b16 %v3025
        %v3154 = vunpack.c.l.b16 %v3026
        %v3155 = vunpack.c.l.b16 %v3027
        %v3156 = vunpack.c.l.b16 %v3028
        %v3157 = vunpack.c.l.b16 %v3029
        %v3158 = vunpack.c.l.b16 %v3030
        %v3159 = vunpack.c.l.b16 %v3031
        %v3160 = vunpack.c.l.b16 %v3032
        %v3161 = vunpack.c.l.b16 %v3033
        %v3162 = vunpack.c.l.b16 %v3034
        %v3163 = vunpack.c.l.b16 %v3035
        %v3164 = vunpack.c.l.b16 %v3036
        %v3165 = vunpack.c.l.b16 %v3037
        %v3166 = vunpack.c.l.b16 %v3038
        %v3167 = vunpack.c.l.b16 %v3039
        %v3168 = vunpack.c.l.b16 %v3040
        %v3169 = vunpack.c.l.b16 %v3041
        %v3170 = vunpack.c.l.b16 %v3042
        %v3171 = vunpack.c.l.b16 %v3043
        %v3172 = vunpack.c.l.b16 %v3044
        %v3173 = vunpack.c.l.b16 %v3045
        %v3174 = vunpack.c.l.b16 %v3046
        %v3175 = vunpack.c.l.b16 %v3047
        %v3176 = vunpack.c.l.b16 %v3048
        %v3177 = vunpack.c.l.b16 %v3049
        %v3178 = vunpack.c.l.b16 %v3050
        %v3179 = vunpack.c.l.b16 %v3051
        %v3180 = vunpack.c.l.b16 %v3052
        %v3181 = vunpack.c.l.b16 %v3053
        %v3182 = vunpack.c.l.b16 %v3054
        %v3183 = vunpack.c.l.b16 %v3055
        %v3184 = vpack.c.b16 %v3121, %v3120
        %v3185 = vpack.c.b16 %v3123, %v3122
        %v3186 = vpack.c.b16 %v3125, %v3124
        %v3187 = vpack.c.b16 %v3127, %v3126
        %v3188 = vpack.c.b16 %v3129, %v3128
        %v3189 = vpack.c.b16 %v3131, %v3130
        %v3190 = vpack.c.b16 %v3133, %v3132
        %v3191 = vpack.c.b16 %v3135, %v3134
        %v3192 = vpack.c.b16 %v3137, %v3136
        %v3193 = vpack.c.b16 %v3139, %v3138
        %v3194 = vpack.c.b16 %v3141, %v3140
        %v3195 = vpack.c.b16 %v3143, %v3142
        %v3196 = vpack.c.b16 %v3145, %v3144
        %v3197 = vpack.c.b16 %v3147, %v3146
        %v3198 = vpack.c.b16 %v3149, %v3148
        %v3199 = vpack.c.b16 %v3151, %v3150
        %v3200 = vpack.c.b16 %v3153, %v3152
        %v3201 = vpack.c.b16 %v3155, %v3154
        %v3202 = vpack.c.b16 %v3157, %v3156
        %v3203 = vpack.c.b16 %v3159, %v3158
        %v3204 = vpack.c.b16 %v3161, %v3160
        %v3205 = vpack.c.b16 %v3163, %v3162
        %v3206 = vpack.c.b16 %v3165, %v3164
        %v3207 = vpack.c.b16 %v3167, %v3166
        %v3208 = vpack.c.b16 %v3169, %v3168
        %v3209 = vpack.c.b16 %v3171, %v3170
        %v3210 = vpack.c.b16 %v3173, %v3172
        %v3211 = vpack.c.b16 %v3175, %v3174
        %v3212 = vpack.c.b16 %v3177, %v3176
        %v3213 = vpack.c.b16 %v3179, %v3178
        %v3214 = vpack.c.b16 %v3181, %v3180
        %v3215 = vpack.c.b16 %v3183, %v3182
        %3248 = vmatpush.bf16.msra.mxu0 %v3191
        %3249 = vmatpush.bf16.msra.mxu0 %v3190
        %3250 = vmatpush.bf16.msra.mxu0 %v3189
        %3251 = vmatpush.bf16.msra.mxu0 %v3188
        %3252 = vmatpush.bf16.msra.mxu0 %v3187
        %3253 = vmatpush.bf16.msra.mxu0 %v3186
        %3254 = vmatpush.bf16.msra.mxu0 %v3185
        %3255 = vmatpush.bf16.msra.mxu0 %v3184
        %3256 = vmatmul.bf16.gmra.mxu0 %v2988
        %v3257 = vpop.f32.mrf.mxu0
        %v3258 = vadd.f32 0.0, %v3257
        %v3259 = vpop.f32.mrf.mxu0
        %v3260 = vadd.f32 0.0, %v3259
        %3261 = vdwg.mxu0
        %3262 = vmatpush.bf16.msra.mxu0 %v3199
        %3263 = vmatpush.bf16.msra.mxu0 %v3198
        %3264 = vmatpush.bf16.msra.mxu0 %v3197
        %3265 = vmatpush.bf16.msra.mxu0 %v3196
        %3266 = vmatpush.bf16.msra.mxu0 %v3195
        %3267 = vmatpush.bf16.msra.mxu0 %v3194
        %3268 = vmatpush.bf16.msra.mxu0 %v3193
        %3269 = vmatpush.bf16.msra.mxu0 %v3192
        %3270 = vmatmul.bf16.gmra.mxu0 %v2989
        %v3271 = vpop.f32.mrf.mxu0
        %v3272 = vadd.f32 %v3258, %v3271
        %v3273 = vpop.f32.mrf.mxu0
        %v3274 = vadd.f32 %v3260, %v3273
        %3275 = vdwg.mxu0
        %3276 = vmatpush.bf16.msra.mxu0 %v3207
        %3277 = vmatpush.bf16.msra.mxu0 %v3206
        %3278 = vmatpush.bf16.msra.mxu0 %v3205
        %3279 = vmatpush.bf16.msra.mxu0 %v3204
        %3280 = vmatpush.bf16.msra.mxu0 %v3203
        %3281 = vmatpush.bf16.msra.mxu0 %v3202
        %3282 = vmatpush.bf16.msra.mxu0 %v3201
        %3283 = vmatpush.bf16.msra.mxu0 %v3200
        %3284 = vmatmul.bf16.gmra.mxu0 %v2990
        %v3285 = vpop.f32.mrf.mxu0
        %v3286 = vadd.f32 %v3272, %v3285
        %v3287 = vpop.f32.mrf.mxu0
        %v3288 = vadd.f32 %v3274, %v3287
        %3289 = vdwg.mxu0
        %3290 = vmatpush.bf16.msra.mxu0 %v3215
        %3291 = vmatpush.bf16.msra.mxu0 %v3214
        %3292 = vmatpush.bf16.msra.mxu0 %v3213
        %3293 = vmatpush.bf16.msra.mxu0 %v3212
        %3294 = vmatpush.bf16.msra.mxu0 %v3211
        %3295 = vmatpush.bf16.msra.mxu0 %v3210
        %3296 = vmatpush.bf16.msra.mxu0 %v3209
        %3297 = vmatpush.bf16.msra.mxu0 %v3208
        %3298 = vmatmul.bf16.gmra.mxu0 %v2991
        %v3299 = vpop.f32.mrf.mxu0
        %v3300 = vadd.f32 %v3286, %v3299
        %v3301 = vpop.f32.mrf.mxu0
        %v3302 = vadd.f32 %v3288, %v3301
        %3303 = vdwg.mxu0
        %v3304 = vadd.f32 %v2513, %v3300
        %v3305 = vadd.f32 %v2514, %v3302
        %v3306 = vperm.slane %v659, 5
        %v3307 = vadd.f32 %v3304, %v3306
        %v3308 = vadd.f32 %v3305, %v3306
        %p3309 = scmp.ne.s32.totalorder %s36, 1
        // Predicated region
        $region105: #{tpu_custom_call.1} parent=59 // pred_check
          %p3310 = pneg %p3309
        $region106: #{tpu_custom_call.1} parent=59 // pred_check_branch
          %3312 = sbr.rel (%p3310) target = $region108
        $region107: #{tpu_custom_call.1} parent=59 // pred_region
          %3313 = vst [vmem:[#allocation19] sm:$0xff] %v3307
          %3314 = vst [vmem:[#allocation19 + $0x8] sm:$0xff] %v3308
        $region108: #{tpu_custom_call.1} parent=59 // pred_fallthru
          _
        %p3315 = scmp.eq.s32.totalorder %s36, 1
        // Predicated region
        $region109: #{tpu_custom_call.1} parent=59 // pred_check
          %p3316 = pneg %p3315
        $region110: #{tpu_custom_call.1} parent=59 // pred_check_branch
          %3318 = sbr.rel (%p3316) target = $region112
        $region111: #{tpu_custom_call.1} parent=59 // pred_region
          %v3319 = vld [vmem:[#allocation7] sm:$0x3]
          %3320 = vadd.xlane.f32.xlu0 %v3307
          %v3321 = vpop.xlane.xlu0 %3320
          %3322 = vadd.xlane.f32.xlu0 %v3308
          %v3323 = vpop.xlane.xlu0 %3322
          %v3324 = vmul.f32 %v3321, %v670
          %v3325 = vmul.f32 %v3323, %v670
          %v3326 = vsub.f32 %v3307, %v3324
          %v3327 = vsub.f32 %v3308, %v3325
          %v3328 = vmul.f32 %v3326, %v3326
          %v3329 = vmul.f32 %v3327, %v3327
          %3330 = vadd.xlane.f32.xlu0 %v3328
          %v3331 = vpop.xlane.xlu0 %3330
          %3332 = vadd.xlane.f32.xlu0 %v3329
          %v3333 = vpop.xlane.xlu0 %3332
          %v3334 = vmul.f32 %v3331, %v670
          %v3335 = vmul.f32 %v3333, %v670
          %v3336 = vadd.f32 %v3334, 1e-05
          %v3337 = vadd.f32 %v3335, 1e-05
          %v3338 = vrsqrt.pop %v3336
          %v3339 = vmul.f32 %v3338, %v3336
          %v3340 = vmul.f32 %v3339, %v3338
          %v3341 = vmul.f32 0.5, %v3340
          %v3342 = vsub.f32 1.5, %v3341
          %v3343 = vmul.f32 %v3338, %v3342
          %vm3344 = vweird.f32 %v3336
          %vm3345 = vweird.f32 %v3338
          %vm3346 = vmor %vm3344, %vm3345
          %v3347 = vsel %vm3346, %v3338, %v3343
          %v3348 = vrsqrt.pop %v3337
          %v3349 = vmul.f32 %v3348, %v3337
          %v3350 = vmul.f32 %v3349, %v3348
          %v3351 = vmul.f32 0.5, %v3350
          %v3352 = vsub.f32 1.5, %v3351
          %v3353 = vmul.f32 %v3348, %v3352
          %vm3354 = vweird.f32 %v3337
          %vm3355 = vweird.f32 %v3348
          %vm3356 = vmor %vm3354, %vm3355
          %v3357 = vsel %vm3356, %v3348, %v3353
          %v3358 = vmul.f32 %v3326, %v3347
          %v3359 = vmul.f32 %v3327, %v3357
          %v3360 = vperm.slane %v3319, 0
          %v3361 = vmul.f32 %v3358, %v3360
          %v3362 = vmul.f32 %v3359, %v3360
          %v3363 = vperm.slane %v3319, 1
          %v3364 = vadd.f32 %v3361, %v3363
          %v3365 = vadd.f32 %v3362, %v3363
          %3366 = vst [vmem:[#allocation19] sm:$0xff] %v3364
          %3367 = vst [vmem:[#allocation19 + $0x8] sm:$0xff] %v3365
        $region112: #{tpu_custom_call.1} parent=59 // pred_fallthru
          _
        // Predicated region
        $region113: #{tpu_custom_call.1} parent=59 // pred_check
          %p3368 = pneg %p294
        $region114: #{tpu_custom_call.1} parent=59 // pred_check_branch
          %3370 = sbr.rel (%p3368) target = $region116
        $region115: #{tpu_custom_call.1} parent=59 // pred_region
          %3372 = vsyncadd [#allocation4], 0
          %s3373 = sshll.u32 [#allocation19], 4
          %s3374 = int_to_ptr.vmem [resolvable:$true] %s3373
          %s3375 = sshll.u32 %s10, 4
          %s3376 = int_to_ptr.hbm [resolvable:$true] %s3375
          %3381 = dma.vmem_to_hbm [thread:$0]  %s3374, 256, %s3376, [#allocation4], 128, 128, 8
        $region116: #{tpu_custom_call.1} parent=59 // pred_fallthru
          _
        // Predicated region
        $region117: #{tpu_custom_call.1} parent=59 // pred_check
          %p3382 = pneg %p294
        $region118: #{tpu_custom_call.1} parent=59 // pred_check_branch
          %3384 = sbr.rel (%p3382) target = $region120
        $region119: #{tpu_custom_call.1} parent=59 // pred_region
          %3386 = dma.done [#allocation4], 256
        $region120: #{tpu_custom_call.1} parent=59 // pred_fallthru
          _
      $region60: #{tpu_custom_call.1} parent=5 // pred_fallthru
        _
      %p3387 = scmp.le.s32.totalorder 2, %s31
      // Predicated region
      $region121: #{tpu_custom_call.1} parent=5 // pred_check
        %p3388 = pneg %p3387
      $region122: #{tpu_custom_call.1} parent=5 // pred_check_branch
        %3390 = sbr.rel (%p3388) target = $region124
      $region123: #{tpu_custom_call.1} parent=5 // pred_region
        %s3391 = ssub.s32 %s31, 2
      $region124: #{tpu_custom_call.1} parent=5 // pred_fallthru
        _
    $region6: #{tpu_custom_call.1} parent=1 // loop_footer
      %s35 = sadd.s32 1, %s31
    $region7: #{tpu_custom_call.1} parent=1 // loop_footer_branch
      %30 = sbr.rel target = $region3
    $region8: #{tpu_custom_call.1} parent=1 // loop_exit
      _
    %3392 = vsyncpa [#allocation3], 1
    %s3393 = scalar_lea.sflag [#allocation3], 1
    %3394 = vsyncpa %s3393, 1
    %3395 = vsyncpa [#allocation6], 1
    %3396 = vsyncpa [#allocation9], 1
    %s3397 = scalar_lea.sflag [#allocation9], 1
    %3398 = vsyncpa %s3397, 1
    %3399 = vsyncpa [#allocation12], 1
    %s3400 = scalar_lea.sflag [#allocation12], 1
    %3401 = vsyncpa %s3400, 1
    %3402 = vsyncpa [#allocation15], 1
    %s3403 = scalar_lea.sflag [#allocation15], 1
    %3404 = vsyncpa %s3403, 1
    %3405 = vsyncpa [#allocation18], 1
    %s3406 = scalar_lea.sflag [#allocation18], 1
    %3407 = vsyncpa %s3406, 1
    %3408 = vsyncpa [#allocation4], 1
    %s3409 = scalar_lea.sflag [#allocation4], 1
    %3410 = vsyncpa %s3409, 1

</llo_original>
